<compile_context>
chip_gen: v5e
topology: v5e:2x2
jax: 0.10.0
libtpu: 0.0.40
codegen_flags: <defaults>
</compile_context>

<pallas_src>
import functools

import jax
import jax.numpy as jnp
from jax.experimental import pallas as pl
from jax.experimental.pallas import tpu as pltpu


def _perceiver_attention_kernel(
    x_ref,     # (Tb, n1, D)   compute_dtype
    lat_ref,   # (Tb, n2, D)   compute_dtype
    gm_ref,    # (1, D) f32    norm_media.weight
    bm_ref,    # (1, D) f32    norm_media.bias
    gl_ref,    # (1, D) f32    norm_latents.weight
    bl_ref,    # (1, D) f32    norm_latents.bias
    wkv_ref,   # (D, 2*inner)  [W_k | W_v]              compute_dtype
    wqkv_ref,  # (D, 3*inner)  [W_q*scale | W_k | W_v]  compute_dtype
    wo_ref,    # (inner, D)                              compute_dtype
    out_ref,   # (Tb, n2, D)
    *,
    heads: int,
    dim_head: int,
    compute_dtype,
    exact_softmax: bool,
):
    f32 = jnp.float32
    eps = 1e-5  # PyTorch nn.LayerNorm default
    tb, n1, d = x_ref.shape
    _, n2, _ = lat_ref.shape
    inner = heads * dim_head
    cdt = compute_dtype

    def layernorm(z_raw, g_ref, b_ref):
        # Stats in f32; affine/apply result written straight in compute dtype
        # (no duplicate f32 normalized tensor kept live).
        z = z_raw.astype(f32)
        mu = jnp.mean(z, axis=-1, keepdims=True)
        var = jnp.mean(jnp.square(z - mu), axis=-1, keepdims=True)
        g = g_ref[...].reshape(1, 1, d)
        b = b_ref[...].reshape(1, 1, d)
        return ((z - mu) * jax.lax.rsqrt(var + eps) * g + b).astype(cdt)

    # 2-D projections with M = Tb*n rows; fused weights -> 2 MXU matmuls total.
    x2 = layernorm(x_ref[...], gm_ref, bm_ref).reshape(tb * n1, d)
    l2 = layernorm(lat_ref[...], gl_ref, bl_ref).reshape(tb * n2, d)

    kv_x = jnp.dot(x2, wkv_ref[...], preferred_element_type=f32)    # (Tb*n1, 2*inner)
    qkv_l = jnp.dot(l2, wqkv_ref[...], preferred_element_type=f32)  # (Tb*n2, 3*inner)

    # Static lane slices of the fused projections.
    kx2 = kv_x[:, :inner].astype(cdt)
    vx2 = kv_x[:, inner:].astype(cdt)
    q2 = qkv_l[:, :inner].astype(cdt)             # scale already folded into W_q
    kl2 = qkv_l[:, inner:2 * inner].astype(cdt)
    vl2 = qkv_l[:, 2 * inner:].astype(cdt)

    # Flatten (frame, head) into ONE batch dim so every attention matmul is a
    # single-batch-dim dot_general.
    def to_bh(z2, n):
        z = z2.reshape(tb, n, heads, dim_head)
        z = jnp.transpose(z, (0, 2, 1, 3))        # (tb, heads, n, dh)
        return z.reshape(tb * heads, n, dim_head)

    qh = to_bh(q2, n2)    # (B, n2, dh), B = tb*heads
    kxh = to_bh(kx2, n1)
    klh = to_bh(kl2, n2)
    vxh = to_bh(vx2, n1)
    vlh = to_bh(vl2, n2)

    # Softmax fused across the (media, latent) key segments: the PyTorch kv
    # concat is never materialized.
    sim_x = jnp.einsum("bij,bkj->bik", qh, kxh, preferred_element_type=f32)  # (B, n2, n1)
    sim_l = jnp.einsum("bij,bkj->bik", qh, klh, preferred_element_type=f32)  # (B, n2, n2)
    m = jnp.maximum(jnp.max(sim_x, axis=-1, keepdims=True),
                    jnp.max(sim_l, axis=-1, keepdims=True))
    p_x = jnp.exp(sim_x - m)
    p_l = jnp.exp(sim_l - m)
    denom = (jnp.sum(p_x, axis=-1, keepdims=True)
             + jnp.sum(p_l, axis=-1, keepdims=True))
    # Rebind probabilities in compute dtype: the f32 copies are dead before the
    # PV matmuls (shortens the largest f32 transient).
    p_x = p_x.astype(cdt)
    p_l = p_l.astype(cdt)
    if exact_softmax:
        inv = 1.0 / denom
    else:
        inv = pl.reciprocal(denom, approx=True)   # EUP slot, ~free

    o = jnp.einsum("bik,bkj->bij", p_x, vxh, preferred_element_type=f32)
    o = o + jnp.einsum("bik,bkj->bij", p_l, vlh, preferred_element_type=f32)
    o = o * inv                                    # (tb*heads, n2, dh) f32

    # Output projection as ONE 2-D MXU matmul: (Tb*n2, inner) @ (inner, D).
    # (t,h,i,d) -> (t,i,h,d) reproduces PyTorch's 'b h t n d -> b t n (h d)'.
    o4 = jnp.transpose(o.reshape(tb, heads, n2, dim_head), (0, 2, 1, 3))
    o2 = o4.astype(cdt).reshape(tb * n2, inner)
    out = jnp.dot(o2, wo_ref[...], preferred_element_type=f32)       # (Tb*n2, D)
    out_ref[...] = out.reshape(tb, n2, d).astype(out_ref.dtype)


def _default_vmem_limit_bytes() -> int:
    """~75% of physical VMEM: ~96 MiB on v5e/v6e (128 MiB), ~48 MiB on v7x (64 MiB)."""
    cap = 128 << 20
    try:  # capability query only (not a compile fallback)
        cap = int(getattr(pltpu.get_tpu_info(), "vmem_capacity_bytes", cap))
    except Exception:
        pass
    return (cap * 3) // 4


def _step_bytes(tb, n1, n2, d, inner, heads, in_bytes, out_bytes):
    """Rough per-grid-step VMEM working set (pipeline buffers + intermediates)."""
    io = 2 * tb * (n1 + n2) * d * in_bytes + 2 * tb * n2 * d * out_bytes
    weights = (5 * d * inner + inner * d) * in_bytes + 4 * d * 4
    interm = (
        tb * (n1 + n2) * d * 4                   # layer-normed x / latents
        + tb * n1 * 2 * inner * 4                # kv_x (f32 accumulation)
        + tb * n2 * 3 * inner * 4                # qkv_l (f32 accumulation)
        + 2 * tb * heads * n2 * (n1 + n2) * 4    # sims + probs (f32)
        + tb * n2 * inner * 4                    # attention output (f32)
    )
    return io + weights + interm


def _pick_frames_per_block(n_frames, n1, n2, d, inner, heads,
                           in_bytes, out_bytes, vmem_limit_bytes):
    budget = int(vmem_limit_bytes * 0.6)          # headroom for compiler scratch / vregs
    divisors = [k for k in range(1, n_frames + 1) if n_frames % k == 0]
    fits = [k for k in divisors
            if _step_bytes(k, n1, n2, d, inner, heads, in_bytes, out_bytes) <= budget]
    if not fits:
        fits = [1]
    # Prefer an even number of grid steps so the "parallel" axis splits evenly
    # across v7x's two TensorCores (avoids a 1-step tail imbalance).
    even = [k for k in fits if (n_frames // k) % 2 == 0]
    return max(even) if even else max(fits)


def perceiver_attention(x, latents, params, *, heads, dim_head,
                        frames_per_block=None,
                        compute_dtype=jnp.float32,
                        out_dtype=jnp.float32,
                        exact_softmax=False,
                        vmem_limit_bytes=None,
                        single_buffer_consts=True):
    """x: (b, T, n1, D), latents: (b, T, n2, D) -> (b, T, n2, D).

    compute_dtype=jnp.bfloat16 is recommended on v5e/v6e/v7x (bf16-native MXU,
    halves input DMA bytes); float32 is the strict-parity default.
    """
    b, t, n1, d = x.shape
    _, _, n2, _ = latents.shape
    inner = heads * dim_head
    scale = dim_head ** (-0.5)
    n_frames = b * t
    f32 = jnp.float32

    if vmem_limit_bytes is None:
        vmem_limit_bytes = _default_vmem_limit_bytes()

    in_bytes = jnp.dtype(compute_dtype).itemsize
    out_bytes = jnp.dtype(out_dtype).itemsize
    if frames_per_block is None:
        frames_per_block = _pick_frames_per_block(
            n_frames, n1, n2, d, inner, heads, in_bytes, out_bytes,
            vmem_limit_bytes)
    tb = frames_per_block
    if n_frames % tb != 0:
        raise ValueError("frames_per_block must divide b*T")

    # Cast the dominant inputs to the compute dtype host-side: with bf16 this
    # halves HBM->VMEM DMA bytes and the double-buffered input footprint.
    x_f = x.reshape(n_frames, n1, d).astype(compute_dtype)
    lat_f = latents.reshape(n_frames, n2, d).astype(compute_dtype)

    # Fused projection weights (built in f32, then cast once):
    #   media tokens  need K,V     -> W_kv  = [W_k | W_v]             (D, 2*inner)
    #   latent tokens need Q,K,V   -> W_qkv = [W_q*scale | W_k | W_v] (D, 3*inner)
    wq_s = params["w_q"].astype(f32) * scale
    wk = params["w_k"].astype(f32)
    wv = params["w_v"].astype(f32)
    w_kv = jnp.concatenate([wk, wv], axis=1).astype(compute_dtype)
    w_qkv = jnp.concatenate([wq_s, wk, wv], axis=1).astype(compute_dtype)
    w_o = params["w_out"].astype(compute_dtype)
    gm = params["gamma_media"].astype(f32)
    bm = params["beta_media"].astype(f32)
    gl = params["gamma_latents"].astype(f32)
    bl = params["beta_latents"].astype(f32)

    frame_map = lambda i: (i, 0, 0)
    const_map = lambda i: (0, 0)
    # Constant-index operands gain nothing from double-buffering; single
    # buffering halves their VMEM residency.
    const_kwargs = (dict(pipeline_mode=pl.Buffered(1))
                    if single_buffer_consts else {})

    kernel = functools.partial(
        _perceiver_attention_kernel, heads=heads, dim_head=dim_head,
        compute_dtype=compute_dtype, exact_softmax=exact_softmax)

    call = pl.pallas_call(
        kernel,
        out_shape=jax.ShapeDtypeStruct((n_frames, n2, d), out_dtype),
        grid_spec=pltpu.PrefetchScalarGridSpec(
            num_scalar_prefetch=0,
            grid=(n_frames // tb,),
            in_specs=[
                pl.BlockSpec((tb, n1, d), frame_map),
                pl.BlockSpec((tb, n2, d), frame_map),
                pl.BlockSpec((1, d), const_map, **const_kwargs),
                pl.BlockSpec((1, d), const_map, **const_kwargs),
                pl.BlockSpec((1, d), const_map, **const_kwargs),
                pl.BlockSpec((1, d), const_map, **const_kwargs),
                pl.BlockSpec((d, 2 * inner), const_map, **const_kwargs),
                pl.BlockSpec((d, 3 * inner), const_map, **const_kwargs),
                pl.BlockSpec((inner, d), const_map, **const_kwargs),
            ],
            out_specs=pl.BlockSpec((tb, n2, d), frame_map),
        ),
        compiler_params=pltpu.CompilerParams(
            dimension_semantics=("parallel",),
            vmem_limit_bytes=int(vmem_limit_bytes),
        ),
    )
    out = call(x_f, lat_f, gm, bm, gl, bl, w_kv, w_qkv, w_o)
    return out.reshape(b, t, n2, d)


def perceiver_attention_reference(x, latents, params, *, heads, dim_head):
    """Pure-JAX reference replicating the PyTorch forward exactly."""
    eps = 1e-5
    scale = dim_head ** (-0.5)

    def ln(z, g, b):
        mu = jnp.mean(z, axis=-1, keepdims=True)
        var = jnp.mean((z - mu) ** 2, axis=-1, keepdims=True)
        return (z - mu) / jnp.sqrt(var + eps) * g[0] + b[0]

    xn = ln(x, params["gamma_media"], params["beta_media"])
    ln_ = ln(latents, params["gamma_latents"], params["beta_latents"])

    q = ln_ @ params["w_q"]                      # (b,T,n2,inner)
    kv_in = jnp.concatenate([xn, ln_], axis=-2)  # (b,T,n1+n2,D)
    k = kv_in @ params["w_k"]
    v = kv_in @ params["w_v"]

    def split_heads(z):  # (b,T,n,h*d) -> (b,h,T,n,d)
        b_, t_, n_, _ = z.shape
        z = z.reshape(b_, t_, n_, heads, dim_head)
        return jnp.transpose(z, (0, 3, 1, 2, 4))

    q, k, v = split_heads(q) * scale, split_heads(k), split_heads(v)
    sim = jnp.einsum("bhtid,bhtjd->bhtij", q, k)
    sim = sim - jnp.max(sim, axis=-1, keepdims=True)
    attn = jax.nn.softmax(sim, axis=-1)
    out = jnp.einsum("bhtij,bhtjd->bhtid", attn, v)
    b_, h_, t_, n_, d_ = out.shape
    out = jnp.transpose(out, (0, 2, 3, 1, 4)).reshape(b_, t_, n_, h_ * d_)
    return out @ params["w_out"]


if __name__ == "__main__":
    # Small but representative shapes.
    B, T, N1, N2, DIM = 2, 2, 16, 8, 32
    HEADS, DIM_HEAD = 4, 8
    INNER = HEADS * DIM_HEAD

    key = jax.random.PRNGKey(0)
    kx, kl, kq, kk, kv_, ko = jax.random.split(key, 6)

    x = jax.random.normal(kx, (B, T, N1, DIM), dtype=jnp.float32)
    latents = jax.random.normal(kl, (B, T, N2, DIM), dtype=jnp.float32)

    # Deterministic parameter init (PyTorch: LN weight=1, bias=0; Linear: random).
    params = {
        "gamma_media": jnp.ones((1, DIM), jnp.float32),
        "beta_media": jnp.zeros((1, DIM), jnp.float32),
        "gamma_latents": jnp.ones((1, DIM), jnp.float32),
        "beta_latents": jnp.zeros((1, DIM), jnp.float32),
        # stored as (in, out) == PyTorch weight.T
        "w_q": jax.random.normal(kq, (DIM, INNER), jnp.float32) * 0.05,
        "w_k": jax.random.normal(kk, (DIM, INNER), jnp.float32) * 0.05,
        "w_v": jax.random.normal(kv_, (DIM, INNER), jnp.float32) * 0.05,
        "w_out": jax.random.normal(ko, (INNER, DIM), jnp.float32) * 0.05,
    }

    ref = perceiver_attention_reference(x, latents, params, heads=HEADS,
                                        dim_head=DIM_HEAD)

    # f32 compute path (strict parity; approx reciprocal adds ~1e-3 rel).
    out = perceiver_attention(x, latents, params, heads=HEADS, dim_head=DIM_HEAD)
    out = jax.block_until_ready(out)
    assert out.shape == (B, T, N2, DIM)
    assert jnp.allclose(out, ref, atol=2e-3, rtol=2e-2), "mismatch vs reference (f32)"

    # bf16 MXU path (recommended production setting on v5e/v6e/v7x).
    out_bf16 = jax.block_until_ready(
        perceiver_attention(x, latents, params, heads=HEADS, dim_head=DIM_HEAD,
                            compute_dtype=jnp.bfloat16))
    assert out_bf16.shape == (B, T, N2, DIM)
    assert bool(jnp.all(jnp.isfinite(out_bf16)))
    max_err = jnp.max(jnp.abs(out_bf16 - ref))
    assert max_err <= 0.1 * jnp.max(jnp.abs(ref)) + 1e-3, "bf16 path diverged"

    print("KERNEL_OK")
</pallas_src>

<mosaic_0001>
module attributes {stable_mosaic.version = 11 : i64} {
  func.func @_perceiver_attention_kernel(%arg0: i32, %arg1: memref<2x16x32xf32, #tpu.memory_space<vmem>>, %arg2: memref<2x8x32xf32, #tpu.memory_space<vmem>>, %arg3: memref<1x32xf32, #tpu.memory_space<vmem>>, %arg4: memref<1x32xf32, #tpu.memory_space<vmem>>, %arg5: memref<1x32xf32, #tpu.memory_space<vmem>>, %arg6: memref<1x32xf32, #tpu.memory_space<vmem>>, %arg7: memref<32x64xf32, #tpu.memory_space<vmem>>, %arg8: memref<32x96xf32, #tpu.memory_space<vmem>>, %arg9: memref<32x32xf32, #tpu.memory_space<vmem>>, %arg10: memref<2x8x32xf32, #tpu.memory_space<vmem>>) attributes {dimension_semantics = [#tpu.dimension_semantics<parallel>], iteration_bounds = array<i64: 2>, scalar_prefetch = 0 : i64, scratch_operands = 0 : i64, tpu.core_type = #tpu.core_type<tc>, window_params = [{transform_indices = @transform_0, window_bounds = array<i64: 2, 16, 32>}, {transform_indices = @transform_1, window_bounds = array<i64: 2, 8, 32>}, {pipeline_mode = #tpu.pipeline_mode<synchronous>, transform_indices = @transform_2, window_bounds = array<i64: 1, 32>}, {pipeline_mode = #tpu.pipeline_mode<synchronous>, transform_indices = @transform_3, window_bounds = array<i64: 1, 32>}, {pipeline_mode = #tpu.pipeline_mode<synchronous>, transform_indices = @transform_4, window_bounds = array<i64: 1, 32>}, {pipeline_mode = #tpu.pipeline_mode<synchronous>, transform_indices = @transform_5, window_bounds = array<i64: 1, 32>}, {pipeline_mode = #tpu.pipeline_mode<synchronous>, transform_indices = @transform_6, window_bounds = array<i64: 32, 64>}, {pipeline_mode = #tpu.pipeline_mode<synchronous>, transform_indices = @transform_7, window_bounds = array<i64: 32, 96>}, {pipeline_mode = #tpu.pipeline_mode<synchronous>, transform_indices = @transform_8, window_bounds = array<i64: 32, 32>}, {transform_indices = @transform_9, window_bounds = array<i64: 2, 8, 32>}]} {
    %c0 = arith.constant 0 : index
    %c0_0 = arith.constant 0 : index
    %c0_1 = arith.constant 0 : index
    %0 = vector.load %arg1[%c0, %c0_0, %c0_1] : memref<2x16x32xf32, #tpu.memory_space<vmem>>, vector<2x16x32xf32>
    %cst = arith.constant dense<0.000000e+00> : vector<2x16xf32>
    %1 = vector.multi_reduction <add>, %0, %cst [2] : vector<2x16x32xf32> to vector<2x16xf32>
    %2 = vector.shape_cast %1 : vector<2x16xf32> to vector<2x16x1xf32>
    %cst_2 = arith.constant 3.200000e+01 : f32
    %3 = vector.broadcast %cst_2 : f32 to vector<2x16x1xf32>
    %4 = arith.divf %2, %3 : vector<2x16x1xf32>
    %5 = vector.broadcast %4 : vector<2x16x1xf32> to vector<2x16x32xf32>
    %6 = arith.subf %0, %5 : vector<2x16x32xf32>
    %7 = arith.mulf %6, %6 : vector<2x16x32xf32>
    %cst_3 = arith.constant dense<0.000000e+00> : vector<2x16xf32>
    %8 = vector.multi_reduction <add>, %7, %cst_3 [2] : vector<2x16x32xf32> to vector<2x16xf32>
    %9 = vector.shape_cast %8 : vector<2x16xf32> to vector<2x16x1xf32>
    %cst_4 = arith.constant 3.200000e+01 : f32
    %10 = vector.broadcast %cst_4 : f32 to vector<2x16x1xf32>
    %11 = arith.divf %9, %10 : vector<2x16x1xf32>
    %c0_5 = arith.constant 0 : index
    %c0_6 = arith.constant 0 : index
    %12 = vector.load %arg3[%c0_5, %c0_6] : memref<1x32xf32, #tpu.memory_space<vmem>>, vector<1x32xf32>
    %13 = vector.shape_cast %12 : vector<1x32xf32> to vector<1x1x32xf32>
    %c0_7 = arith.constant 0 : index
    %c0_8 = arith.constant 0 : index
    %14 = vector.load %arg4[%c0_7, %c0_8] : memref<1x32xf32, #tpu.memory_space<vmem>>, vector<1x32xf32>
    %15 = vector.shape_cast %14 : vector<1x32xf32> to vector<1x1x32xf32>
    %16 = vector.broadcast %4 : vector<2x16x1xf32> to vector<2x16x32xf32>
    %17 = arith.subf %0, %16 : vector<2x16x32xf32>
    %cst_9 = arith.constant 9.99999974E-6 : f32
    %18 = vector.broadcast %cst_9 : f32 to vector<2x16x1xf32>
    %19 = arith.addf %11, %18 : vector<2x16x1xf32>
    %20 = math.rsqrt %19 : vector<2x16x1xf32>
    %21 = vector.broadcast %20 : vector<2x16x1xf32> to vector<2x16x32xf32>
    %22 = arith.mulf %17, %21 : vector<2x16x32xf32>
    %23 = vector.broadcast %13 : vector<1x1x32xf32> to vector<2x16x32xf32>
    %24 = arith.mulf %22, %23 : vector<2x16x32xf32>
    %25 = vector.broadcast %15 : vector<1x1x32xf32> to vector<2x16x32xf32>
    %26 = arith.addf %24, %25 : vector<2x16x32xf32>
    %27 = vector.shape_cast %26 : vector<2x16x32xf32> to vector<32x32xf32>
    %c0_10 = arith.constant 0 : index
    %c0_11 = arith.constant 0 : index
    %c0_12 = arith.constant 0 : index
    %28 = vector.load %arg2[%c0_10, %c0_11, %c0_12] : memref<2x8x32xf32, #tpu.memory_space<vmem>>, vector<2x8x32xf32>
    %cst_13 = arith.constant dense<0.000000e+00> : vector<2x8xf32>
    %29 = vector.multi_reduction <add>, %28, %cst_13 [2] : vector<2x8x32xf32> to vector<2x8xf32>
    %30 = vector.shape_cast %29 : vector<2x8xf32> to vector<2x8x1xf32>
    %cst_14 = arith.constant 3.200000e+01 : f32
    %31 = vector.broadcast %cst_14 : f32 to vector<2x8x1xf32>
    %32 = arith.divf %30, %31 : vector<2x8x1xf32>
    %33 = vector.broadcast %32 : vector<2x8x1xf32> to vector<2x8x32xf32>
    %34 = arith.subf %28, %33 : vector<2x8x32xf32>
    %35 = arith.mulf %34, %34 : vector<2x8x32xf32>
    %cst_15 = arith.constant dense<0.000000e+00> : vector<2x8xf32>
    %36 = vector.multi_reduction <add>, %35, %cst_15 [2] : vector<2x8x32xf32> to vector<2x8xf32>
    %37 = vector.shape_cast %36 : vector<2x8xf32> to vector<2x8x1xf32>
    %cst_16 = arith.constant 3.200000e+01 : f32
    %38 = vector.broadcast %cst_16 : f32 to vector<2x8x1xf32>
    %39 = arith.divf %37, %38 : vector<2x8x1xf32>
    %c0_17 = arith.constant 0 : index
    %c0_18 = arith.constant 0 : index
    %40 = vector.load %arg5[%c0_17, %c0_18] : memref<1x32xf32, #tpu.memory_space<vmem>>, vector<1x32xf32>
    %41 = vector.shape_cast %40 : vector<1x32xf32> to vector<1x1x32xf32>
    %c0_19 = arith.constant 0 : index
    %c0_20 = arith.constant 0 : index
    %42 = vector.load %arg6[%c0_19, %c0_20] : memref<1x32xf32, #tpu.memory_space<vmem>>, vector<1x32xf32>
    %43 = vector.shape_cast %42 : vector<1x32xf32> to vector<1x1x32xf32>
    %44 = vector.broadcast %32 : vector<2x8x1xf32> to vector<2x8x32xf32>
    %45 = arith.subf %28, %44 : vector<2x8x32xf32>
    %cst_21 = arith.constant 9.99999974E-6 : f32
    %46 = vector.broadcast %cst_21 : f32 to vector<2x8x1xf32>
    %47 = arith.addf %39, %46 : vector<2x8x1xf32>
    %48 = math.rsqrt %47 : vector<2x8x1xf32>
    %49 = vector.broadcast %48 : vector<2x8x1xf32> to vector<2x8x32xf32>
    %50 = arith.mulf %45, %49 : vector<2x8x32xf32>
    %51 = vector.broadcast %41 : vector<1x1x32xf32> to vector<2x8x32xf32>
    %52 = arith.mulf %50, %51 : vector<2x8x32xf32>
    %53 = vector.broadcast %43 : vector<1x1x32xf32> to vector<2x8x32xf32>
    %54 = arith.addf %52, %53 : vector<2x8x32xf32>
    %55 = vector.shape_cast %54 : vector<2x8x32xf32> to vector<16x32xf32>
    %c0_22 = arith.constant 0 : index
    %c0_23 = arith.constant 0 : index
    %56 = vector.load %arg7[%c0_22, %c0_23] : memref<32x64xf32, #tpu.memory_space<vmem>>, vector<32x64xf32>
    %cst_24 = arith.constant dense<0.000000e+00> : vector<32x64xf32>
    %57 = tpu.matmul %27, %56, %cst_24 {dimension_numbers = #tpu.dot_dimension_numbers<[1], [0], [0], [1], [0, 0, 1, 1], [], []>} : vector<32x32xf32>, vector<32x64xf32>, vector<32x64xf32> -> vector<32x64xf32>
    %c0_25 = arith.constant 0 : index
    %c0_26 = arith.constant 0 : index
    %58 = vector.load %arg8[%c0_25, %c0_26] : memref<32x96xf32, #tpu.memory_space<vmem>>, vector<32x96xf32>
    %cst_27 = arith.constant dense<0.000000e+00> : vector<16x96xf32>
    %59 = tpu.matmul %55, %58, %cst_27 {dimension_numbers = #tpu.dot_dimension_numbers<[1], [0], [0], [1], [0, 0, 1, 1], [], []>} : vector<16x32xf32>, vector<32x96xf32>, vector<16x96xf32> -> vector<16x96xf32>
    %60 = vector.extract_strided_slice %57 {offsets = [0, 0], sizes = [32, 32], strides = [1, 1]} : vector<32x64xf32> to vector<32x32xf32>
    %61 = vector.extract_strided_slice %57 {offsets = [0, 32], sizes = [32, 32], strides = [1, 1]} : vector<32x64xf32> to vector<32x32xf32>
    %62 = vector.extract_strided_slice %59 {offsets = [0, 0], sizes = [16, 32], strides = [1, 1]} : vector<16x96xf32> to vector<16x32xf32>
    %63 = vector.extract_strided_slice %59 {offsets = [0, 32], sizes = [16, 32], strides = [1, 1]} : vector<16x96xf32> to vector<16x32xf32>
    %64 = vector.extract_strided_slice %59 {offsets = [0, 64], sizes = [16, 32], strides = [1, 1]} : vector<16x96xf32> to vector<16x32xf32>
    %65 = vector.shape_cast %62 : vector<16x32xf32> to vector<2x8x4x8xf32>
    %66 = tpu.transpose %65, [0, 2, 1, 3] : vector<2x8x4x8xf32> -> vector<2x4x8x8xf32>
    %67 = vector.shape_cast %66 : vector<2x4x8x8xf32> to vector<8x8x8xf32>
    %68 = vector.shape_cast %60 : vector<32x32xf32> to vector<2x16x4x8xf32>
    %69 = tpu.transpose %68, [0, 2, 1, 3] : vector<2x16x4x8xf32> -> vector<2x4x16x8xf32>
    %70 = vector.shape_cast %69 : vector<2x4x16x8xf32> to vector<8x16x8xf32>
    %71 = vector.shape_cast %63 : vector<16x32xf32> to vector<2x8x4x8xf32>
    %72 = tpu.transpose %71, [0, 2, 1, 3] : vector<2x8x4x8xf32> -> vector<2x4x8x8xf32>
    %73 = vector.shape_cast %72 : vector<2x4x8x8xf32> to vector<8x8x8xf32>
    %74 = vector.shape_cast %61 : vector<32x32xf32> to vector<2x16x4x8xf32>
    %75 = tpu.transpose %74, [0, 2, 1, 3] : vector<2x16x4x8xf32> -> vector<2x4x16x8xf32>
    %76 = vector.shape_cast %75 : vector<2x4x16x8xf32> to vector<8x16x8xf32>
    %77 = vector.shape_cast %64 : vector<16x32xf32> to vector<2x8x4x8xf32>
    %78 = tpu.transpose %77, [0, 2, 1, 3] : vector<2x8x4x8xf32> -> vector<2x4x8x8xf32>
    %79 = vector.shape_cast %78 : vector<2x4x8x8xf32> to vector<8x8x8xf32>
    "tpu.trace_start"() <{level = 10 : i32, message = "bij,bkj->bik"}> : () -> ()
    %cst_28 = arith.constant dense<0.000000e+00> : vector<8x8x16xf32>
    %80 = tpu.matmul %67, %70, %cst_28 {dimension_numbers = #tpu.dot_dimension_numbers<[2], [2], [1], [1], [0, 0, 0, 1, 1, 1], [0], [0]>} : vector<8x8x8xf32>, vector<8x16x8xf32>, vector<8x8x16xf32> -> vector<8x8x16xf32>
    %cst_29 = arith.constant dense<0.000000e+00> : vector<8x8x8xf32>
    %81 = tpu.matmul %67, %73, %cst_29 {dimension_numbers = #tpu.dot_dimension_numbers<[2], [2], [1], [1], [0, 0, 0, 1, 1, 1], [0], [0]>} : vector<8x8x8xf32>, vector<8x8x8xf32>, vector<8x8x8xf32> -> vector<8x8x8xf32>
    "tpu.trace_stop"() : () -> ()
    %cst_30 = arith.constant dense<0xFF800000> : vector<8x8xf32>
    %82 = vector.multi_reduction <maximumf>, %80, %cst_30 [2] : vector<8x8x16xf32> to vector<8x8xf32>
    %83 = vector.shape_cast %82 : vector<8x8xf32> to vector<8x8x1xf32>
    %cst_31 = arith.constant dense<0xFF800000> : vector<8x8xf32>
    %84 = vector.multi_reduction <maximumf>, %81, %cst_31 [2] : vector<8x8x8xf32> to vector<8x8xf32>
    %85 = vector.shape_cast %84 : vector<8x8xf32> to vector<8x8x1xf32>
    %86 = arith.maximumf %83, %85 : vector<8x8x1xf32>
    %87 = vector.broadcast %86 : vector<8x8x1xf32> to vector<8x8x16xf32>
    %88 = arith.subf %80, %87 : vector<8x8x16xf32>
    %89 = math.exp %88 : vector<8x8x16xf32>
    %90 = vector.broadcast %86 : vector<8x8x1xf32> to vector<8x8x8xf32>
    %91 = arith.subf %81, %90 : vector<8x8x8xf32>
    %92 = math.exp %91 : vector<8x8x8xf32>
    %cst_32 = arith.constant dense<0.000000e+00> : vector<8x8xf32>
    %93 = vector.multi_reduction <add>, %89, %cst_32 [2] : vector<8x8x16xf32> to vector<8x8xf32>
    %94 = vector.shape_cast %93 : vector<8x8xf32> to vector<8x8x1xf32>
    %cst_33 = arith.constant dense<0.000000e+00> : vector<8x8xf32>
    %95 = vector.multi_reduction <add>, %92, %cst_33 [2] : vector<8x8x8xf32> to vector<8x8xf32>
    %96 = vector.shape_cast %95 : vector<8x8xf32> to vector<8x8x1xf32>
    %97 = arith.addf %94, %96 : vector<8x8x1xf32>
    %98 = tpu.reciprocal %97 {approx = true} : vector<8x8x1xf32> -> vector<8x8x1xf32>
    "tpu.trace_start"() <{level = 10 : i32, message = "bik,bkj->bij"}> : () -> ()
    %cst_34 = arith.constant dense<0.000000e+00> : vector<8x8x8xf32>
    %99 = tpu.matmul %89, %76, %cst_34 {dimension_numbers = #tpu.dot_dimension_numbers<[2], [1], [1], [2], [0, 0, 0, 1, 1, 2], [0], [0]>} : vector<8x8x16xf32>, vector<8x16x8xf32>, vector<8x8x8xf32> -> vector<8x8x8xf32>
    %cst_35 = arith.constant dense<0.000000e+00> : vector<8x8x8xf32>
    %100 = tpu.matmul %92, %79, %cst_35 {dimension_numbers = #tpu.dot_dimension_numbers<[2], [1], [1], [2], [0, 0, 0, 1, 1, 2], [0], [0]>} : vector<8x8x8xf32>, vector<8x8x8xf32>, vector<8x8x8xf32> -> vector<8x8x8xf32>
    "tpu.trace_stop"() : () -> ()
    %101 = arith.addf %99, %100 : vector<8x8x8xf32>
    %102 = vector.broadcast %98 : vector<8x8x1xf32> to vector<8x8x8xf32>
    %103 = arith.mulf %101, %102 : vector<8x8x8xf32>
    %104 = vector.shape_cast %103 : vector<8x8x8xf32> to vector<2x4x8x8xf32>
    %105 = tpu.transpose %104, [0, 2, 1, 3] : vector<2x4x8x8xf32> -> vector<2x8x4x8xf32>
    %106 = vector.shape_cast %105 : vector<2x8x4x8xf32> to vector<16x32xf32>
    %c0_36 = arith.constant 0 : index
    %c0_37 = arith.constant 0 : index
    %107 = vector.load %arg9[%c0_36, %c0_37] : memref<32x32xf32, #tpu.memory_space<vmem>>, vector<32x32xf32>
    %cst_38 = arith.constant dense<0.000000e+00> : vector<16x32xf32>
    %108 = tpu.matmul %106, %107, %cst_38 {dimension_numbers = #tpu.dot_dimension_numbers<[1], [0], [0], [1], [0, 0, 1, 1], [], []>} : vector<16x32xf32>, vector<32x32xf32>, vector<16x32xf32> -> vector<16x32xf32>
    %109 = vector.shape_cast %108 : vector<16x32xf32> to vector<2x8x32xf32>
    %c0_39 = arith.constant 0 : index
    %c0_40 = arith.constant 0 : index
    %c0_41 = arith.constant 0 : index
    %110 = vector.load %arg10[%c0_39, %c0_40, %c0_41] : memref<2x8x32xf32, #tpu.memory_space<vmem>>, vector<2x8x32xf32>
    tpu.vector_store %arg10[%c0_39, %c0_40, %c0_41], %109 {strides = array<i32>} : memref<2x8x32xf32, #tpu.memory_space<vmem>>, vector<2x8x32xf32>,
    return
  }
  func.func @transform_0(%arg0: i32) -> (i32, i32, i32) {
    %c0_i32 = arith.constant 0 : i32
    %c0_i32_0 = arith.constant 0 : i32
    %c0_i32_1 = arith.constant 0 : i32
    return %arg0, %c0_i32, %c0_i32_0 : i32, i32, i32
  }
  func.func @transform_1(%arg0: i32) -> (i32, i32, i32) {
    %c0_i32 = arith.constant 0 : i32
    %c0_i32_0 = arith.constant 0 : i32
    %c0_i32_1 = arith.constant 0 : i32
    return %arg0, %c0_i32, %c0_i32_0 : i32, i32, i32
  }
  func.func @transform_2(%arg0: i32) -> (i32, i32) {
    %c0_i32 = arith.constant 0 : i32
    %c0_i32_0 = arith.constant 0 : i32
    %c0_i32_1 = arith.constant 0 : i32
    return %c0_i32, %c0_i32_0 : i32, i32
  }
  func.func @transform_3(%arg0: i32) -> (i32, i32) {
    %c0_i32 = arith.constant 0 : i32
    %c0_i32_0 = arith.constant 0 : i32
    %c0_i32_1 = arith.constant 0 : i32
    return %c0_i32, %c0_i32_0 : i32, i32
  }
  func.func @transform_4(%arg0: i32) -> (i32, i32) {
    %c0_i32 = arith.constant 0 : i32
    %c0_i32_0 = arith.constant 0 : i32
    %c0_i32_1 = arith.constant 0 : i32
    return %c0_i32, %c0_i32_0 : i32, i32
  }
  func.func @transform_5(%arg0: i32) -> (i32, i32) {
    %c0_i32 = arith.constant 0 : i32
    %c0_i32_0 = arith.constant 0 : i32
    %c0_i32_1 = arith.constant 0 : i32
    return %c0_i32, %c0_i32_0 : i32, i32
  }
  func.func @transform_6(%arg0: i32) -> (i32, i32) {
    %c0_i32 = arith.constant 0 : i32
    %c0_i32_0 = arith.constant 0 : i32
    %c0_i32_1 = arith.constant 0 : i32
    return %c0_i32, %c0_i32_0 : i32, i32
  }
  func.func @transform_7(%arg0: i32) -> (i32, i32) {
    %c0_i32 = arith.constant 0 : i32
    %c0_i32_0 = arith.constant 0 : i32
    %c0_i32_1 = arith.constant 0 : i32
    return %c0_i32, %c0_i32_0 : i32, i32
  }
  func.func @transform_8(%arg0: i32) -> (i32, i32) {
    %c0_i32 = arith.constant 0 : i32
    %c0_i32_0 = arith.constant 0 : i32
    %c0_i32_1 = arith.constant 0 : i32
    return %c0_i32, %c0_i32_0 : i32, i32
  }
  func.func @transform_9(%arg0: i32) -> (i32, i32, i32) {
    %c0_i32 = arith.constant 0 : i32
    %c0_i32_0 = arith.constant 0 : i32
    %c0_i32_1 = arith.constant 0 : i32
    return %arg0, %c0_i32, %c0_i32_0 : i32, i32, i32
  }
}

</mosaic_0001>

<llo_original>
// kernel: tpu_custom_call.1
$region0: #{tpu_custom_call.1}
  #allocation0 [shape = 'u32[]', space=smem, size = 0x4, offset = 0x4, fixed_abs, tag = 'smem constant byte address 0x4 - core index']
  #allocation1 [shape = 'u32[72,128]{1,0:T(1,128)}', space=vmem, size = 0x9000, scoped, tag = 'internal scratch']
  %s0 = inlined_call_operand.hbm [shape: f32[4,16,32], index: 0, kind: input, shape index: {}]
  %s1 = inlined_call_operand.hbm [shape: f32[4,8,32], index: 1, kind: input, shape index: {}]
  %s2 = inlined_call_operand.vmem [shape: f32[1,32], index: 2, kind: input, shape index: {}]
  %s3 = inlined_call_operand.vmem [shape: f32[1,32], index: 3, kind: input, shape index: {}]
  %s4 = inlined_call_operand.vmem [shape: f32[1,32], index: 4, kind: input, shape index: {}]
  %s5 = inlined_call_operand.vmem [shape: f32[1,32], index: 5, kind: input, shape index: {}]
  %s6 = inlined_call_operand.hbm [shape: f32[32,64], index: 6, kind: input, shape index: {}]
  %s7 = inlined_call_operand.hbm [shape: f32[32,96], index: 7, kind: input, shape index: {}]
  %s8 = inlined_call_operand.hbm [shape: f32[32,32], index: 8, kind: input, shape index: {}]
  %s9 = inlined_call_operand.hbm [shape: f32[4,8,32], index: 9, kind: output, shape index: {}]
  %s10 = sld [smem:[#allocation0]]
  $region89: #{tpu_custom_call.1} parent=0
    _
  %s12 = ssub.s32 1, %s10
  %s13 = scalar_select 0, %s12, %s10
  $region1: #{tpu_custom_call.1} parent=0
    #allocation2 [shape = 'u8[32768]{0}', space=vmem, size = 0x8000, scoped, tag = 'input window, operand 0']
    #allocation3 [shape = 's32[2]{0}', space=sflag, size = 0x8, scoped, tag = 'scoped memory for tpu_custom_call.1']
    #allocation4 [shape = 's32[2]{0}', space=sflag, size = 0x8, scoped, tag = 'scoped memory for tpu_custom_call.1']
    #allocation5 [shape = 'u8[16384]{0}', space=vmem, size = 0x4000, scoped, tag = 'input window, operand 1']
    #allocation6 [shape = 's32[2]{0}', space=sflag, size = 0x8, scoped, tag = 'scoped memory for tpu_custom_call.1']
    #allocation7 [shape = 'u8[16384]{0}', space=vmem, size = 0x4000, scoped, tag = 'input window, operand 6, single buffered']
    #allocation8 [shape = 'u8[16384]{0}', space=vmem, size = 0x4000, scoped, tag = 'input window, operand 7, single buffered']
    #allocation9 [shape = 's32[1]{0}', space=sflag, size = 0x4, scoped, tag = 'scoped memory for tpu_custom_call.1']
    #allocation10 [shape = 'u8[16384]{0}', space=vmem, size = 0x4000, scoped, tag = 'input window, operand 8, single buffered']
    #allocation11 [shape = 'u8[16384]{0}', space=vmem, size = 0x4000, scoped, tag = 'output window, operand 0']
    %14 = vsyncpa [#allocation3], 0
    %s15 = scalar_lea.sflag [#allocation3], 1
    %16 = vsyncpa %s15, 0
    %17 = vsyncpa [#allocation6], 0
    %s18 = scalar_lea.sflag [#allocation6], 1
    %19 = vsyncpa %s18, 0
    %20 = vsyncpa [#allocation9], 0
    %21 = vsyncpa [#allocation4], 0
    %s22 = scalar_lea.sflag [#allocation4], 1
    %23 = vsyncpa %s22, 0
    loop: start=0, step=1, limit=4
    $region2: #{tpu_custom_call.1} parent=1 // loop_pre_header
      _
    $region3: #{tpu_custom_call.1} parent=1 // loop_header
      %s25 = sphi 0, %s29
      %p26 = scmp.ge.s32.totalorder %s25, 4
      %s35 = sphi 0, %s37
      %s38 = sphi 0, %s35
      %s39 = sphi 0, %s38
      %s55 = sphi 0, %s39
      %s61 = sphi 0, %s63
      %s64 = sphi 0, %s61
      %s65 = sphi 0, %s64
      %s81 = sphi 0, %s65
      %s85 = sphi 0, %s85
      %s87 = sphi 0, %s85
      %s88 = sphi 0, %s87
      %s102 = sphi 0, %s88
      %s106 = sphi 0, %s106
      %s108 = sphi 0, %s106
      %s109 = sphi 0, %s108
      %s123 = sphi 0, %s109
      %s127 = sphi 0, %s127
      %s129 = sphi 0, %s127
      %s130 = sphi 0, %s129
      %s144 = sphi 0, %s130
      %s148 = sphi 0, %s148
      %s150 = sphi 0, %s148
      %s151 = sphi 0, %s150
      %s165 = sphi 0, %s151
      %s169 = sphi 0, %s169
      %s171 = sphi 0, %s169
      %s172 = sphi 0, %s171
      %s186 = sphi 0, %s172
      %s190 = sphi 0, %s190
      %s192 = sphi 0, %s190
      %s193 = sphi 0, %s192
      %s207 = sphi 0, %s193
      %s211 = sphi 0, %s211
      %s213 = sphi 0, %s211
      %s214 = sphi 0, %s213
      %s228 = sphi 0, %s214
      %s234 = sphi 0, %s236
      %s237 = sphi 0, %s234
      %s238 = sphi 0, %s237
      %s254 = sphi 0, %s238
    $region4: #{tpu_custom_call.1} parent=1 // loop_header_branch
      %28 = sbr.rel (%p26) target = $region8
    $region5: #{tpu_custom_call.1} parent=1 // loop_body
      %s30 = ssub.s32 %s25, 1
      %s31 = ssub.s32 %s25, 2
      %s32 = sadd.s32 %s25, 1
      %s33 = ssub.s32 %s25, %s32
      %p34 = scmp.eq.s32.totalorder %s33, 0
      %s36 = sadd.s32 %s35, 1
      %s37 = scalar_select %p34, %s35, %s36
      %p40 = pneg %p34
      %p41 = scmp.eq.s32.totalorder %s25, 1
      %p42 = por %p40, %p41
      %p43 = scmp.ne.s32.totalorder %s35, %s38
      %p44 = scmp.eq.s32.totalorder %s25, 0
      %p45 = por %p43, %p44
      %p46 = scmp.ne.s32.totalorder %s35, %s38
      %p47 = scmp.eq.s32.totalorder %s30, 1
      %p48 = por %p46, %p47
      %p49 = scmp.ne.s32.totalorder %s38, %s39
      %p50 = scmp.eq.s32.totalorder %s30, 0
      %p51 = por %p49, %p50
      %p52 = scmp.ne.s32.totalorder %s38, %s39
      %p53 = scmp.eq.s32.totalorder %s31, 1
      %p54 = por %p52, %p53
      %p56 = scmp.ne.s32.totalorder %s39, %s55
      %p57 = scmp.eq.s32.totalorder %s31, 0
      %p58 = por %p56, %p57
      %s59 = ssub.s32 %s25, %s32
      %p60 = scmp.eq.s32.totalorder %s59, 0
      %s62 = sadd.s32 %s61, 1
      %s63 = scalar_select %p60, %s61, %s62
      %p66 = pneg %p60
      %p67 = scmp.eq.s32.totalorder %s25, 1
      %p68 = por %p66, %p67
      %p69 = scmp.ne.s32.totalorder %s61, %s64
      %p70 = scmp.eq.s32.totalorder %s25, 0
      %p71 = por %p69, %p70
      %p72 = scmp.ne.s32.totalorder %s61, %s64
      %p73 = scmp.eq.s32.totalorder %s30, 1
      %p74 = por %p72, %p73
      %p75 = scmp.ne.s32.totalorder %s64, %s65
      %p76 = scmp.eq.s32.totalorder %s30, 0
      %p77 = por %p75, %p76
      %p78 = scmp.ne.s32.totalorder %s64, %s65
      %p79 = scmp.eq.s32.totalorder %s31, 1
      %p80 = por %p78, %p79
      %p82 = scmp.ne.s32.totalorder %s65, %s81
      %p83 = scmp.eq.s32.totalorder %s31, 0
      %p84 = por %p82, %p83
      %s86 = sadd.s32 %s85, 1
      %p89 = scmp.eq.s32.totalorder %s25, 1
      %p90 = scmp.ne.s32.totalorder %s85, %s87
      %p91 = scmp.eq.s32.totalorder %s25, 0
      %p92 = por %p90, %p91
      %p93 = scmp.ne.s32.totalorder %s85, %s87
      %p94 = scmp.eq.s32.totalorder %s30, 1
      %p95 = por %p93, %p94
      %p96 = scmp.ne.s32.totalorder %s87, %s88
      %p97 = scmp.eq.s32.totalorder %s30, 0
      %p98 = por %p96, %p97
      %p99 = scmp.ne.s32.totalorder %s87, %s88
      %p100 = scmp.eq.s32.totalorder %s31, 1
      %p101 = por %p99, %p100
      %p103 = scmp.ne.s32.totalorder %s88, %s102
      %p104 = scmp.eq.s32.totalorder %s31, 0
      %p105 = por %p103, %p104
      %s107 = sadd.s32 %s106, 1
      %p110 = scmp.eq.s32.totalorder %s25, 1
      %p111 = scmp.ne.s32.totalorder %s106, %s108
      %p112 = scmp.eq.s32.totalorder %s25, 0
      %p113 = por %p111, %p112
      %p114 = scmp.ne.s32.totalorder %s106, %s108
      %p115 = scmp.eq.s32.totalorder %s30, 1
      %p116 = por %p114, %p115
      %p117 = scmp.ne.s32.totalorder %s108, %s109
      %p118 = scmp.eq.s32.totalorder %s30, 0
      %p119 = por %p117, %p118
      %p120 = scmp.ne.s32.totalorder %s108, %s109
      %p121 = scmp.eq.s32.totalorder %s31, 1
      %p122 = por %p120, %p121
      %p124 = scmp.ne.s32.totalorder %s109, %s123
      %p125 = scmp.eq.s32.totalorder %s31, 0
      %p126 = por %p124, %p125
      %s128 = sadd.s32 %s127, 1
      %p131 = scmp.eq.s32.totalorder %s25, 1
      %p132 = scmp.ne.s32.totalorder %s127, %s129
      %p133 = scmp.eq.s32.totalorder %s25, 0
      %p134 = por %p132, %p133
      %p135 = scmp.ne.s32.totalorder %s127, %s129
      %p136 = scmp.eq.s32.totalorder %s30, 1
      %p137 = por %p135, %p136
      %p138 = scmp.ne.s32.totalorder %s129, %s130
      %p139 = scmp.eq.s32.totalorder %s30, 0
      %p140 = por %p138, %p139
      %p141 = scmp.ne.s32.totalorder %s129, %s130
      %p142 = scmp.eq.s32.totalorder %s31, 1
      %p143 = por %p141, %p142
      %p145 = scmp.ne.s32.totalorder %s130, %s144
      %p146 = scmp.eq.s32.totalorder %s31, 0
      %p147 = por %p145, %p146
      %s149 = sadd.s32 %s148, 1
      %p152 = scmp.eq.s32.totalorder %s25, 1
      %p153 = scmp.ne.s32.totalorder %s148, %s150
      %p154 = scmp.eq.s32.totalorder %s25, 0
      %p155 = por %p153, %p154
      %p156 = scmp.ne.s32.totalorder %s148, %s150
      %p157 = scmp.eq.s32.totalorder %s30, 1
      %p158 = por %p156, %p157
      %p159 = scmp.ne.s32.totalorder %s150, %s151
      %p160 = scmp.eq.s32.totalorder %s30, 0
      %p161 = por %p159, %p160
      %p162 = scmp.ne.s32.totalorder %s150, %s151
      %p163 = scmp.eq.s32.totalorder %s31, 1
      %p164 = por %p162, %p163
      %p166 = scmp.ne.s32.totalorder %s151, %s165
      %p167 = scmp.eq.s32.totalorder %s31, 0
      %p168 = por %p166, %p167
      %s170 = sadd.s32 %s169, 1
      %p173 = scmp.eq.s32.totalorder %s25, 1
      %p174 = scmp.ne.s32.totalorder %s169, %s171
      %p175 = scmp.eq.s32.totalorder %s25, 0
      %p176 = por %p174, %p175
      %p177 = scmp.ne.s32.totalorder %s169, %s171
      %p178 = scmp.eq.s32.totalorder %s30, 1
      %p179 = por %p177, %p178
      %p180 = scmp.ne.s32.totalorder %s171, %s172
      %p181 = scmp.eq.s32.totalorder %s30, 0
      %p182 = por %p180, %p181
      %p183 = scmp.ne.s32.totalorder %s171, %s172
      %p184 = scmp.eq.s32.totalorder %s31, 1
      %p185 = por %p183, %p184
      %p187 = scmp.ne.s32.totalorder %s172, %s186
      %p188 = scmp.eq.s32.totalorder %s31, 0
      %p189 = por %p187, %p188
      %s191 = sadd.s32 %s190, 1
      %p194 = scmp.eq.s32.totalorder %s25, 1
      %p195 = scmp.ne.s32.totalorder %s190, %s192
      %p196 = scmp.eq.s32.totalorder %s25, 0
      %p197 = por %p195, %p196
      %p198 = scmp.ne.s32.totalorder %s190, %s192
      %p199 = scmp.eq.s32.totalorder %s30, 1
      %p200 = por %p198, %p199
      %p201 = scmp.ne.s32.totalorder %s192, %s193
      %p202 = scmp.eq.s32.totalorder %s30, 0
      %p203 = por %p201, %p202
      %p204 = scmp.ne.s32.totalorder %s192, %s193
      %p205 = scmp.eq.s32.totalorder %s31, 1
      %p206 = por %p204, %p205
      %p208 = scmp.ne.s32.totalorder %s193, %s207
      %p209 = scmp.eq.s32.totalorder %s31, 0
      %p210 = por %p208, %p209
      %s212 = sadd.s32 %s211, 1
      %p215 = scmp.eq.s32.totalorder %s25, 1
      %p216 = scmp.ne.s32.totalorder %s211, %s213
      %p217 = scmp.eq.s32.totalorder %s25, 0
      %p218 = por %p216, %p217
      %p219 = scmp.ne.s32.totalorder %s211, %s213
      %p220 = scmp.eq.s32.totalorder %s30, 1
      %p221 = por %p219, %p220
      %p222 = scmp.ne.s32.totalorder %s213, %s214
      %p223 = scmp.eq.s32.totalorder %s30, 0
      %p224 = por %p222, %p223
      %p225 = scmp.ne.s32.totalorder %s213, %s214
      %p226 = scmp.eq.s32.totalorder %s31, 1
      %p227 = por %p225, %p226
      %p229 = scmp.ne.s32.totalorder %s214, %s228
      %p230 = scmp.eq.s32.totalorder %s31, 0
      %p231 = por %p229, %p230
      %s232 = ssub.s32 %s25, %s32
      %p233 = scmp.eq.s32.totalorder %s232, 0
      %s235 = sadd.s32 %s234, 1
      %s236 = scalar_select %p233, %s234, %s235
      %p239 = pneg %p233
      %p240 = scmp.eq.s32.totalorder %s25, 1
      %p241 = por %p239, %p240
      %p242 = scmp.ne.s32.totalorder %s234, %s237
      %p243 = scmp.eq.s32.totalorder %s25, 0
      %p244 = por %p242, %p243
      %p245 = scmp.ne.s32.totalorder %s234, %s237
      %p246 = scmp.eq.s32.totalorder %s30, 1
      %p247 = por %p245, %p246
      %p248 = scmp.ne.s32.totalorder %s237, %s238
      %p249 = scmp.eq.s32.totalorder %s30, 0
      %p250 = por %p248, %p249
      %p251 = scmp.ne.s32.totalorder %s237, %s238
      %p252 = scmp.eq.s32.totalorder %s31, 1
      %p253 = por %p251, %p252
      %p255 = scmp.ne.s32.totalorder %s238, %s254
      %p256 = scmp.eq.s32.totalorder %s31, 0
      %p257 = por %p255, %p256
      %p258 = scmp.le.s32.totalorder 1, %s25
      %p259 = scmp.lt.s32.totalorder %s25, 3
      %p260 = pnand %p258, %p259
      %p261 = pneg %p260
      // Predicated region
      $region9: #{tpu_custom_call.1} parent=5 // pred_check
        _
      $region10: #{tpu_custom_call.1} parent=5 // pred_check_branch
        %263 = sbr.rel (%p260) target = $region12
      $region11: #{tpu_custom_call.1} parent=5 // pred_region
        %s264 = ssub.s32 %s25, 1
        // Predicated region
        $region13: #{tpu_custom_call.1} parent=11 // pred_check
          %p265 = pneg %p98
        $region14: #{tpu_custom_call.1} parent=11 // pred_check_branch
          %267 = sbr.rel (%p265) target = $region16
        $region15: #{tpu_custom_call.1} parent=11 // pred_region
          _
        $region16: #{tpu_custom_call.1} parent=11 // pred_fallthru
          _
        // Predicated region
        $region17: #{tpu_custom_call.1} parent=11 // pred_check
          %p268 = pneg %p119
        $region18: #{tpu_custom_call.1} parent=11 // pred_check_branch
          %270 = sbr.rel (%p268) target = $region20
        $region19: #{tpu_custom_call.1} parent=11 // pred_region
          _
        $region20: #{tpu_custom_call.1} parent=11 // pred_fallthru
          _
        // Predicated region
        $region21: #{tpu_custom_call.1} parent=11 // pred_check
          %p271 = pneg %p140
        $region22: #{tpu_custom_call.1} parent=11 // pred_check_branch
          %273 = sbr.rel (%p271) target = $region24
        $region23: #{tpu_custom_call.1} parent=11 // pred_region
          _
        $region24: #{tpu_custom_call.1} parent=11 // pred_fallthru
          _
        // Predicated region
        $region25: #{tpu_custom_call.1} parent=11 // pred_check
          %p274 = pneg %p161
        $region26: #{tpu_custom_call.1} parent=11 // pred_check_branch
          %276 = sbr.rel (%p274) target = $region28
        $region27: #{tpu_custom_call.1} parent=11 // pred_region
          _
        $region28: #{tpu_custom_call.1} parent=11 // pred_fallthru
          _
        // Predicated region
        $region29: #{tpu_custom_call.1} parent=11 // pred_check
          %p277 = pneg %p182
        $region30: #{tpu_custom_call.1} parent=11 // pred_check_branch
          %279 = sbr.rel (%p277) target = $region32
        $region31: #{tpu_custom_call.1} parent=11 // pred_region
          %281 = vsyncadd [#allocation6], 0
          %s282 = sshll.u32 %s6, 4
          %s283 = int_to_ptr.hbm [resolvable:$true] %s282
          %s284 = sshll.u32 [#allocation7], 4
          %s285 = int_to_ptr.vmem [resolvable:$true] %s284
          %290 = dma.hbm_to_vmem [thread:$0]  %s283, 512, %s285, [#allocation6], 128, 128, 8
        $region32: #{tpu_custom_call.1} parent=11 // pred_fallthru
          _
        // Predicated region
        $region33: #{tpu_custom_call.1} parent=11 // pred_check
          %p291 = pneg %p203
        $region34: #{tpu_custom_call.1} parent=11 // pred_check_branch
          %293 = sbr.rel (%p291) target = $region36
        $region35: #{tpu_custom_call.1} parent=11 // pred_region
          %295 = vsyncadd [#allocation9], 0
          %s296 = sshll.u32 %s7, 4
          %s297 = int_to_ptr.hbm [resolvable:$true] %s296
          %s298 = sshll.u32 [#allocation8], 4
          %s299 = int_to_ptr.vmem [resolvable:$true] %s298
          %304 = dma.hbm_to_vmem [thread:$0]  %s297, 512, %s299, [#allocation9], 128, 128, 8
        $region36: #{tpu_custom_call.1} parent=11 // pred_fallthru
          _
        // Predicated region
        $region37: #{tpu_custom_call.1} parent=11 // pred_check
          %p305 = pneg %p224
        $region38: #{tpu_custom_call.1} parent=11 // pred_check_branch
          %307 = sbr.rel (%p305) target = $region40
        $region39: #{tpu_custom_call.1} parent=11 // pred_region
          %309 = vsyncadd [#allocation9], 0
          %s310 = sshll.u32 %s8, 4
          %s311 = int_to_ptr.hbm [resolvable:$true] %s310
          %s312 = sshll.u32 [#allocation10], 4
          %s313 = int_to_ptr.vmem [resolvable:$true] %s312
          %318 = dma.hbm_to_vmem [thread:$0]  %s311, 512, %s313, [#allocation9], 128, 128, 8
        $region40: #{tpu_custom_call.1} parent=11 // pred_fallthru
          _
      $region12: #{tpu_custom_call.1} parent=5 // pred_fallthru
        _
      %p319 = scmp.lt.s32.totalorder %s25, 2
      // Predicated region
      $region41: #{tpu_custom_call.1} parent=5 // pred_check
        %p320 = pneg %p319
      $region42: #{tpu_custom_call.1} parent=5 // pred_check_branch
        %322 = sbr.rel (%p320) target = $region44
      $region43: #{tpu_custom_call.1} parent=5 // pred_region
        // Predicated region
        $region45: #{tpu_custom_call.1} parent=43 // pred_check
          %p323 = pneg %p45
        $region46: #{tpu_custom_call.1} parent=43 // pred_check_branch
          %325 = sbr.rel (%p323) target = $region48
        $region47: #{tpu_custom_call.1} parent=43 // pred_region
          %s326 = sand.u32 %s35, 1
          %s327 = scalar_lea.sflag [#allocation3], %s326
          %s328 = sand.u32 %s35, 1
          %s329 = smul.addr %s328, 32
          %s330 = scalar_lea.vmem [#allocation2], %s329
          %s331 = smul.u32 2, %s25
          %333 = vsyncadd %s327, 0
          %s334 = smul.addr %s331, 2
          %s335 = smul.addr %s334, 8
          %s336 = scalar_lea.hbm %s0, %s335
          %s337 = sshll.u32 %s336, 4
          %s338 = int_to_ptr.hbm [resolvable:$true] %s337
          %s339 = sshll.u32 %s330, 4
          %s340 = int_to_ptr.vmem [resolvable:$true] %s339
          %345 = dma.hbm_to_vmem [thread:$0]  %s338, 512, %s340, %s327, 128, 128, 8
        $region48: #{tpu_custom_call.1} parent=43 // pred_fallthru
          _
        // Predicated region
        $region49: #{tpu_custom_call.1} parent=43 // pred_check
          %p346 = pneg %p71
        $region50: #{tpu_custom_call.1} parent=43 // pred_check_branch
          %348 = sbr.rel (%p346) target = $region52
        $region51: #{tpu_custom_call.1} parent=43 // pred_region
          %s349 = sand.u32 %s25, 1
          %s350 = scalar_lea.sflag [#allocation6], %s349
          %s351 = sand.u32 %s61, 1
          %s352 = smul.addr %s351, 16
          %s353 = scalar_lea.vmem [#allocation5], %s352
          %s354 = smul.u32 2, %s25
          %356 = vsyncadd %s350, 0
          %s357 = smul.addr %s354, 8
          %s358 = scalar_lea.hbm %s1, %s357
          %s359 = sshll.u32 %s358, 4
          %s360 = int_to_ptr.hbm [resolvable:$true] %s359
          %s361 = sshll.u32 %s353, 4
          %s362 = int_to_ptr.vmem [resolvable:$true] %s361
          %367 = dma.hbm_to_vmem [thread:$0]  %s360, 256, %s362, %s350, 128, 128, 8
        $region52: #{tpu_custom_call.1} parent=43 // pred_fallthru
          _
      $region44: #{tpu_custom_call.1} parent=5 // pred_fallthru
        _
      %p368 = scmp.le.s32.totalorder 1, %s25
      %p369 = scmp.lt.s32.totalorder %s25, 3
      %p370 = pnand %p368, %p369
      %p371 = pneg %p370
      // Predicated region
      $region53: #{tpu_custom_call.1} parent=5 // pred_check
        _
      $region54: #{tpu_custom_call.1} parent=5 // pred_check_branch
        %373 = sbr.rel (%p370) target = $region56
      $region55: #{tpu_custom_call.1} parent=5 // pred_region
        %s374 = ssub.s32 %s25, 1
        %s375 = sand.u32 %s38, 1
        %s376 = scalar_lea.sflag [#allocation3], %s375
        %s377 = sand.u32 %s38, 1
        %s378 = smul.addr %s377, 32
        %s379 = scalar_lea.vmem [#allocation2], %s378
        // Predicated region
        $region57: #{tpu_custom_call.1} parent=55 // pred_check
          %p380 = pneg %p51
        $region58: #{tpu_custom_call.1} parent=55 // pred_check_branch
          %382 = sbr.rel (%p380) target = $region60
        $region59: #{tpu_custom_call.1} parent=55 // pred_region
          %384 = dma.done %s376, 512
        $region60: #{tpu_custom_call.1} parent=55 // pred_fallthru
          _
        %s385 = sand.u32 %s30, 1
        %s386 = scalar_lea.sflag [#allocation6], %s385
        %s387 = sand.u32 %s64, 1
        %s388 = smul.addr %s387, 16
        %s389 = scalar_lea.vmem [#allocation5], %s388
        // Predicated region
        $region61: #{tpu_custom_call.1} parent=55 // pred_check
          %p390 = pneg %p77
        $region62: #{tpu_custom_call.1} parent=55 // pred_check_branch
          %392 = sbr.rel (%p390) target = $region64
        $region63: #{tpu_custom_call.1} parent=55 // pred_region
          %394 = dma.done %s386, 256
        $region64: #{tpu_custom_call.1} parent=55 // pred_fallthru
          _
        // Predicated region
        $region65: #{tpu_custom_call.1} parent=55 // pred_check
          %p395 = pneg %p182
        $region66: #{tpu_custom_call.1} parent=55 // pred_check_branch
          %397 = sbr.rel (%p395) target = $region68
        $region67: #{tpu_custom_call.1} parent=55 // pred_region
          %399 = dma.done [#allocation6], 512
        $region68: #{tpu_custom_call.1} parent=55 // pred_fallthru
          _
        // Predicated region
        $region69: #{tpu_custom_call.1} parent=55 // pred_check
          %p400 = pneg %p203
        $region70: #{tpu_custom_call.1} parent=55 // pred_check_branch
          %402 = sbr.rel (%p400) target = $region72
        $region71: #{tpu_custom_call.1} parent=55 // pred_region
          %404 = dma.done [#allocation9], 512
        $region72: #{tpu_custom_call.1} parent=55 // pred_fallthru
          _
        // Predicated region
        $region73: #{tpu_custom_call.1} parent=55 // pred_check
          %p405 = pneg %p224
        $region74: #{tpu_custom_call.1} parent=55 // pred_check_branch
          %407 = sbr.rel (%p405) target = $region76
        $region75: #{tpu_custom_call.1} parent=55 // pred_region
          %409 = dma.done [#allocation9], 512
        $region76: #{tpu_custom_call.1} parent=55 // pred_fallthru
          _
        %s410 = sand.u32 %s38, 1
        %s411 = scalar_lea.sflag [#allocation3], %s410
        %s412 = sand.u32 %s38, 1
        %s413 = smul.addr %s412, 32
        %s414 = scalar_lea.vmem [#allocation2], %s413
        %p415 = pneg %p51
        %p416 = pneg %p48
        %s417 = sand.u32 %s30, 1
        %s418 = scalar_lea.sflag [#allocation6], %s417
        %s419 = sand.u32 %s64, 1
        %s420 = smul.addr %s419, 16
        %s421 = scalar_lea.vmem [#allocation5], %s420
        %p422 = pneg %p77
        %p423 = pneg %p74
        %p424 = pneg %p98
        %p425 = pneg %p95
        %p426 = pneg %p119
        %p427 = pneg %p116
        %p428 = pneg %p140
        %p429 = pneg %p137
        %p430 = pneg %p161
        %p431 = pneg %p158
        %p432 = pneg %p182
        %p433 = pneg %p179
        %p434 = pneg %p203
        %p435 = pneg %p200
        %p436 = pneg %p224
        %p437 = pneg %p221
        %p438 = pneg %p250
        %p439 = pneg %p247
        %s440 = sand.u32 %s237, 1
        %s441 = scalar_lea.sflag [#allocation4], %s440
        %s442 = sand.u32 %s237, 1
        %s443 = smul.addr %s442, 16
        %s444 = scalar_lea.vmem [#allocation11], %s443
        %s445 = smul.u32 2, %s30
        %s446 = smul.u32 2, %s30
        %s447 = smul.u32 2, %s30
        %v448 = vld [vmem:[%s379] sm:$0xff]
        %v449 = vld [vmem:[%s379 + $0x8] sm:$0xff]
        %v450 = vld [vmem:[%s379 + $0x10] sm:$0xff]
        %v451 = vld [vmem:[%s379 + $0x18] sm:$0xff]
        %vm452 = vcmask 261120
        %v453 = vsel %vm452, %v448, 0.0
        %454 = vadd.xlane.f32.xlu0 %v453
        %v455 = vpop.xlane.xlu0 %454
        %v456 = vsel %vm452, %v449, 0.0
        %457 = vadd.xlane.f32.xlu0 %v456
        %v458 = vpop.xlane.xlu0 %457
        %v459 = vsel %vm452, %v450, 0.0
        %460 = vadd.xlane.f32.xlu0 %v459
        %v461 = vpop.xlane.xlu0 %460
        %v462 = vsel %vm452, %v451, 0.0
        %463 = vadd.xlane.f32.xlu0 %v462
        %v464 = vpop.xlane.xlu0 %463
        %v465 = vrcp.pop 32.0
        %v466 = vmul.f32 32.0, %v465
        %v467 = vsub.f32 1.0, %v466
        %v468 = vmul.f32 %v465, %v467
        %v469 = vadd.f32 %v465, %v468
        %vm470 = vweird.f32 %v465
        %v471 = vsel %vm470, %v465, %v469
        %v472 = vmul.f32 %v455, %v471
        %v473 = vmul.f32 %v458, %v471
        %v474 = vmul.f32 %v461, %v471
        %v475 = vmul.f32 %v464, %v471
        %v476 = vsub.f32 %v448, %v472
        %v477 = vsub.f32 %v449, %v473
        %v478 = vsub.f32 %v450, %v474
        %v479 = vsub.f32 %v451, %v475
        %v480 = vmul.f32 %v476, %v476
        %v481 = vmul.f32 %v477, %v477
        %v482 = vmul.f32 %v478, %v478
        %v483 = vmul.f32 %v479, %v479
        %v484 = vsel %vm452, %v480, 0.0
        %485 = vadd.xlane.f32.xlu0 %v484
        %v486 = vpop.xlane.xlu0 %485
        %v487 = vsel %vm452, %v481, 0.0
        %488 = vadd.xlane.f32.xlu0 %v487
        %v489 = vpop.xlane.xlu0 %488
        %v490 = vsel %vm452, %v482, 0.0
        %491 = vadd.xlane.f32.xlu0 %v490
        %v492 = vpop.xlane.xlu0 %491
        %v493 = vsel %vm452, %v483, 0.0
        %494 = vadd.xlane.f32.xlu0 %v493
        %v495 = vpop.xlane.xlu0 %494
        %v496 = vmul.f32 %v486, %v471
        %v497 = vmul.f32 %v489, %v471
        %v498 = vmul.f32 %v492, %v471
        %v499 = vmul.f32 %v495, %v471
        %v500 = vld [vmem:[%s2] sm:$0x1]
        %v501 = vld [vmem:[%s3] sm:$0x1]
        %v502 = vadd.f32 %v496, 1e-05
        %v503 = vadd.f32 %v497, 1e-05
        %v504 = vadd.f32 %v498, 1e-05
        %v505 = vadd.f32 %v499, 1e-05
        %v506 = vrsqrt.pop %v502
        %v507 = vmul.f32 %v506, %v502
        %v508 = vmul.f32 %v507, %v506
        %v509 = vmul.f32 0.5, %v508
        %v510 = vsub.f32 1.5, %v509
        %v511 = vmul.f32 %v506, %v510
        %vm512 = vweird.f32 %v502
        %vm513 = vweird.f32 %v506
        %vm514 = vmor %vm512, %vm513
        %v515 = vsel %vm514, %v506, %v511
        %v516 = vrsqrt.pop %v503
        %v517 = vmul.f32 %v516, %v503
        %v518 = vmul.f32 %v517, %v516
        %v519 = vmul.f32 0.5, %v518
        %v520 = vsub.f32 1.5, %v519
        %v521 = vmul.f32 %v516, %v520
        %vm522 = vweird.f32 %v503
        %vm523 = vweird.f32 %v516
        %vm524 = vmor %vm522, %vm523
        %v525 = vsel %vm524, %v516, %v521
        %v526 = vrsqrt.pop %v504
        %v527 = vmul.f32 %v526, %v504
        %v528 = vmul.f32 %v527, %v526
        %v529 = vmul.f32 0.5, %v528
        %v530 = vsub.f32 1.5, %v529
        %v531 = vmul.f32 %v526, %v530
        %vm532 = vweird.f32 %v504
        %vm533 = vweird.f32 %v526
        %vm534 = vmor %vm532, %vm533
        %v535 = vsel %vm534, %v526, %v531
        %v536 = vrsqrt.pop %v505
        %v537 = vmul.f32 %v536, %v505
        %v538 = vmul.f32 %v537, %v536
        %v539 = vmul.f32 0.5, %v538
        %v540 = vsub.f32 1.5, %v539
        %v541 = vmul.f32 %v536, %v540
        %vm542 = vweird.f32 %v505
        %vm543 = vweird.f32 %v536
        %vm544 = vmor %vm542, %vm543
        %v545 = vsel %vm544, %v536, %v541
        %v546 = vmul.f32 %v476, %v515
        %v547 = vmul.f32 %v477, %v525
        %v548 = vmul.f32 %v478, %v535
        %v549 = vmul.f32 %v479, %v545
        %v551 = vperm.slane %v500, 0
        %v553 = vmul.f32 %v546, %v551
        %v554 = vmul.f32 %v547, %v551
        %v555 = vmul.f32 %v548, %v551
        %v556 = vmul.f32 %v549, %v551
        %v558 = vperm.slane %v501, 0
        %v560 = vadd.f32 %v553, %v558
        %v561 = vadd.f32 %v554, %v558
        %v562 = vadd.f32 %v555, %v558
        %v563 = vadd.f32 %v556, %v558
        %v564 = vld [vmem:[%s389] sm:$0xff]
        %v565 = vld [vmem:[%s389 + $0x8] sm:$0xff]
        %v566 = vsel %vm452, %v564, 0.0
        %567 = vadd.xlane.f32.xlu0 %v566
        %v568 = vpop.xlane.xlu0 %567
        %v569 = vsel %vm452, %v565, 0.0
        %570 = vadd.xlane.f32.xlu0 %v569
        %v571 = vpop.xlane.xlu0 %570
        %v572 = vmul.f32 %v568, %v471
        %v573 = vmul.f32 %v571, %v471
        %v574 = vsub.f32 %v564, %v572
        %v575 = vsub.f32 %v565, %v573
        %v576 = vmul.f32 %v574, %v574
        %v577 = vmul.f32 %v575, %v575
        %v578 = vsel %vm452, %v576, 0.0
        %579 = vadd.xlane.f32.xlu0 %v578
        %v580 = vpop.xlane.xlu0 %579
        %v581 = vsel %vm452, %v577, 0.0
        %582 = vadd.xlane.f32.xlu0 %v581
        %v583 = vpop.xlane.xlu0 %582
        %v584 = vmul.f32 %v580, %v471
        %v585 = vmul.f32 %v583, %v471
        %v586 = vld [vmem:[%s4] sm:$0x1]
        %v587 = vld [vmem:[%s5] sm:$0x1]
        %v588 = vadd.f32 %v584, 1e-05
        %v589 = vadd.f32 %v585, 1e-05
        %v590 = vrsqrt.pop %v588
        %v591 = vmul.f32 %v590, %v588
        %v592 = vmul.f32 %v591, %v590
        %v593 = vmul.f32 0.5, %v592
        %v594 = vsub.f32 1.5, %v593
        %v595 = vmul.f32 %v590, %v594
        %vm596 = vweird.f32 %v588
        %vm597 = vweird.f32 %v590
        %vm598 = vmor %vm596, %vm597
        %v599 = vsel %vm598, %v590, %v595
        %v600 = vrsqrt.pop %v589
        %v601 = vmul.f32 %v600, %v589
        %v602 = vmul.f32 %v601, %v600
        %v603 = vmul.f32 0.5, %v602
        %v604 = vsub.f32 1.5, %v603
        %v605 = vmul.f32 %v600, %v604
        %vm606 = vweird.f32 %v589
        %vm607 = vweird.f32 %v600
        %vm608 = vmor %vm606, %vm607
        %v609 = vsel %vm608, %v600, %v605
        %v610 = vmul.f32 %v574, %v599
        %v611 = vmul.f32 %v575, %v609
        %v613 = vperm.slane %v586, 0
        %v615 = vmul.f32 %v610, %v613
        %v616 = vmul.f32 %v611, %v613
        %v618 = vperm.slane %v587, 0
        %v620 = vadd.f32 %v615, %v618
        %v621 = vadd.f32 %v616, %v618
        %v622 = vld [vmem:[#allocation7] sm:$0xff]
        %v623 = vld [vmem:[#allocation7 + $0x8] sm:$0xff]
        %v624 = vld [vmem:[#allocation7 + $0x10] sm:$0xff]
        %v625 = vld [vmem:[#allocation7 + $0x18] sm:$0xff]
        %v627 = vsel %vm452, %v560, 0
        %v630 = vsel %vm452, %v561, 0
        %v633 = vsel %vm452, %v562, 0
        %v636 = vsel %vm452, %v563, 0
        %638 = vmatpush.msra.mxu0 0.0
        %639 = vmatpush.msra.mxu0 0.0
        %640 = vmatpush.msra.mxu0 0.0
        %641 = vmatpush.msra.mxu0 0.0
        %642 = vmatpush.msra.mxu0 0.0
        %643 = vmatpush.msra.mxu0 0.0
        %644 = vmatpush.msra.mxu0 0.0
        %645 = vmatpush.msra.mxu0 0.0
        %646 = vmatpush.msra.mxu0 0.0
        %647 = vmatpush.msra.mxu0 0.0
        %648 = vmatpush.msra.mxu0 0.0
        %649 = vmatpush.msra.mxu0 0.0
        %650 = vmatpush.msra.mxu0 %v625
        %651 = vmatpush.msra.mxu0 %v624
        %652 = vmatpush.msra.mxu0 %v623
        %653 = vmatpush.msra.mxu0 %v622
        %654 = vmatmul.f32.gmra.mxu0 %v627
        %v655 = vpop.f32.mrf.mxu0
        %v656 = vadd.f32 0.0, %v655
        %657 = vmatmul.f32.gmra.mxu0 %v630
        %v658 = vpop.f32.mrf.mxu0
        %v659 = vadd.f32 0.0, %v658
        %660 = vmatmul.f32.gmra.mxu0 %v633
        %v661 = vpop.f32.mrf.mxu0
        %v662 = vadd.f32 0.0, %v661
        %663 = vmatmul.f32.gmra.mxu0 %v636
        %v664 = vpop.f32.mrf.mxu0
        %v665 = vadd.f32 0.0, %v664
        %666 = vdwg.mxu0
        %v667 = vld [vmem:[#allocation8] sm:$0xff]
        %v668 = vld [vmem:[#allocation8 + $0x8] sm:$0xff]
        %v669 = vld [vmem:[#allocation8 + $0x10] sm:$0xff]
        %v670 = vld [vmem:[#allocation8 + $0x18] sm:$0xff]
        %v672 = vsel %vm452, %v620, 0
        %v675 = vsel %vm452, %v621, 0
        %677 = vmatpush.msra.mxu0 0.0
        %678 = vmatpush.msra.mxu0 0.0
        %679 = vmatpush.msra.mxu0 0.0
        %680 = vmatpush.msra.mxu0 0.0
        %681 = vmatpush.msra.mxu0 0.0
        %682 = vmatpush.msra.mxu0 0.0
        %683 = vmatpush.msra.mxu0 0.0
        %684 = vmatpush.msra.mxu0 0.0
        %685 = vmatpush.msra.mxu0 0.0
        %686 = vmatpush.msra.mxu0 0.0
        %687 = vmatpush.msra.mxu0 0.0
        %688 = vmatpush.msra.mxu0 0.0
        %689 = vmatpush.msra.mxu0 %v670
        %690 = vmatpush.msra.mxu0 %v669
        %691 = vmatpush.msra.mxu0 %v668
        %692 = vmatpush.msra.mxu0 %v667
        %693 = vmatmul.f32.gmra.mxu0 %v672
        %v694 = vpop.f32.mrf.mxu0
        %v695 = vadd.f32 0.0, %v694
        %696 = vmatmul.f32.gmra.mxu0 %v675
        %v697 = vpop.f32.mrf.mxu0
        %v698 = vadd.f32 0.0, %v697
        %699 = vdwg.mxu0
        %702 = vrot.lane.b32.xlu0 %v695, 120
        %v703 = vpop.permute.xlu0 %702
        %704 = vrot.lane.b32.xlu0 %v698, 120
        %v705 = vpop.permute.xlu0 %704
        %708 = vrot.lane.b32.xlu0 %v695, 112
        %v709 = vpop.permute.xlu0 %708
        %710 = vrot.lane.b32.xlu0 %v698, 112
        %v711 = vpop.permute.xlu0 %710
        %714 = vrot.lane.b32.xlu0 %v695, 104
        %v715 = vpop.permute.xlu0 %714
        %716 = vrot.lane.b32.xlu0 %v698, 104
        %v717 = vpop.permute.xlu0 %716
        %v720 = vrot.slane %v709, 4
        %vm721 = vcmask 1047556
        %v722 = vsel %vm721, %v720, %v695
        %v723 = vrot.slane %v695, 4
        %v724 = vsel %vm721, %v709, %v723
        %v726 = vunpack.c.l.s4 1983009808
        %v727 = vunpack.c.0.s8 %v726
        %v728 = vperm.slane %v722, %v727
        %v730 = vunpack.c.l.s4 1983009808
        %v731 = vunpack.c.0.s8 %v730
        %v732 = vperm.slane %v724, %v731
        %v733 = vrot.slane %v715, 4
        %v734 = vsel %vm721, %v733, %v703
        %v735 = vrot.slane %v703, 4
        %v736 = vsel %vm721, %v715, %v735
        %v738 = vunpack.c.l.s4 1983009808
        %v739 = vunpack.c.0.s8 %v738
        %v740 = vperm.slane %v734, %v739
        %v742 = vunpack.c.l.s4 1983009808
        %v743 = vunpack.c.0.s8 %v742
        %v744 = vperm.slane %v736, %v743
        %v745 = vrot.slane %v740, 4
        %v746 = vsel %vm721, %v745, %v728
        %v747 = vrot.slane %v728, 4
        %v748 = vsel %vm721, %v740, %v747
        %v750 = vunpack.c.l.s4 1934713408
        %v751 = vunpack.c.0.s8 %v750
        %v752 = vperm.slane %v746, %v751
        %v754 = vunpack.c.l.s4 1934713408
        %v755 = vunpack.c.0.s8 %v754
        %v756 = vperm.slane %v748, %v755
        %v757 = vrot.slane %v744, 4
        %v758 = vsel %vm721, %v757, %v732
        %v759 = vrot.slane %v732, 4
        %v760 = vsel %vm721, %v744, %v759
        %v762 = vunpack.c.l.s4 1934713408
        %v763 = vunpack.c.0.s8 %v762
        %v764 = vperm.slane %v758, %v763
        %v766 = vunpack.c.l.s4 1934713408
        %v767 = vunpack.c.0.s8 %v766
        %v768 = vperm.slane %v760, %v767
        %v769 = vrot.slane %v752, 4
        %v770 = vsel %vm721, 0.0, %v769
        %v771 = vrot.slane %v756, 4
        %v772 = vsel %vm721, 0.0, %v771
        %v773 = vrot.slane %v764, 4
        %v774 = vsel %vm721, 0.0, %v773
        %v775 = vrot.slane %v768, 4
        %v776 = vsel %vm721, 0.0, %v775
        %v777 = vrot.slane %v711, 4
        %v778 = vsel %vm721, %v777, %v698
        %v779 = vrot.slane %v698, 4
        %v780 = vsel %vm721, %v711, %v779
        %v782 = vunpack.c.l.s4 1983009808
        %v783 = vunpack.c.0.s8 %v782
        %v784 = vperm.slane %v778, %v783
        %v786 = vunpack.c.l.s4 1983009808
        %v787 = vunpack.c.0.s8 %v786
        %v788 = vperm.slane %v780, %v787
        %v789 = vrot.slane %v717, 4
        %v790 = vsel %vm721, %v789, %v705
        %v791 = vrot.slane %v705, 4
        %v792 = vsel %vm721, %v717, %v791
        %v794 = vunpack.c.l.s4 1983009808
        %v795 = vunpack.c.0.s8 %v794
        %v796 = vperm.slane %v790, %v795
        %v798 = vunpack.c.l.s4 1983009808
        %v799 = vunpack.c.0.s8 %v798
        %v800 = vperm.slane %v792, %v799
        %v801 = vrot.slane %v796, 4
        %v802 = vsel %vm721, %v801, %v784
        %v803 = vrot.slane %v784, 4
        %v804 = vsel %vm721, %v796, %v803
        %v806 = vunpack.c.l.s4 1934713408
        %v807 = vunpack.c.0.s8 %v806
        %v808 = vperm.slane %v802, %v807
        %v810 = vunpack.c.l.s4 1934713408
        %v811 = vunpack.c.0.s8 %v810
        %v812 = vperm.slane %v804, %v811
        %v813 = vrot.slane %v800, 4
        %v814 = vsel %vm721, %v813, %v788
        %v815 = vrot.slane %v788, 4
        %v816 = vsel %vm721, %v800, %v815
        %v818 = vunpack.c.l.s4 1934713408
        %v819 = vunpack.c.0.s8 %v818
        %v820 = vperm.slane %v814, %v819
        %v822 = vunpack.c.l.s4 1934713408
        %v823 = vunpack.c.0.s8 %v822
        %v824 = vperm.slane %v816, %v823
        %v825 = vrot.slane %v808, 4
        %v826 = vsel %vm721, 0.0, %v825
        %v827 = vrot.slane %v812, 4
        %v828 = vsel %vm721, 0.0, %v827
        %v829 = vrot.slane %v820, 4
        %v830 = vsel %vm721, 0.0, %v829
        %v831 = vrot.slane %v824, 4
        %v832 = vsel %vm721, 0.0, %v831
        %v833 = vsel %vm721, %v771, %v752
        %v835 = vunpack.c.l.s4 1983009808
        %v836 = vunpack.c.0.s8 %v835
        %v837 = vperm.slane %v833, %v836
        %v838 = vrot.slane %v772, 4
        %v839 = vsel %vm721, %v838, %v770
        %v841 = vunpack.c.l.s4 1983009808
        %v842 = vunpack.c.0.s8 %v841
        %v843 = vperm.slane %v839, %v842
        %v844 = vsel %vm721, %v775, %v764
        %v846 = vunpack.c.l.s4 1983009808
        %v847 = vunpack.c.0.s8 %v846
        %v848 = vperm.slane %v844, %v847
        %v849 = vrot.slane %v776, 4
        %v850 = vsel %vm721, %v849, %v774
        %v852 = vunpack.c.l.s4 1983009808
        %v853 = vunpack.c.0.s8 %v852
        %v854 = vperm.slane %v850, %v853
        %v855 = vrot.slane %v843, 4
        %v856 = vsel %vm721, %v855, %v837
        %v857 = vrot.slane %v837, 4
        %v858 = vsel %vm721, %v843, %v857
        %v860 = vunpack.c.l.s4 1934713408
        %v861 = vunpack.c.0.s8 %v860
        %v862 = vperm.slane %v856, %v861
        %v864 = vunpack.c.l.s4 1934713408
        %v865 = vunpack.c.0.s8 %v864
        %v866 = vperm.slane %v858, %v865
        %v867 = vrot.slane %v854, 4
        %v868 = vsel %vm721, %v867, %v848
        %v869 = vrot.slane %v848, 4
        %v870 = vsel %vm721, %v854, %v869
        %v872 = vunpack.c.l.s4 1934713408
        %v873 = vunpack.c.0.s8 %v872
        %v874 = vperm.slane %v868, %v873
        %v876 = vunpack.c.l.s4 1934713408
        %v877 = vunpack.c.0.s8 %v876
        %v878 = vperm.slane %v870, %v877
        %v879 = vrot.slane %v874, 4
        %v880 = vsel %vm721, %v879, %v862
        %v881 = vrot.slane %v862, 4
        %v882 = vsel %vm721, %v874, %v881
        %v883 = vrot.slane %v878, 4
        %v884 = vsel %vm721, %v883, %v866
        %v885 = vrot.slane %v866, 4
        %v886 = vsel %vm721, %v878, %v885
        %v887 = vsel %vm721, %v827, %v808
        %v889 = vunpack.c.l.s4 1983009808
        %v890 = vunpack.c.0.s8 %v889
        %v891 = vperm.slane %v887, %v890
        %v892 = vrot.slane %v828, 4
        %v893 = vsel %vm721, %v892, %v826
        %v895 = vunpack.c.l.s4 1983009808
        %v896 = vunpack.c.0.s8 %v895
        %v897 = vperm.slane %v893, %v896
        %v898 = vsel %vm721, %v831, %v820
        %v900 = vunpack.c.l.s4 1983009808
        %v901 = vunpack.c.0.s8 %v900
        %v902 = vperm.slane %v898, %v901
        %v903 = vrot.slane %v832, 4
        %v904 = vsel %vm721, %v903, %v830
        %v906 = vunpack.c.l.s4 1983009808
        %v907 = vunpack.c.0.s8 %v906
        %v908 = vperm.slane %v904, %v907
        %v909 = vrot.slane %v897, 4
        %v910 = vsel %vm721, %v909, %v891
        %v911 = vrot.slane %v891, 4
        %v912 = vsel %vm721, %v897, %v911
        %v914 = vunpack.c.l.s4 1934713408
        %v915 = vunpack.c.0.s8 %v914
        %v916 = vperm.slane %v910, %v915
        %v918 = vunpack.c.l.s4 1934713408
        %v919 = vunpack.c.0.s8 %v918
        %v920 = vperm.slane %v912, %v919
        %v921 = vrot.slane %v908, 4
        %v922 = vsel %vm721, %v921, %v902
        %v923 = vrot.slane %v902, 4
        %v924 = vsel %vm721, %v908, %v923
        %v926 = vunpack.c.l.s4 1934713408
        %v927 = vunpack.c.0.s8 %v926
        %v928 = vperm.slane %v922, %v927
        %v930 = vunpack.c.l.s4 1934713408
        %v931 = vunpack.c.0.s8 %v930
        %v932 = vperm.slane %v924, %v931
        %v933 = vrot.slane %v928, 4
        %v934 = vsel %vm721, %v933, %v916
        %v935 = vrot.slane %v916, 4
        %v936 = vsel %vm721, %v928, %v935
        %v937 = vrot.slane %v932, 4
        %v938 = vsel %vm721, %v937, %v920
        %v939 = vrot.slane %v920, 4
        %v940 = vsel %vm721, %v932, %v939
        %945 = vrot.lane.b32.xlu0 %v656, 120
        %v946 = vpop.permute.xlu0 %945
        %947 = vrot.lane.b32.xlu0 %v659, 120
        %v948 = vpop.permute.xlu0 %947
        %949 = vrot.lane.b32.xlu0 %v662, 120
        %v950 = vpop.permute.xlu0 %949
        %951 = vrot.lane.b32.xlu0 %v665, 120
        %v952 = vpop.permute.xlu0 %951
        %957 = vrot.lane.b32.xlu0 %v656, 112
        %v958 = vpop.permute.xlu0 %957
        %959 = vrot.lane.b32.xlu0 %v659, 112
        %v960 = vpop.permute.xlu0 %959
        %961 = vrot.lane.b32.xlu0 %v662, 112
        %v962 = vpop.permute.xlu0 %961
        %963 = vrot.lane.b32.xlu0 %v665, 112
        %v964 = vpop.permute.xlu0 %963
        %969 = vrot.lane.b32.xlu0 %v656, 104
        %v970 = vpop.permute.xlu0 %969
        %971 = vrot.lane.b32.xlu0 %v659, 104
        %v972 = vpop.permute.xlu0 %971
        %973 = vrot.lane.b32.xlu0 %v662, 104
        %v974 = vpop.permute.xlu0 %973
        %975 = vrot.lane.b32.xlu0 %v665, 104
        %v976 = vpop.permute.xlu0 %975
        %v981 = vrot.slane %v958, 4
        %v982 = vsel %vm721, %v981, %v656
        %v983 = vrot.slane %v656, 4
        %v984 = vsel %vm721, %v958, %v983
        %v986 = vunpack.c.l.s4 1983009808
        %v987 = vunpack.c.0.s8 %v986
        %v988 = vperm.slane %v982, %v987
        %v990 = vunpack.c.l.s4 1983009808
        %v991 = vunpack.c.0.s8 %v990
        %v992 = vperm.slane %v984, %v991
        %v993 = vrot.slane %v970, 4
        %v994 = vsel %vm721, %v993, %v946
        %v995 = vrot.slane %v946, 4
        %v996 = vsel %vm721, %v970, %v995
        %v998 = vunpack.c.l.s4 1983009808
        %v999 = vunpack.c.0.s8 %v998
        %v1000 = vperm.slane %v994, %v999
        %v1002 = vunpack.c.l.s4 1983009808
        %v1003 = vunpack.c.0.s8 %v1002
        %v1004 = vperm.slane %v996, %v1003
        %v1005 = vrot.slane %v1000, 4
        %v1006 = vsel %vm721, %v1005, %v988
        %v1007 = vrot.slane %v988, 4
        %v1008 = vsel %vm721, %v1000, %v1007
        %v1010 = vunpack.c.l.s4 1934713408
        %v1011 = vunpack.c.0.s8 %v1010
        %v1012 = vperm.slane %v1006, %v1011
        %v1014 = vunpack.c.l.s4 1934713408
        %v1015 = vunpack.c.0.s8 %v1014
        %v1016 = vperm.slane %v1008, %v1015
        %v1017 = vrot.slane %v1004, 4
        %v1018 = vsel %vm721, %v1017, %v992
        %v1019 = vrot.slane %v992, 4
        %v1020 = vsel %vm721, %v1004, %v1019
        %v1022 = vunpack.c.l.s4 1934713408
        %v1023 = vunpack.c.0.s8 %v1022
        %v1024 = vperm.slane %v1018, %v1023
        %v1026 = vunpack.c.l.s4 1934713408
        %v1027 = vunpack.c.0.s8 %v1026
        %v1028 = vperm.slane %v1020, %v1027
        %v1029 = vrot.slane %v1012, 4
        %v1030 = vsel %vm721, 0.0, %v1029
        %v1031 = vrot.slane %v1016, 4
        %v1032 = vsel %vm721, 0.0, %v1031
        %v1033 = vrot.slane %v1024, 4
        %v1034 = vsel %vm721, 0.0, %v1033
        %v1035 = vrot.slane %v1028, 4
        %v1036 = vsel %vm721, 0.0, %v1035
        %v1037 = vrot.slane %v960, 4
        %v1038 = vsel %vm721, %v1037, %v659
        %v1039 = vrot.slane %v659, 4
        %v1040 = vsel %vm721, %v960, %v1039
        %v1042 = vunpack.c.l.s4 1983009808
        %v1043 = vunpack.c.0.s8 %v1042
        %v1044 = vperm.slane %v1038, %v1043
        %v1046 = vunpack.c.l.s4 1983009808
        %v1047 = vunpack.c.0.s8 %v1046
        %v1048 = vperm.slane %v1040, %v1047
        %v1049 = vrot.slane %v972, 4
        %v1050 = vsel %vm721, %v1049, %v948
        %v1051 = vrot.slane %v948, 4
        %v1052 = vsel %vm721, %v972, %v1051
        %v1054 = vunpack.c.l.s4 1983009808
        %v1055 = vunpack.c.0.s8 %v1054
        %v1056 = vperm.slane %v1050, %v1055
        %v1058 = vunpack.c.l.s4 1983009808
        %v1059 = vunpack.c.0.s8 %v1058
        %v1060 = vperm.slane %v1052, %v1059
        %v1061 = vrot.slane %v1056, 4
        %v1062 = vsel %vm721, %v1061, %v1044
        %v1063 = vrot.slane %v1044, 4
        %v1064 = vsel %vm721, %v1056, %v1063
        %v1066 = vunpack.c.l.s4 1934713408
        %v1067 = vunpack.c.0.s8 %v1066
        %v1068 = vperm.slane %v1062, %v1067
        %v1070 = vunpack.c.l.s4 1934713408
        %v1071 = vunpack.c.0.s8 %v1070
        %v1072 = vperm.slane %v1064, %v1071
        %v1073 = vrot.slane %v1060, 4
        %v1074 = vsel %vm721, %v1073, %v1048
        %v1075 = vrot.slane %v1048, 4
        %v1076 = vsel %vm721, %v1060, %v1075
        %v1078 = vunpack.c.l.s4 1934713408
        %v1079 = vunpack.c.0.s8 %v1078
        %v1080 = vperm.slane %v1074, %v1079
        %v1082 = vunpack.c.l.s4 1934713408
        %v1083 = vunpack.c.0.s8 %v1082
        %v1084 = vperm.slane %v1076, %v1083
        %v1085 = vrot.slane %v1068, 4
        %v1086 = vsel %vm721, 0.0, %v1085
        %v1087 = vrot.slane %v1072, 4
        %v1088 = vsel %vm721, 0.0, %v1087
        %v1089 = vrot.slane %v1080, 4
        %v1090 = vsel %vm721, 0.0, %v1089
        %v1091 = vrot.slane %v1084, 4
        %v1092 = vsel %vm721, 0.0, %v1091
        %v1093 = vrot.slane %v962, 4
        %v1094 = vsel %vm721, %v1093, %v662
        %v1095 = vrot.slane %v662, 4
        %v1096 = vsel %vm721, %v962, %v1095
        %v1098 = vunpack.c.l.s4 1983009808
        %v1099 = vunpack.c.0.s8 %v1098
        %v1100 = vperm.slane %v1094, %v1099
        %v1102 = vunpack.c.l.s4 1983009808
        %v1103 = vunpack.c.0.s8 %v1102
        %v1104 = vperm.slane %v1096, %v1103
        %v1105 = vrot.slane %v974, 4
        %v1106 = vsel %vm721, %v1105, %v950
        %v1107 = vrot.slane %v950, 4
        %v1108 = vsel %vm721, %v974, %v1107
        %v1110 = vunpack.c.l.s4 1983009808
        %v1111 = vunpack.c.0.s8 %v1110
        %v1112 = vperm.slane %v1106, %v1111
        %v1114 = vunpack.c.l.s4 1983009808
        %v1115 = vunpack.c.0.s8 %v1114
        %v1116 = vperm.slane %v1108, %v1115
        %v1117 = vrot.slane %v1112, 4
        %v1118 = vsel %vm721, %v1117, %v1100
        %v1119 = vrot.slane %v1100, 4
        %v1120 = vsel %vm721, %v1112, %v1119
        %v1122 = vunpack.c.l.s4 1934713408
        %v1123 = vunpack.c.0.s8 %v1122
        %v1124 = vperm.slane %v1118, %v1123
        %v1126 = vunpack.c.l.s4 1934713408
        %v1127 = vunpack.c.0.s8 %v1126
        %v1128 = vperm.slane %v1120, %v1127
        %v1129 = vrot.slane %v1116, 4
        %v1130 = vsel %vm721, %v1129, %v1104
        %v1131 = vrot.slane %v1104, 4
        %v1132 = vsel %vm721, %v1116, %v1131
        %v1134 = vunpack.c.l.s4 1934713408
        %v1135 = vunpack.c.0.s8 %v1134
        %v1136 = vperm.slane %v1130, %v1135
        %v1138 = vunpack.c.l.s4 1934713408
        %v1139 = vunpack.c.0.s8 %v1138
        %v1140 = vperm.slane %v1132, %v1139
        %v1141 = vrot.slane %v1124, 4
        %v1142 = vsel %vm721, 0.0, %v1141
        %v1143 = vrot.slane %v1128, 4
        %v1144 = vsel %vm721, 0.0, %v1143
        %v1145 = vrot.slane %v1136, 4
        %v1146 = vsel %vm721, 0.0, %v1145
        %v1147 = vrot.slane %v1140, 4
        %v1148 = vsel %vm721, 0.0, %v1147
        %v1149 = vrot.slane %v964, 4
        %v1150 = vsel %vm721, %v1149, %v665
        %v1151 = vrot.slane %v665, 4
        %v1152 = vsel %vm721, %v964, %v1151
        %v1154 = vunpack.c.l.s4 1983009808
        %v1155 = vunpack.c.0.s8 %v1154
        %v1156 = vperm.slane %v1150, %v1155
        %v1158 = vunpack.c.l.s4 1983009808
        %v1159 = vunpack.c.0.s8 %v1158
        %v1160 = vperm.slane %v1152, %v1159
        %v1161 = vrot.slane %v976, 4
        %v1162 = vsel %vm721, %v1161, %v952
        %v1163 = vrot.slane %v952, 4
        %v1164 = vsel %vm721, %v976, %v1163
        %v1166 = vunpack.c.l.s4 1983009808
        %v1167 = vunpack.c.0.s8 %v1166
        %v1168 = vperm.slane %v1162, %v1167
        %v1170 = vunpack.c.l.s4 1983009808
        %v1171 = vunpack.c.0.s8 %v1170
        %v1172 = vperm.slane %v1164, %v1171
        %v1173 = vrot.slane %v1168, 4
        %v1174 = vsel %vm721, %v1173, %v1156
        %v1175 = vrot.slane %v1156, 4
        %v1176 = vsel %vm721, %v1168, %v1175
        %v1178 = vunpack.c.l.s4 1934713408
        %v1179 = vunpack.c.0.s8 %v1178
        %v1180 = vperm.slane %v1174, %v1179
        %v1182 = vunpack.c.l.s4 1934713408
        %v1183 = vunpack.c.0.s8 %v1182
        %v1184 = vperm.slane %v1176, %v1183
        %v1185 = vrot.slane %v1172, 4
        %v1186 = vsel %vm721, %v1185, %v1160
        %v1187 = vrot.slane %v1160, 4
        %v1188 = vsel %vm721, %v1172, %v1187
        %v1190 = vunpack.c.l.s4 1934713408
        %v1191 = vunpack.c.0.s8 %v1190
        %v1192 = vperm.slane %v1186, %v1191
        %v1194 = vunpack.c.l.s4 1934713408
        %v1195 = vunpack.c.0.s8 %v1194
        %v1196 = vperm.slane %v1188, %v1195
        %v1197 = vrot.slane %v1180, 4
        %v1198 = vsel %vm721, 0.0, %v1197
        %v1199 = vrot.slane %v1184, 4
        %v1200 = vsel %vm721, 0.0, %v1199
        %v1201 = vrot.slane %v1192, 4
        %v1202 = vsel %vm721, 0.0, %v1201
        %v1203 = vrot.slane %v1196, 4
        %v1204 = vsel %vm721, 0.0, %v1203
        %v1205 = vsel %vm721, %v1031, %v1012
        %v1207 = vunpack.c.l.s4 1983009808
        %v1208 = vunpack.c.0.s8 %v1207
        %v1209 = vperm.slane %v1205, %v1208
        %v1210 = vrot.slane %v1032, 4
        %v1211 = vsel %vm721, %v1210, %v1030
        %v1213 = vunpack.c.l.s4 1983009808
        %v1214 = vunpack.c.0.s8 %v1213
        %v1215 = vperm.slane %v1211, %v1214
        %v1216 = vsel %vm721, %v1035, %v1024
        %v1218 = vunpack.c.l.s4 1983009808
        %v1219 = vunpack.c.0.s8 %v1218
        %v1220 = vperm.slane %v1216, %v1219
        %v1221 = vrot.slane %v1036, 4
        %v1222 = vsel %vm721, %v1221, %v1034
        %v1224 = vunpack.c.l.s4 1983009808
        %v1225 = vunpack.c.0.s8 %v1224
        %v1226 = vperm.slane %v1222, %v1225
        %v1227 = vrot.slane %v1215, 4
        %v1228 = vsel %vm721, %v1227, %v1209
        %v1229 = vrot.slane %v1209, 4
        %v1230 = vsel %vm721, %v1215, %v1229
        %v1232 = vunpack.c.l.s4 1934713408
        %v1233 = vunpack.c.0.s8 %v1232
        %v1234 = vperm.slane %v1228, %v1233
        %v1236 = vunpack.c.l.s4 1934713408
        %v1237 = vunpack.c.0.s8 %v1236
        %v1238 = vperm.slane %v1230, %v1237
        %v1239 = vrot.slane %v1226, 4
        %v1240 = vsel %vm721, %v1239, %v1220
        %v1241 = vrot.slane %v1220, 4
        %v1242 = vsel %vm721, %v1226, %v1241
        %v1244 = vunpack.c.l.s4 1934713408
        %v1245 = vunpack.c.0.s8 %v1244
        %v1246 = vperm.slane %v1240, %v1245
        %v1248 = vunpack.c.l.s4 1934713408
        %v1249 = vunpack.c.0.s8 %v1248
        %v1250 = vperm.slane %v1242, %v1249
        %v1251 = vrot.slane %v1246, 4
        %v1252 = vsel %vm721, %v1251, %v1234
        %v1253 = vrot.slane %v1234, 4
        %v1254 = vsel %vm721, %v1246, %v1253
        %v1255 = vrot.slane %v1250, 4
        %v1256 = vsel %vm721, %v1255, %v1238
        %v1257 = vrot.slane %v1238, 4
        %v1258 = vsel %vm721, %v1250, %v1257
        %v1259 = vsel %vm721, %v1087, %v1068
        %v1261 = vunpack.c.l.s4 1983009808
        %v1262 = vunpack.c.0.s8 %v1261
        %v1263 = vperm.slane %v1259, %v1262
        %v1264 = vrot.slane %v1088, 4
        %v1265 = vsel %vm721, %v1264, %v1086
        %v1267 = vunpack.c.l.s4 1983009808
        %v1268 = vunpack.c.0.s8 %v1267
        %v1269 = vperm.slane %v1265, %v1268
        %v1270 = vsel %vm721, %v1091, %v1080
        %v1272 = vunpack.c.l.s4 1983009808
        %v1273 = vunpack.c.0.s8 %v1272
        %v1274 = vperm.slane %v1270, %v1273
        %v1275 = vrot.slane %v1092, 4
        %v1276 = vsel %vm721, %v1275, %v1090
        %v1278 = vunpack.c.l.s4 1983009808
        %v1279 = vunpack.c.0.s8 %v1278
        %v1280 = vperm.slane %v1276, %v1279
        %v1281 = vrot.slane %v1269, 4
        %v1282 = vsel %vm721, %v1281, %v1263
        %v1283 = vrot.slane %v1263, 4
        %v1284 = vsel %vm721, %v1269, %v1283
        %v1286 = vunpack.c.l.s4 1934713408
        %v1287 = vunpack.c.0.s8 %v1286
        %v1288 = vperm.slane %v1282, %v1287
        %v1290 = vunpack.c.l.s4 1934713408
        %v1291 = vunpack.c.0.s8 %v1290
        %v1292 = vperm.slane %v1284, %v1291
        %v1293 = vrot.slane %v1280, 4
        %v1294 = vsel %vm721, %v1293, %v1274
        %v1295 = vrot.slane %v1274, 4
        %v1296 = vsel %vm721, %v1280, %v1295
        %v1298 = vunpack.c.l.s4 1934713408
        %v1299 = vunpack.c.0.s8 %v1298
        %v1300 = vperm.slane %v1294, %v1299
        %v1302 = vunpack.c.l.s4 1934713408
        %v1303 = vunpack.c.0.s8 %v1302
        %v1304 = vperm.slane %v1296, %v1303
        %v1305 = vrot.slane %v1300, 4
        %v1306 = vsel %vm721, %v1305, %v1288
        %v1307 = vrot.slane %v1288, 4
        %v1308 = vsel %vm721, %v1300, %v1307
        %v1309 = vrot.slane %v1304, 4
        %v1310 = vsel %vm721, %v1309, %v1292
        %v1311 = vrot.slane %v1292, 4
        %v1312 = vsel %vm721, %v1304, %v1311
        %v1313 = vsel %vm721, %v1143, %v1124
        %v1315 = vunpack.c.l.s4 1983009808
        %v1316 = vunpack.c.0.s8 %v1315
        %v1317 = vperm.slane %v1313, %v1316
        %v1318 = vrot.slane %v1144, 4
        %v1319 = vsel %vm721, %v1318, %v1142
        %v1321 = vunpack.c.l.s4 1983009808
        %v1322 = vunpack.c.0.s8 %v1321
        %v1323 = vperm.slane %v1319, %v1322
        %v1324 = vsel %vm721, %v1147, %v1136
        %v1326 = vunpack.c.l.s4 1983009808
        %v1327 = vunpack.c.0.s8 %v1326
        %v1328 = vperm.slane %v1324, %v1327
        %v1329 = vrot.slane %v1148, 4
        %v1330 = vsel %vm721, %v1329, %v1146
        %v1332 = vunpack.c.l.s4 1983009808
        %v1333 = vunpack.c.0.s8 %v1332
        %v1334 = vperm.slane %v1330, %v1333
        %v1335 = vrot.slane %v1323, 4
        %v1336 = vsel %vm721, %v1335, %v1317
        %v1337 = vrot.slane %v1317, 4
        %v1338 = vsel %vm721, %v1323, %v1337
        %v1340 = vunpack.c.l.s4 1934713408
        %v1341 = vunpack.c.0.s8 %v1340
        %v1342 = vperm.slane %v1336, %v1341
        %v1344 = vunpack.c.l.s4 1934713408
        %v1345 = vunpack.c.0.s8 %v1344
        %v1346 = vperm.slane %v1338, %v1345
        %v1347 = vrot.slane %v1334, 4
        %v1348 = vsel %vm721, %v1347, %v1328
        %v1349 = vrot.slane %v1328, 4
        %v1350 = vsel %vm721, %v1334, %v1349
        %v1352 = vunpack.c.l.s4 1934713408
        %v1353 = vunpack.c.0.s8 %v1352
        %v1354 = vperm.slane %v1348, %v1353
        %v1356 = vunpack.c.l.s4 1934713408
        %v1357 = vunpack.c.0.s8 %v1356
        %v1358 = vperm.slane %v1350, %v1357
        %v1359 = vrot.slane %v1354, 4
        %v1360 = vsel %vm721, %v1359, %v1342
        %v1361 = vrot.slane %v1342, 4
        %v1362 = vsel %vm721, %v1354, %v1361
        %v1363 = vrot.slane %v1358, 4
        %v1364 = vsel %vm721, %v1363, %v1346
        %v1365 = vrot.slane %v1346, 4
        %v1366 = vsel %vm721, %v1358, %v1365
        %v1367 = vsel %vm721, %v1199, %v1180
        %v1369 = vunpack.c.l.s4 1983009808
        %v1370 = vunpack.c.0.s8 %v1369
        %v1371 = vperm.slane %v1367, %v1370
        %v1372 = vrot.slane %v1200, 4
        %v1373 = vsel %vm721, %v1372, %v1198
        %v1375 = vunpack.c.l.s4 1983009808
        %v1376 = vunpack.c.0.s8 %v1375
        %v1377 = vperm.slane %v1373, %v1376
        %v1378 = vsel %vm721, %v1203, %v1192
        %v1380 = vunpack.c.l.s4 1983009808
        %v1381 = vunpack.c.0.s8 %v1380
        %v1382 = vperm.slane %v1378, %v1381
        %v1383 = vrot.slane %v1204, 4
        %v1384 = vsel %vm721, %v1383, %v1202
        %v1386 = vunpack.c.l.s4 1983009808
        %v1387 = vunpack.c.0.s8 %v1386
        %v1388 = vperm.slane %v1384, %v1387
        %v1389 = vrot.slane %v1377, 4
        %v1390 = vsel %vm721, %v1389, %v1371
        %v1391 = vrot.slane %v1371, 4
        %v1392 = vsel %vm721, %v1377, %v1391
        %v1394 = vunpack.c.l.s4 1934713408
        %v1395 = vunpack.c.0.s8 %v1394
        %v1396 = vperm.slane %v1390, %v1395
        %v1398 = vunpack.c.l.s4 1934713408
        %v1399 = vunpack.c.0.s8 %v1398
        %v1400 = vperm.slane %v1392, %v1399
        %v1401 = vrot.slane %v1388, 4
        %v1402 = vsel %vm721, %v1401, %v1382
        %v1403 = vrot.slane %v1382, 4
        %v1404 = vsel %vm721, %v1388, %v1403
        %v1406 = vunpack.c.l.s4 1934713408
        %v1407 = vunpack.c.0.s8 %v1406
        %v1408 = vperm.slane %v1402, %v1407
        %v1410 = vunpack.c.l.s4 1934713408
        %v1411 = vunpack.c.0.s8 %v1410
        %v1412 = vperm.slane %v1404, %v1411
        %v1413 = vrot.slane %v1408, 4
        %v1414 = vsel %vm721, %v1413, %v1396
        %v1415 = vrot.slane %v1396, 4
        %v1416 = vsel %vm721, %v1408, %v1415
        %v1417 = vrot.slane %v1412, 4
        %v1418 = vsel %vm721, %v1417, %v1400
        %v1419 = vrot.slane %v1400, 4
        %v1420 = vsel %vm721, %v1412, %v1419
        %1421 = vrot.lane.b32.xlu0 %v695, 96
        %v1422 = vpop.permute.xlu0 %1421
        %1423 = vrot.lane.b32.xlu0 %v698, 96
        %v1424 = vpop.permute.xlu0 %1423
        %1425 = vrot.lane.b32.xlu0 %v703, 96
        %v1426 = vpop.permute.xlu0 %1425
        %1427 = vrot.lane.b32.xlu0 %v705, 96
        %v1428 = vpop.permute.xlu0 %1427
        %1429 = vrot.lane.b32.xlu0 %v709, 96
        %v1430 = vpop.permute.xlu0 %1429
        %1431 = vrot.lane.b32.xlu0 %v711, 96
        %v1432 = vpop.permute.xlu0 %1431
        %1433 = vrot.lane.b32.xlu0 %v715, 96
        %v1434 = vpop.permute.xlu0 %1433
        %1435 = vrot.lane.b32.xlu0 %v717, 96
        %v1436 = vpop.permute.xlu0 %1435
        %v1445 = vrot.slane %v1430, 4
        %v1446 = vsel %vm721, %v1445, %v1422
        %v1447 = vrot.slane %v1422, 4
        %v1448 = vsel %vm721, %v1430, %v1447
        %v1450 = vunpack.c.l.s4 1983009808
        %v1451 = vunpack.c.0.s8 %v1450
        %v1452 = vperm.slane %v1446, %v1451
        %v1454 = vunpack.c.l.s4 1983009808
        %v1455 = vunpack.c.0.s8 %v1454
        %v1456 = vperm.slane %v1448, %v1455
        %v1457 = vrot.slane %v1434, 4
        %v1458 = vsel %vm721, %v1457, %v1426
        %v1459 = vrot.slane %v1426, 4
        %v1460 = vsel %vm721, %v1434, %v1459
        %v1462 = vunpack.c.l.s4 1983009808
        %v1463 = vunpack.c.0.s8 %v1462
        %v1464 = vperm.slane %v1458, %v1463
        %v1466 = vunpack.c.l.s4 1983009808
        %v1467 = vunpack.c.0.s8 %v1466
        %v1468 = vperm.slane %v1460, %v1467
        %v1469 = vrot.slane %v1464, 4
        %v1470 = vsel %vm721, %v1469, %v1452
        %v1471 = vrot.slane %v1452, 4
        %v1472 = vsel %vm721, %v1464, %v1471
        %v1474 = vunpack.c.l.s4 1934713408
        %v1475 = vunpack.c.0.s8 %v1474
        %v1476 = vperm.slane %v1470, %v1475
        %v1478 = vunpack.c.l.s4 1934713408
        %v1479 = vunpack.c.0.s8 %v1478
        %v1480 = vperm.slane %v1472, %v1479
        %v1481 = vrot.slane %v1468, 4
        %v1482 = vsel %vm721, %v1481, %v1456
        %v1483 = vrot.slane %v1456, 4
        %v1484 = vsel %vm721, %v1468, %v1483
        %v1486 = vunpack.c.l.s4 1934713408
        %v1487 = vunpack.c.0.s8 %v1486
        %v1488 = vperm.slane %v1482, %v1487
        %v1490 = vunpack.c.l.s4 1934713408
        %v1491 = vunpack.c.0.s8 %v1490
        %v1492 = vperm.slane %v1484, %v1491
        %v1493 = vrot.slane %v1476, 4
        %v1494 = vsel %vm721, 0.0, %v1493
        %v1495 = vrot.slane %v1480, 4
        %v1496 = vsel %vm721, 0.0, %v1495
        %v1497 = vrot.slane %v1488, 4
        %v1498 = vsel %vm721, 0.0, %v1497
        %v1499 = vrot.slane %v1492, 4
        %v1500 = vsel %vm721, 0.0, %v1499
        %v1501 = vrot.slane %v1432, 4
        %v1502 = vsel %vm721, %v1501, %v1424
        %v1503 = vrot.slane %v1424, 4
        %v1504 = vsel %vm721, %v1432, %v1503
        %v1506 = vunpack.c.l.s4 1983009808
        %v1507 = vunpack.c.0.s8 %v1506
        %v1508 = vperm.slane %v1502, %v1507
        %v1510 = vunpack.c.l.s4 1983009808
        %v1511 = vunpack.c.0.s8 %v1510
        %v1512 = vperm.slane %v1504, %v1511
        %v1513 = vrot.slane %v1436, 4
        %v1514 = vsel %vm721, %v1513, %v1428
        %v1515 = vrot.slane %v1428, 4
        %v1516 = vsel %vm721, %v1436, %v1515
        %v1518 = vunpack.c.l.s4 1983009808
        %v1519 = vunpack.c.0.s8 %v1518
        %v1520 = vperm.slane %v1514, %v1519
        %v1522 = vunpack.c.l.s4 1983009808
        %v1523 = vunpack.c.0.s8 %v1522
        %v1524 = vperm.slane %v1516, %v1523
        %v1525 = vrot.slane %v1520, 4
        %v1526 = vsel %vm721, %v1525, %v1508
        %v1527 = vrot.slane %v1508, 4
        %v1528 = vsel %vm721, %v1520, %v1527
        %v1530 = vunpack.c.l.s4 1934713408
        %v1531 = vunpack.c.0.s8 %v1530
        %v1532 = vperm.slane %v1526, %v1531
        %v1534 = vunpack.c.l.s4 1934713408
        %v1535 = vunpack.c.0.s8 %v1534
        %v1536 = vperm.slane %v1528, %v1535
        %v1537 = vrot.slane %v1524, 4
        %v1538 = vsel %vm721, %v1537, %v1512
        %v1539 = vrot.slane %v1512, 4
        %v1540 = vsel %vm721, %v1524, %v1539
        %v1542 = vunpack.c.l.s4 1934713408
        %v1543 = vunpack.c.0.s8 %v1542
        %v1544 = vperm.slane %v1538, %v1543
        %v1546 = vunpack.c.l.s4 1934713408
        %v1547 = vunpack.c.0.s8 %v1546
        %v1548 = vperm.slane %v1540, %v1547
        %v1549 = vrot.slane %v1532, 4
        %v1550 = vsel %vm721, 0.0, %v1549
        %v1551 = vrot.slane %v1536, 4
        %v1552 = vsel %vm721, 0.0, %v1551
        %v1553 = vrot.slane %v1544, 4
        %v1554 = vsel %vm721, 0.0, %v1553
        %v1555 = vrot.slane %v1548, 4
        %v1556 = vsel %vm721, 0.0, %v1555
        %v1557 = vsel %vm721, %v1495, %v1476
        %v1559 = vunpack.c.l.s4 1983009808
        %v1560 = vunpack.c.0.s8 %v1559
        %v1561 = vperm.slane %v1557, %v1560
        %v1562 = vrot.slane %v1496, 4
        %v1563 = vsel %vm721, %v1562, %v1494
        %v1565 = vunpack.c.l.s4 1983009808
        %v1566 = vunpack.c.0.s8 %v1565
        %v1567 = vperm.slane %v1563, %v1566
        %v1568 = vsel %vm721, %v1499, %v1488
        %v1570 = vunpack.c.l.s4 1983009808
        %v1571 = vunpack.c.0.s8 %v1570
        %v1572 = vperm.slane %v1568, %v1571
        %v1573 = vrot.slane %v1500, 4
        %v1574 = vsel %vm721, %v1573, %v1498
        %v1576 = vunpack.c.l.s4 1983009808
        %v1577 = vunpack.c.0.s8 %v1576
        %v1578 = vperm.slane %v1574, %v1577
        %v1579 = vrot.slane %v1567, 4
        %v1580 = vsel %vm721, %v1579, %v1561
        %v1581 = vrot.slane %v1561, 4
        %v1582 = vsel %vm721, %v1567, %v1581
        %v1584 = vunpack.c.l.s4 1934713408
        %v1585 = vunpack.c.0.s8 %v1584
        %v1586 = vperm.slane %v1580, %v1585
        %v1588 = vunpack.c.l.s4 1934713408
        %v1589 = vunpack.c.0.s8 %v1588
        %v1590 = vperm.slane %v1582, %v1589
        %v1591 = vrot.slane %v1578, 4
        %v1592 = vsel %vm721, %v1591, %v1572
        %v1593 = vrot.slane %v1572, 4
        %v1594 = vsel %vm721, %v1578, %v1593
        %v1596 = vunpack.c.l.s4 1934713408
        %v1597 = vunpack.c.0.s8 %v1596
        %v1598 = vperm.slane %v1592, %v1597
        %v1600 = vunpack.c.l.s4 1934713408
        %v1601 = vunpack.c.0.s8 %v1600
        %v1602 = vperm.slane %v1594, %v1601
        %v1603 = vrot.slane %v1598, 4
        %v1604 = vsel %vm721, %v1603, %v1586
        %v1605 = vrot.slane %v1586, 4
        %v1606 = vsel %vm721, %v1598, %v1605
        %v1607 = vrot.slane %v1602, 4
        %v1608 = vsel %vm721, %v1607, %v1590
        %v1609 = vrot.slane %v1590, 4
        %v1610 = vsel %vm721, %v1602, %v1609
        %v1611 = vsel %vm721, %v1551, %v1532
        %v1613 = vunpack.c.l.s4 1983009808
        %v1614 = vunpack.c.0.s8 %v1613
        %v1615 = vperm.slane %v1611, %v1614
        %v1616 = vrot.slane %v1552, 4
        %v1617 = vsel %vm721, %v1616, %v1550
        %v1619 = vunpack.c.l.s4 1983009808
        %v1620 = vunpack.c.0.s8 %v1619
        %v1621 = vperm.slane %v1617, %v1620
        %v1622 = vsel %vm721, %v1555, %v1544
        %v1624 = vunpack.c.l.s4 1983009808
        %v1625 = vunpack.c.0.s8 %v1624
        %v1626 = vperm.slane %v1622, %v1625
        %v1627 = vrot.slane %v1556, 4
        %v1628 = vsel %vm721, %v1627, %v1554
        %v1630 = vunpack.c.l.s4 1983009808
        %v1631 = vunpack.c.0.s8 %v1630
        %v1632 = vperm.slane %v1628, %v1631
        %v1633 = vrot.slane %v1621, 4
        %v1634 = vsel %vm721, %v1633, %v1615
        %v1635 = vrot.slane %v1615, 4
        %v1636 = vsel %vm721, %v1621, %v1635
        %v1638 = vunpack.c.l.s4 1934713408
        %v1639 = vunpack.c.0.s8 %v1638
        %v1640 = vperm.slane %v1634, %v1639
        %v1642 = vunpack.c.l.s4 1934713408
        %v1643 = vunpack.c.0.s8 %v1642
        %v1644 = vperm.slane %v1636, %v1643
        %v1645 = vrot.slane %v1632, 4
        %v1646 = vsel %vm721, %v1645, %v1626
        %v1647 = vrot.slane %v1626, 4
        %v1648 = vsel %vm721, %v1632, %v1647
        %v1650 = vunpack.c.l.s4 1934713408
        %v1651 = vunpack.c.0.s8 %v1650
        %v1652 = vperm.slane %v1646, %v1651
        %v1654 = vunpack.c.l.s4 1934713408
        %v1655 = vunpack.c.0.s8 %v1654
        %v1656 = vperm.slane %v1648, %v1655
        %v1657 = vrot.slane %v1652, 4
        %v1658 = vsel %vm721, %v1657, %v1640
        %v1659 = vrot.slane %v1640, 4
        %v1660 = vsel %vm721, %v1652, %v1659
        %v1661 = vrot.slane %v1656, 4
        %v1662 = vsel %vm721, %v1661, %v1644
        %v1663 = vrot.slane %v1644, 4
        %v1664 = vsel %vm721, %v1656, %v1663
        %1665 = vrot.lane.b32.xlu0 %v656, 96
        %v1666 = vpop.permute.xlu0 %1665
        %1667 = vrot.lane.b32.xlu0 %v659, 96
        %v1668 = vpop.permute.xlu0 %1667
        %1669 = vrot.lane.b32.xlu0 %v662, 96
        %v1670 = vpop.permute.xlu0 %1669
        %1671 = vrot.lane.b32.xlu0 %v665, 96
        %v1672 = vpop.permute.xlu0 %1671
        %1673 = vrot.lane.b32.xlu0 %v946, 96
        %v1674 = vpop.permute.xlu0 %1673
        %1675 = vrot.lane.b32.xlu0 %v948, 96
        %v1676 = vpop.permute.xlu0 %1675
        %1677 = vrot.lane.b32.xlu0 %v950, 96
        %v1678 = vpop.permute.xlu0 %1677
        %1679 = vrot.lane.b32.xlu0 %v952, 96
        %v1680 = vpop.permute.xlu0 %1679
        %1681 = vrot.lane.b32.xlu0 %v958, 96
        %v1682 = vpop.permute.xlu0 %1681
        %1683 = vrot.lane.b32.xlu0 %v960, 96
        %v1684 = vpop.permute.xlu0 %1683
        %1685 = vrot.lane.b32.xlu0 %v962, 96
        %v1686 = vpop.permute.xlu0 %1685
        %1687 = vrot.lane.b32.xlu0 %v964, 96
        %v1688 = vpop.permute.xlu0 %1687
        %1689 = vrot.lane.b32.xlu0 %v970, 96
        %v1690 = vpop.permute.xlu0 %1689
        %1691 = vrot.lane.b32.xlu0 %v972, 96
        %v1692 = vpop.permute.xlu0 %1691
        %1693 = vrot.lane.b32.xlu0 %v974, 96
        %v1694 = vpop.permute.xlu0 %1693
        %1695 = vrot.lane.b32.xlu0 %v976, 96
        %v1696 = vpop.permute.xlu0 %1695
        %v1713 = vrot.slane %v1682, 4
        %v1714 = vsel %vm721, %v1713, %v1666
        %v1715 = vrot.slane %v1666, 4
        %v1716 = vsel %vm721, %v1682, %v1715
        %v1718 = vunpack.c.l.s4 1983009808
        %v1719 = vunpack.c.0.s8 %v1718
        %v1720 = vperm.slane %v1714, %v1719
        %v1722 = vunpack.c.l.s4 1983009808
        %v1723 = vunpack.c.0.s8 %v1722
        %v1724 = vperm.slane %v1716, %v1723
        %v1725 = vrot.slane %v1690, 4
        %v1726 = vsel %vm721, %v1725, %v1674
        %v1727 = vrot.slane %v1674, 4
        %v1728 = vsel %vm721, %v1690, %v1727
        %v1730 = vunpack.c.l.s4 1983009808
        %v1731 = vunpack.c.0.s8 %v1730
        %v1732 = vperm.slane %v1726, %v1731
        %v1734 = vunpack.c.l.s4 1983009808
        %v1735 = vunpack.c.0.s8 %v1734
        %v1736 = vperm.slane %v1728, %v1735
        %v1737 = vrot.slane %v1732, 4
        %v1738 = vsel %vm721, %v1737, %v1720
        %v1739 = vrot.slane %v1720, 4
        %v1740 = vsel %vm721, %v1732, %v1739
        %v1742 = vunpack.c.l.s4 1934713408
        %v1743 = vunpack.c.0.s8 %v1742
        %v1744 = vperm.slane %v1738, %v1743
        %v1746 = vunpack.c.l.s4 1934713408
        %v1747 = vunpack.c.0.s8 %v1746
        %v1748 = vperm.slane %v1740, %v1747
        %v1749 = vrot.slane %v1736, 4
        %v1750 = vsel %vm721, %v1749, %v1724
        %v1751 = vrot.slane %v1724, 4
        %v1752 = vsel %vm721, %v1736, %v1751
        %v1754 = vunpack.c.l.s4 1934713408
        %v1755 = vunpack.c.0.s8 %v1754
        %v1756 = vperm.slane %v1750, %v1755
        %v1758 = vunpack.c.l.s4 1934713408
        %v1759 = vunpack.c.0.s8 %v1758
        %v1760 = vperm.slane %v1752, %v1759
        %v1761 = vrot.slane %v1744, 4
        %v1762 = vsel %vm721, 0.0, %v1761
        %v1763 = vrot.slane %v1748, 4
        %v1764 = vsel %vm721, 0.0, %v1763
        %v1765 = vrot.slane %v1756, 4
        %v1766 = vsel %vm721, 0.0, %v1765
        %v1767 = vrot.slane %v1760, 4
        %v1768 = vsel %vm721, 0.0, %v1767
        %v1769 = vrot.slane %v1684, 4
        %v1770 = vsel %vm721, %v1769, %v1668
        %v1771 = vrot.slane %v1668, 4
        %v1772 = vsel %vm721, %v1684, %v1771
        %v1774 = vunpack.c.l.s4 1983009808
        %v1775 = vunpack.c.0.s8 %v1774
        %v1776 = vperm.slane %v1770, %v1775
        %v1778 = vunpack.c.l.s4 1983009808
        %v1779 = vunpack.c.0.s8 %v1778
        %v1780 = vperm.slane %v1772, %v1779
        %v1781 = vrot.slane %v1692, 4
        %v1782 = vsel %vm721, %v1781, %v1676
        %v1783 = vrot.slane %v1676, 4
        %v1784 = vsel %vm721, %v1692, %v1783
        %v1786 = vunpack.c.l.s4 1983009808
        %v1787 = vunpack.c.0.s8 %v1786
        %v1788 = vperm.slane %v1782, %v1787
        %v1790 = vunpack.c.l.s4 1983009808
        %v1791 = vunpack.c.0.s8 %v1790
        %v1792 = vperm.slane %v1784, %v1791
        %v1793 = vrot.slane %v1788, 4
        %v1794 = vsel %vm721, %v1793, %v1776
        %v1795 = vrot.slane %v1776, 4
        %v1796 = vsel %vm721, %v1788, %v1795
        %v1798 = vunpack.c.l.s4 1934713408
        %v1799 = vunpack.c.0.s8 %v1798
        %v1800 = vperm.slane %v1794, %v1799
        %v1802 = vunpack.c.l.s4 1934713408
        %v1803 = vunpack.c.0.s8 %v1802
        %v1804 = vperm.slane %v1796, %v1803
        %v1805 = vrot.slane %v1792, 4
        %v1806 = vsel %vm721, %v1805, %v1780
        %v1807 = vrot.slane %v1780, 4
        %v1808 = vsel %vm721, %v1792, %v1807
        %v1810 = vunpack.c.l.s4 1934713408
        %v1811 = vunpack.c.0.s8 %v1810
        %v1812 = vperm.slane %v1806, %v1811
        %v1814 = vunpack.c.l.s4 1934713408
        %v1815 = vunpack.c.0.s8 %v1814
        %v1816 = vperm.slane %v1808, %v1815
        %v1817 = vrot.slane %v1800, 4
        %v1818 = vsel %vm721, 0.0, %v1817
        %v1819 = vrot.slane %v1804, 4
        %v1820 = vsel %vm721, 0.0, %v1819
        %v1821 = vrot.slane %v1812, 4
        %v1822 = vsel %vm721, 0.0, %v1821
        %v1823 = vrot.slane %v1816, 4
        %v1824 = vsel %vm721, 0.0, %v1823
        %v1825 = vrot.slane %v1686, 4
        %v1826 = vsel %vm721, %v1825, %v1670
        %v1827 = vrot.slane %v1670, 4
        %v1828 = vsel %vm721, %v1686, %v1827
        %v1830 = vunpack.c.l.s4 1983009808
        %v1831 = vunpack.c.0.s8 %v1830
        %v1832 = vperm.slane %v1826, %v1831
        %v1834 = vunpack.c.l.s4 1983009808
        %v1835 = vunpack.c.0.s8 %v1834
        %v1836 = vperm.slane %v1828, %v1835
        %v1837 = vrot.slane %v1694, 4
        %v1838 = vsel %vm721, %v1837, %v1678
        %v1839 = vrot.slane %v1678, 4
        %v1840 = vsel %vm721, %v1694, %v1839
        %v1842 = vunpack.c.l.s4 1983009808
        %v1843 = vunpack.c.0.s8 %v1842
        %v1844 = vperm.slane %v1838, %v1843
        %v1846 = vunpack.c.l.s4 1983009808
        %v1847 = vunpack.c.0.s8 %v1846
        %v1848 = vperm.slane %v1840, %v1847
        %v1849 = vrot.slane %v1844, 4
        %v1850 = vsel %vm721, %v1849, %v1832
        %v1851 = vrot.slane %v1832, 4
        %v1852 = vsel %vm721, %v1844, %v1851
        %v1854 = vunpack.c.l.s4 1934713408
        %v1855 = vunpack.c.0.s8 %v1854
        %v1856 = vperm.slane %v1850, %v1855
        %v1858 = vunpack.c.l.s4 1934713408
        %v1859 = vunpack.c.0.s8 %v1858
        %v1860 = vperm.slane %v1852, %v1859
        %v1861 = vrot.slane %v1848, 4
        %v1862 = vsel %vm721, %v1861, %v1836
        %v1863 = vrot.slane %v1836, 4
        %v1864 = vsel %vm721, %v1848, %v1863
        %v1866 = vunpack.c.l.s4 1934713408
        %v1867 = vunpack.c.0.s8 %v1866
        %v1868 = vperm.slane %v1862, %v1867
        %v1870 = vunpack.c.l.s4 1934713408
        %v1871 = vunpack.c.0.s8 %v1870
        %v1872 = vperm.slane %v1864, %v1871
        %v1873 = vrot.slane %v1856, 4
        %v1874 = vsel %vm721, 0.0, %v1873
        %v1875 = vrot.slane %v1860, 4
        %v1876 = vsel %vm721, 0.0, %v1875
        %v1877 = vrot.slane %v1868, 4
        %v1878 = vsel %vm721, 0.0, %v1877
        %v1879 = vrot.slane %v1872, 4
        %v1880 = vsel %vm721, 0.0, %v1879
        %v1881 = vrot.slane %v1688, 4
        %v1882 = vsel %vm721, %v1881, %v1672
        %v1883 = vrot.slane %v1672, 4
        %v1884 = vsel %vm721, %v1688, %v1883
        %v1886 = vunpack.c.l.s4 1983009808
        %v1887 = vunpack.c.0.s8 %v1886
        %v1888 = vperm.slane %v1882, %v1887
        %v1890 = vunpack.c.l.s4 1983009808
        %v1891 = vunpack.c.0.s8 %v1890
        %v1892 = vperm.slane %v1884, %v1891
        %v1893 = vrot.slane %v1696, 4
        %v1894 = vsel %vm721, %v1893, %v1680
        %v1895 = vrot.slane %v1680, 4
        %v1896 = vsel %vm721, %v1696, %v1895
        %v1898 = vunpack.c.l.s4 1983009808
        %v1899 = vunpack.c.0.s8 %v1898
        %v1900 = vperm.slane %v1894, %v1899
        %v1902 = vunpack.c.l.s4 1983009808
        %v1903 = vunpack.c.0.s8 %v1902
        %v1904 = vperm.slane %v1896, %v1903
        %v1905 = vrot.slane %v1900, 4
        %v1906 = vsel %vm721, %v1905, %v1888
        %v1907 = vrot.slane %v1888, 4
        %v1908 = vsel %vm721, %v1900, %v1907
        %v1910 = vunpack.c.l.s4 1934713408
        %v1911 = vunpack.c.0.s8 %v1910
        %v1912 = vperm.slane %v1906, %v1911
        %v1914 = vunpack.c.l.s4 1934713408
        %v1915 = vunpack.c.0.s8 %v1914
        %v1916 = vperm.slane %v1908, %v1915
        %v1917 = vrot.slane %v1904, 4
        %v1918 = vsel %vm721, %v1917, %v1892
        %v1919 = vrot.slane %v1892, 4
        %v1920 = vsel %vm721, %v1904, %v1919
        %v1922 = vunpack.c.l.s4 1934713408
        %v1923 = vunpack.c.0.s8 %v1922
        %v1924 = vperm.slane %v1918, %v1923
        %v1926 = vunpack.c.l.s4 1934713408
        %v1927 = vunpack.c.0.s8 %v1926
        %v1928 = vperm.slane %v1920, %v1927
        %v1929 = vrot.slane %v1912, 4
        %v1930 = vsel %vm721, 0.0, %v1929
        %v1931 = vrot.slane %v1916, 4
        %v1932 = vsel %vm721, 0.0, %v1931
        %v1933 = vrot.slane %v1924, 4
        %v1934 = vsel %vm721, 0.0, %v1933
        %v1935 = vrot.slane %v1928, 4
        %v1936 = vsel %vm721, 0.0, %v1935
        %v1937 = vsel %vm721, %v1763, %v1744
        %v1939 = vunpack.c.l.s4 1983009808
        %v1940 = vunpack.c.0.s8 %v1939
        %v1941 = vperm.slane %v1937, %v1940
        %v1942 = vrot.slane %v1764, 4
        %v1943 = vsel %vm721, %v1942, %v1762
        %v1945 = vunpack.c.l.s4 1983009808
        %v1946 = vunpack.c.0.s8 %v1945
        %v1947 = vperm.slane %v1943, %v1946
        %v1948 = vsel %vm721, %v1767, %v1756
        %v1950 = vunpack.c.l.s4 1983009808
        %v1951 = vunpack.c.0.s8 %v1950
        %v1952 = vperm.slane %v1948, %v1951
        %v1953 = vrot.slane %v1768, 4
        %v1954 = vsel %vm721, %v1953, %v1766
        %v1956 = vunpack.c.l.s4 1983009808
        %v1957 = vunpack.c.0.s8 %v1956
        %v1958 = vperm.slane %v1954, %v1957
        %v1959 = vrot.slane %v1947, 4
        %v1960 = vsel %vm721, %v1959, %v1941
        %v1961 = vrot.slane %v1941, 4
        %v1962 = vsel %vm721, %v1947, %v1961
        %v1964 = vunpack.c.l.s4 1934713408
        %v1965 = vunpack.c.0.s8 %v1964
        %v1966 = vperm.slane %v1960, %v1965
        %v1968 = vunpack.c.l.s4 1934713408
        %v1969 = vunpack.c.0.s8 %v1968
        %v1970 = vperm.slane %v1962, %v1969
        %v1971 = vrot.slane %v1958, 4
        %v1972 = vsel %vm721, %v1971, %v1952
        %v1973 = vrot.slane %v1952, 4
        %v1974 = vsel %vm721, %v1958, %v1973
        %v1976 = vunpack.c.l.s4 1934713408
        %v1977 = vunpack.c.0.s8 %v1976
        %v1978 = vperm.slane %v1972, %v1977
        %v1980 = vunpack.c.l.s4 1934713408
        %v1981 = vunpack.c.0.s8 %v1980
        %v1982 = vperm.slane %v1974, %v1981
        %v1983 = vrot.slane %v1978, 4
        %v1984 = vsel %vm721, %v1983, %v1966
        %v1985 = vrot.slane %v1966, 4
        %v1986 = vsel %vm721, %v1978, %v1985
        %v1987 = vrot.slane %v1982, 4
        %v1988 = vsel %vm721, %v1987, %v1970
        %v1989 = vrot.slane %v1970, 4
        %v1990 = vsel %vm721, %v1982, %v1989
        %v1991 = vsel %vm721, %v1819, %v1800
        %v1993 = vunpack.c.l.s4 1983009808
        %v1994 = vunpack.c.0.s8 %v1993
        %v1995 = vperm.slane %v1991, %v1994
        %v1996 = vrot.slane %v1820, 4
        %v1997 = vsel %vm721, %v1996, %v1818
        %v1999 = vunpack.c.l.s4 1983009808
        %v2000 = vunpack.c.0.s8 %v1999
        %v2001 = vperm.slane %v1997, %v2000
        %v2002 = vsel %vm721, %v1823, %v1812
        %v2004 = vunpack.c.l.s4 1983009808
        %v2005 = vunpack.c.0.s8 %v2004
        %v2006 = vperm.slane %v2002, %v2005
        %v2007 = vrot.slane %v1824, 4
        %v2008 = vsel %vm721, %v2007, %v1822
        %v2010 = vunpack.c.l.s4 1983009808
        %v2011 = vunpack.c.0.s8 %v2010
        %v2012 = vperm.slane %v2008, %v2011
        %v2013 = vrot.slane %v2001, 4
        %v2014 = vsel %vm721, %v2013, %v1995
        %v2015 = vrot.slane %v1995, 4
        %v2016 = vsel %vm721, %v2001, %v2015
        %v2018 = vunpack.c.l.s4 1934713408
        %v2019 = vunpack.c.0.s8 %v2018
        %v2020 = vperm.slane %v2014, %v2019
        %v2022 = vunpack.c.l.s4 1934713408
        %v2023 = vunpack.c.0.s8 %v2022
        %v2024 = vperm.slane %v2016, %v2023
        %v2025 = vrot.slane %v2012, 4
        %v2026 = vsel %vm721, %v2025, %v2006
        %v2027 = vrot.slane %v2006, 4
        %v2028 = vsel %vm721, %v2012, %v2027
        %v2030 = vunpack.c.l.s4 1934713408
        %v2031 = vunpack.c.0.s8 %v2030
        %v2032 = vperm.slane %v2026, %v2031
        %v2034 = vunpack.c.l.s4 1934713408
        %v2035 = vunpack.c.0.s8 %v2034
        %v2036 = vperm.slane %v2028, %v2035
        %v2037 = vrot.slane %v2032, 4
        %v2038 = vsel %vm721, %v2037, %v2020
        %v2039 = vrot.slane %v2020, 4
        %v2040 = vsel %vm721, %v2032, %v2039
        %v2041 = vrot.slane %v2036, 4
        %v2042 = vsel %vm721, %v2041, %v2024
        %v2043 = vrot.slane %v2024, 4
        %v2044 = vsel %vm721, %v2036, %v2043
        %v2045 = vsel %vm721, %v1875, %v1856
        %v2047 = vunpack.c.l.s4 1983009808
        %v2048 = vunpack.c.0.s8 %v2047
        %v2049 = vperm.slane %v2045, %v2048
        %v2050 = vrot.slane %v1876, 4
        %v2051 = vsel %vm721, %v2050, %v1874
        %v2053 = vunpack.c.l.s4 1983009808
        %v2054 = vunpack.c.0.s8 %v2053
        %v2055 = vperm.slane %v2051, %v2054
        %v2056 = vsel %vm721, %v1879, %v1868
        %v2058 = vunpack.c.l.s4 1983009808
        %v2059 = vunpack.c.0.s8 %v2058
        %v2060 = vperm.slane %v2056, %v2059
        %v2061 = vrot.slane %v1880, 4
        %v2062 = vsel %vm721, %v2061, %v1878
        %v2064 = vunpack.c.l.s4 1983009808
        %v2065 = vunpack.c.0.s8 %v2064
        %v2066 = vperm.slane %v2062, %v2065
        %v2067 = vrot.slane %v2055, 4
        %v2068 = vsel %vm721, %v2067, %v2049
        %v2069 = vrot.slane %v2049, 4
        %v2070 = vsel %vm721, %v2055, %v2069
        %v2072 = vunpack.c.l.s4 1934713408
        %v2073 = vunpack.c.0.s8 %v2072
        %v2074 = vperm.slane %v2068, %v2073
        %v2076 = vunpack.c.l.s4 1934713408
        %v2077 = vunpack.c.0.s8 %v2076
        %v2078 = vperm.slane %v2070, %v2077
        %v2079 = vrot.slane %v2066, 4
        %v2080 = vsel %vm721, %v2079, %v2060
        %v2081 = vrot.slane %v2060, 4
        %v2082 = vsel %vm721, %v2066, %v2081
        %v2084 = vunpack.c.l.s4 1934713408
        %v2085 = vunpack.c.0.s8 %v2084
        %v2086 = vperm.slane %v2080, %v2085
        %v2088 = vunpack.c.l.s4 1934713408
        %v2089 = vunpack.c.0.s8 %v2088
        %v2090 = vperm.slane %v2082, %v2089
        %v2091 = vrot.slane %v2086, 4
        %v2092 = vsel %vm721, %v2091, %v2074
        %v2093 = vrot.slane %v2074, 4
        %v2094 = vsel %vm721, %v2086, %v2093
        %v2095 = vrot.slane %v2090, 4
        %v2096 = vsel %vm721, %v2095, %v2078
        %v2097 = vrot.slane %v2078, 4
        %v2098 = vsel %vm721, %v2090, %v2097
        %v2099 = vsel %vm721, %v1931, %v1912
        %v2101 = vunpack.c.l.s4 1983009808
        %v2102 = vunpack.c.0.s8 %v2101
        %v2103 = vperm.slane %v2099, %v2102
        %v2104 = vrot.slane %v1932, 4
        %v2105 = vsel %vm721, %v2104, %v1930
        %v2107 = vunpack.c.l.s4 1983009808
        %v2108 = vunpack.c.0.s8 %v2107
        %v2109 = vperm.slane %v2105, %v2108
        %v2110 = vsel %vm721, %v1935, %v1924
        %v2112 = vunpack.c.l.s4 1983009808
        %v2113 = vunpack.c.0.s8 %v2112
        %v2114 = vperm.slane %v2110, %v2113
        %v2115 = vrot.slane %v1936, 4
        %v2116 = vsel %vm721, %v2115, %v1934
        %v2118 = vunpack.c.l.s4 1983009808
        %v2119 = vunpack.c.0.s8 %v2118
        %v2120 = vperm.slane %v2116, %v2119
        %v2121 = vrot.slane %v2109, 4
        %v2122 = vsel %vm721, %v2121, %v2103
        %v2123 = vrot.slane %v2103, 4
        %v2124 = vsel %vm721, %v2109, %v2123
        %v2126 = vunpack.c.l.s4 1934713408
        %v2127 = vunpack.c.0.s8 %v2126
        %v2128 = vperm.slane %v2122, %v2127
        %v2130 = vunpack.c.l.s4 1934713408
        %v2131 = vunpack.c.0.s8 %v2130
        %v2132 = vperm.slane %v2124, %v2131
        %v2133 = vrot.slane %v2120, 4
        %v2134 = vsel %vm721, %v2133, %v2114
        %v2135 = vrot.slane %v2114, 4
        %v2136 = vsel %vm721, %v2120, %v2135
        %v2138 = vunpack.c.l.s4 1934713408
        %v2139 = vunpack.c.0.s8 %v2138
        %v2140 = vperm.slane %v2134, %v2139
        %v2142 = vunpack.c.l.s4 1934713408
        %v2143 = vunpack.c.0.s8 %v2142
        %v2144 = vperm.slane %v2136, %v2143
        %v2145 = vrot.slane %v2140, 4
        %v2146 = vsel %vm721, %v2145, %v2128
        %v2147 = vrot.slane %v2128, 4
        %v2148 = vsel %vm721, %v2140, %v2147
        %v2149 = vrot.slane %v2144, 4
        %v2150 = vsel %vm721, %v2149, %v2132
        %v2151 = vrot.slane %v2132, 4
        %v2152 = vsel %vm721, %v2144, %v2151
        %2153 = vrot.lane.b32.xlu0 %v695, 64
        %v2154 = vpop.permute.xlu0 %2153
        %2155 = vrot.lane.b32.xlu0 %v698, 64
        %v2156 = vpop.permute.xlu0 %2155
        %2157 = vrot.lane.b32.xlu0 %v703, 64
        %v2158 = vpop.permute.xlu0 %2157
        %2159 = vrot.lane.b32.xlu0 %v705, 64
        %v2160 = vpop.permute.xlu0 %2159
        %2161 = vrot.lane.b32.xlu0 %v709, 64
        %v2162 = vpop.permute.xlu0 %2161
        %2163 = vrot.lane.b32.xlu0 %v711, 64
        %v2164 = vpop.permute.xlu0 %2163
        %2165 = vrot.lane.b32.xlu0 %v715, 64
        %v2166 = vpop.permute.xlu0 %2165
        %2167 = vrot.lane.b32.xlu0 %v717, 64
        %v2168 = vpop.permute.xlu0 %2167
        %v2177 = vrot.slane %v2162, 4
        %v2178 = vsel %vm721, %v2177, %v2154
        %v2179 = vrot.slane %v2154, 4
        %v2180 = vsel %vm721, %v2162, %v2179
        %v2182 = vunpack.c.l.s4 1983009808
        %v2183 = vunpack.c.0.s8 %v2182
        %v2184 = vperm.slane %v2178, %v2183
        %v2186 = vunpack.c.l.s4 1983009808
        %v2187 = vunpack.c.0.s8 %v2186
        %v2188 = vperm.slane %v2180, %v2187
        %v2189 = vrot.slane %v2166, 4
        %v2190 = vsel %vm721, %v2189, %v2158
        %v2191 = vrot.slane %v2158, 4
        %v2192 = vsel %vm721, %v2166, %v2191
        %v2194 = vunpack.c.l.s4 1983009808
        %v2195 = vunpack.c.0.s8 %v2194
        %v2196 = vperm.slane %v2190, %v2195
        %v2198 = vunpack.c.l.s4 1983009808
        %v2199 = vunpack.c.0.s8 %v2198
        %v2200 = vperm.slane %v2192, %v2199
        %v2201 = vrot.slane %v2196, 4
        %v2202 = vsel %vm721, %v2201, %v2184
        %v2203 = vrot.slane %v2184, 4
        %v2204 = vsel %vm721, %v2196, %v2203
        %v2206 = vunpack.c.l.s4 1934713408
        %v2207 = vunpack.c.0.s8 %v2206
        %v2208 = vperm.slane %v2202, %v2207
        %v2210 = vunpack.c.l.s4 1934713408
        %v2211 = vunpack.c.0.s8 %v2210
        %v2212 = vperm.slane %v2204, %v2211
        %v2213 = vrot.slane %v2200, 4
        %v2214 = vsel %vm721, %v2213, %v2188
        %v2215 = vrot.slane %v2188, 4
        %v2216 = vsel %vm721, %v2200, %v2215
        %v2218 = vunpack.c.l.s4 1934713408
        %v2219 = vunpack.c.0.s8 %v2218
        %v2220 = vperm.slane %v2214, %v2219
        %v2222 = vunpack.c.l.s4 1934713408
        %v2223 = vunpack.c.0.s8 %v2222
        %v2224 = vperm.slane %v2216, %v2223
        %v2225 = vrot.slane %v2208, 4
        %v2226 = vsel %vm721, 0.0, %v2225
        %v2227 = vrot.slane %v2212, 4
        %v2228 = vsel %vm721, 0.0, %v2227
        %v2229 = vrot.slane %v2220, 4
        %v2230 = vsel %vm721, 0.0, %v2229
        %v2231 = vrot.slane %v2224, 4
        %v2232 = vsel %vm721, 0.0, %v2231
        %v2233 = vrot.slane %v2164, 4
        %v2234 = vsel %vm721, %v2233, %v2156
        %v2235 = vrot.slane %v2156, 4
        %v2236 = vsel %vm721, %v2164, %v2235
        %v2238 = vunpack.c.l.s4 1983009808
        %v2239 = vunpack.c.0.s8 %v2238
        %v2240 = vperm.slane %v2234, %v2239
        %v2242 = vunpack.c.l.s4 1983009808
        %v2243 = vunpack.c.0.s8 %v2242
        %v2244 = vperm.slane %v2236, %v2243
        %v2245 = vrot.slane %v2168, 4
        %v2246 = vsel %vm721, %v2245, %v2160
        %v2247 = vrot.slane %v2160, 4
        %v2248 = vsel %vm721, %v2168, %v2247
        %v2250 = vunpack.c.l.s4 1983009808
        %v2251 = vunpack.c.0.s8 %v2250
        %v2252 = vperm.slane %v2246, %v2251
        %v2254 = vunpack.c.l.s4 1983009808
        %v2255 = vunpack.c.0.s8 %v2254
        %v2256 = vperm.slane %v2248, %v2255
        %v2257 = vrot.slane %v2252, 4
        %v2258 = vsel %vm721, %v2257, %v2240
        %v2259 = vrot.slane %v2240, 4
        %v2260 = vsel %vm721, %v2252, %v2259
        %v2262 = vunpack.c.l.s4 1934713408
        %v2263 = vunpack.c.0.s8 %v2262
        %v2264 = vperm.slane %v2258, %v2263
        %v2266 = vunpack.c.l.s4 1934713408
        %v2267 = vunpack.c.0.s8 %v2266
        %v2268 = vperm.slane %v2260, %v2267
        %v2269 = vrot.slane %v2256, 4
        %v2270 = vsel %vm721, %v2269, %v2244
        %v2271 = vrot.slane %v2244, 4
        %v2272 = vsel %vm721, %v2256, %v2271
        %v2274 = vunpack.c.l.s4 1934713408
        %v2275 = vunpack.c.0.s8 %v2274
        %v2276 = vperm.slane %v2270, %v2275
        %v2278 = vunpack.c.l.s4 1934713408
        %v2279 = vunpack.c.0.s8 %v2278
        %v2280 = vperm.slane %v2272, %v2279
        %v2281 = vrot.slane %v2264, 4
        %v2282 = vsel %vm721, 0.0, %v2281
        %v2283 = vrot.slane %v2268, 4
        %v2284 = vsel %vm721, 0.0, %v2283
        %v2285 = vrot.slane %v2276, 4
        %v2286 = vsel %vm721, 0.0, %v2285
        %v2287 = vrot.slane %v2280, 4
        %v2288 = vsel %vm721, 0.0, %v2287
        %v2289 = vsel %vm721, %v2227, %v2208
        %v2291 = vunpack.c.l.s4 1983009808
        %v2292 = vunpack.c.0.s8 %v2291
        %v2293 = vperm.slane %v2289, %v2292
        %v2294 = vrot.slane %v2228, 4
        %v2295 = vsel %vm721, %v2294, %v2226
        %v2297 = vunpack.c.l.s4 1983009808
        %v2298 = vunpack.c.0.s8 %v2297
        %v2299 = vperm.slane %v2295, %v2298
        %v2300 = vsel %vm721, %v2231, %v2220
        %v2302 = vunpack.c.l.s4 1983009808
        %v2303 = vunpack.c.0.s8 %v2302
        %v2304 = vperm.slane %v2300, %v2303
        %v2305 = vrot.slane %v2232, 4
        %v2306 = vsel %vm721, %v2305, %v2230
        %v2308 = vunpack.c.l.s4 1983009808
        %v2309 = vunpack.c.0.s8 %v2308
        %v2310 = vperm.slane %v2306, %v2309
        %v2311 = vrot.slane %v2299, 4
        %v2312 = vsel %vm721, %v2311, %v2293
        %v2313 = vrot.slane %v2293, 4
        %v2314 = vsel %vm721, %v2299, %v2313
        %v2316 = vunpack.c.l.s4 1934713408
        %v2317 = vunpack.c.0.s8 %v2316
        %v2318 = vperm.slane %v2312, %v2317
        %v2320 = vunpack.c.l.s4 1934713408
        %v2321 = vunpack.c.0.s8 %v2320
        %v2322 = vperm.slane %v2314, %v2321
        %v2323 = vrot.slane %v2310, 4
        %v2324 = vsel %vm721, %v2323, %v2304
        %v2325 = vrot.slane %v2304, 4
        %v2326 = vsel %vm721, %v2310, %v2325
        %v2328 = vunpack.c.l.s4 1934713408
        %v2329 = vunpack.c.0.s8 %v2328
        %v2330 = vperm.slane %v2324, %v2329
        %v2332 = vunpack.c.l.s4 1934713408
        %v2333 = vunpack.c.0.s8 %v2332
        %v2334 = vperm.slane %v2326, %v2333
        %v2335 = vrot.slane %v2330, 4
        %v2336 = vsel %vm721, %v2335, %v2318
        %v2337 = vrot.slane %v2318, 4
        %v2338 = vsel %vm721, %v2330, %v2337
        %v2339 = vrot.slane %v2334, 4
        %v2340 = vsel %vm721, %v2339, %v2322
        %v2341 = vrot.slane %v2322, 4
        %v2342 = vsel %vm721, %v2334, %v2341
        %v2343 = vsel %vm721, %v2283, %v2264
        %v2345 = vunpack.c.l.s4 1983009808
        %v2346 = vunpack.c.0.s8 %v2345
        %v2347 = vperm.slane %v2343, %v2346
        %v2348 = vrot.slane %v2284, 4
        %v2349 = vsel %vm721, %v2348, %v2282
        %v2351 = vunpack.c.l.s4 1983009808
        %v2352 = vunpack.c.0.s8 %v2351
        %v2353 = vperm.slane %v2349, %v2352
        %v2354 = vsel %vm721, %v2287, %v2276
        %v2356 = vunpack.c.l.s4 1983009808
        %v2357 = vunpack.c.0.s8 %v2356
        %v2358 = vperm.slane %v2354, %v2357
        %v2359 = vrot.slane %v2288, 4
        %v2360 = vsel %vm721, %v2359, %v2286
        %v2362 = vunpack.c.l.s4 1983009808
        %v2363 = vunpack.c.0.s8 %v2362
        %v2364 = vperm.slane %v2360, %v2363
        %v2365 = vrot.slane %v2353, 4
        %v2366 = vsel %vm721, %v2365, %v2347
        %v2367 = vrot.slane %v2347, 4
        %v2368 = vsel %vm721, %v2353, %v2367
        %v2370 = vunpack.c.l.s4 1934713408
        %v2371 = vunpack.c.0.s8 %v2370
        %v2372 = vperm.slane %v2366, %v2371
        %v2374 = vunpack.c.l.s4 1934713408
        %v2375 = vunpack.c.0.s8 %v2374
        %v2376 = vperm.slane %v2368, %v2375
        %v2377 = vrot.slane %v2364, 4
        %v2378 = vsel %vm721, %v2377, %v2358
        %v2379 = vrot.slane %v2358, 4
        %v2380 = vsel %vm721, %v2364, %v2379
        %v2382 = vunpack.c.l.s4 1934713408
        %v2383 = vunpack.c.0.s8 %v2382
        %v2384 = vperm.slane %v2378, %v2383
        %v2386 = vunpack.c.l.s4 1934713408
        %v2387 = vunpack.c.0.s8 %v2386
        %v2388 = vperm.slane %v2380, %v2387
        %v2389 = vrot.slane %v2384, 4
        %v2390 = vsel %vm721, %v2389, %v2372
        %v2391 = vrot.slane %v2372, 4
        %v2392 = vsel %vm721, %v2384, %v2391
        %v2393 = vrot.slane %v2388, 4
        %v2394 = vsel %vm721, %v2393, %v2376
        %v2395 = vrot.slane %v2376, 4
        %v2396 = vsel %vm721, %v2388, %v2395
        %vm2397 = vcmask 64512
        %v2399 = vsel %vm2397, %v880, 0
        %v2402 = vsel %vm2397, %v1252, 0
        %v2405 = vsel %vm2397, %v1306, 0
        %2407 = vmatpush.xpose.msra.mxu0 0.0
        %2408 = vmatpush.xpose.msra.mxu0 0.0
        %2409 = vmatpush.xpose.msra.mxu0 0.0
        %2410 = vmatpush.xpose.msra.mxu0 0.0
        %2411 = vmatpush.xpose.msra.mxu0 0.0
        %2412 = vmatpush.xpose.msra.mxu0 0.0
        %2413 = vmatpush.xpose.msra.mxu0 0.0
        %2414 = vmatpush.xpose.msra.mxu0 0.0
        %2415 = vmatpush.xpose.msra.mxu0 0.0
        %2416 = vmatpush.xpose.msra.mxu0 0.0
        %2417 = vmatpush.xpose.msra.mxu0 0.0
        %2418 = vmatpush.xpose.msra.mxu0 0.0
        %2419 = vmatpush.xpose.msra.mxu0 0.0
        %2420 = vmatpush.xpose.msra.mxu0 0.0
        %2421 = vmatpush.xpose.msra.mxu0 %v2405
        %2422 = vmatpush.xpose.msra.mxu0 %v2402
        %2423 = vmatmul.f32.gmra.mxu0 %v2399
        %v2424 = vpop.f32.mrf.mxu0
        %v2425 = vadd.f32 0.0, %v2424
        %2426 = vdwg.mxu0
        %v2428 = vsel %vm2397, %v882, 0
        %v2431 = vsel %vm2397, %v1254, 0
        %v2434 = vsel %vm2397, %v1308, 0
        %2436 = vmatpush.xpose.msra.mxu0 0.0
        %2437 = vmatpush.xpose.msra.mxu0 0.0
        %2438 = vmatpush.xpose.msra.mxu0 0.0
        %2439 = vmatpush.xpose.msra.mxu0 0.0
        %2440 = vmatpush.xpose.msra.mxu0 0.0
        %2441 = vmatpush.xpose.msra.mxu0 0.0
        %2442 = vmatpush.xpose.msra.mxu0 0.0
        %2443 = vmatpush.xpose.msra.mxu0 0.0
        %2444 = vmatpush.xpose.msra.mxu0 0.0
        %2445 = vmatpush.xpose.msra.mxu0 0.0
        %2446 = vmatpush.xpose.msra.mxu0 0.0
        %2447 = vmatpush.xpose.msra.mxu0 0.0
        %2448 = vmatpush.xpose.msra.mxu0 0.0
        %2449 = vmatpush.xpose.msra.mxu0 0.0
        %2450 = vmatpush.xpose.msra.mxu0 %v2434
        %2451 = vmatpush.xpose.msra.mxu0 %v2431
        %2452 = vmatmul.f32.gmra.mxu0 %v2428
        %v2453 = vpop.f32.mrf.mxu0
        %v2454 = vadd.f32 0.0, %v2453
        %2455 = vdwg.mxu0
        %v2457 = vsel %vm2397, %v884, 0
        %v2460 = vsel %vm2397, %v1256, 0
        %v2463 = vsel %vm2397, %v1310, 0
        %2465 = vmatpush.xpose.msra.mxu0 0.0
        %2466 = vmatpush.xpose.msra.mxu0 0.0
        %2467 = vmatpush.xpose.msra.mxu0 0.0
        %2468 = vmatpush.xpose.msra.mxu0 0.0
        %2469 = vmatpush.xpose.msra.mxu0 0.0
        %2470 = vmatpush.xpose.msra.mxu0 0.0
        %2471 = vmatpush.xpose.msra.mxu0 0.0
        %2472 = vmatpush.xpose.msra.mxu0 0.0
        %2473 = vmatpush.xpose.msra.mxu0 0.0
        %2474 = vmatpush.xpose.msra.mxu0 0.0
        %2475 = vmatpush.xpose.msra.mxu0 0.0
        %2476 = vmatpush.xpose.msra.mxu0 0.0
        %2477 = vmatpush.xpose.msra.mxu0 0.0
        %2478 = vmatpush.xpose.msra.mxu0 0.0
        %2479 = vmatpush.xpose.msra.mxu0 %v2463
        %2480 = vmatpush.xpose.msra.mxu0 %v2460
        %2481 = vmatmul.f32.gmra.mxu0 %v2457
        %v2482 = vpop.f32.mrf.mxu0
        %v2483 = vadd.f32 0.0, %v2482
        %2484 = vdwg.mxu0
        %v2486 = vsel %vm2397, %v886, 0
        %v2489 = vsel %vm2397, %v1258, 0
        %v2492 = vsel %vm2397, %v1312, 0
        %2494 = vmatpush.xpose.msra.mxu0 0.0
        %2495 = vmatpush.xpose.msra.mxu0 0.0
        %2496 = vmatpush.xpose.msra.mxu0 0.0
        %2497 = vmatpush.xpose.msra.mxu0 0.0
        %2498 = vmatpush.xpose.msra.mxu0 0.0
        %2499 = vmatpush.xpose.msra.mxu0 0.0
        %2500 = vmatpush.xpose.msra.mxu0 0.0
        %2501 = vmatpush.xpose.msra.mxu0 0.0
        %2502 = vmatpush.xpose.msra.mxu0 0.0
        %2503 = vmatpush.xpose.msra.mxu0 0.0
        %2504 = vmatpush.xpose.msra.mxu0 0.0
        %2505 = vmatpush.xpose.msra.mxu0 0.0
        %2506 = vmatpush.xpose.msra.mxu0 0.0
        %2507 = vmatpush.xpose.msra.mxu0 0.0
        %2508 = vmatpush.xpose.msra.mxu0 %v2492
        %2509 = vmatpush.xpose.msra.mxu0 %v2489
        %2510 = vmatmul.f32.gmra.mxu0 %v2486
        %v2511 = vpop.f32.mrf.mxu0
        %v2512 = vadd.f32 0.0, %v2511
        %2513 = vdwg.mxu0
        %v2515 = vsel %vm2397, %v934, 0
        %v2518 = vsel %vm2397, %v1360, 0
        %v2521 = vsel %vm2397, %v1414, 0
        %2523 = vmatpush.xpose.msra.mxu0 0.0
        %2524 = vmatpush.xpose.msra.mxu0 0.0
        %2525 = vmatpush.xpose.msra.mxu0 0.0
        %2526 = vmatpush.xpose.msra.mxu0 0.0
        %2527 = vmatpush.xpose.msra.mxu0 0.0
        %2528 = vmatpush.xpose.msra.mxu0 0.0
        %2529 = vmatpush.xpose.msra.mxu0 0.0
        %2530 = vmatpush.xpose.msra.mxu0 0.0
        %2531 = vmatpush.xpose.msra.mxu0 0.0
        %2532 = vmatpush.xpose.msra.mxu0 0.0
        %2533 = vmatpush.xpose.msra.mxu0 0.0
        %2534 = vmatpush.xpose.msra.mxu0 0.0
        %2535 = vmatpush.xpose.msra.mxu0 0.0
        %2536 = vmatpush.xpose.msra.mxu0 0.0
        %2537 = vmatpush.xpose.msra.mxu0 %v2521
        %2538 = vmatpush.xpose.msra.mxu0 %v2518
        %2539 = vmatmul.f32.gmra.mxu0 %v2515
        %v2540 = vpop.f32.mrf.mxu0
        %v2541 = vadd.f32 0.0, %v2540
        %2542 = vdwg.mxu0
        %v2544 = vsel %vm2397, %v936, 0
        %v2547 = vsel %vm2397, %v1362, 0
        %v2550 = vsel %vm2397, %v1416, 0
        %2552 = vmatpush.xpose.msra.mxu0 0.0
        %2553 = vmatpush.xpose.msra.mxu0 0.0
        %2554 = vmatpush.xpose.msra.mxu0 0.0
        %2555 = vmatpush.xpose.msra.mxu0 0.0
        %2556 = vmatpush.xpose.msra.mxu0 0.0
        %2557 = vmatpush.xpose.msra.mxu0 0.0
        %2558 = vmatpush.xpose.msra.mxu0 0.0
        %2559 = vmatpush.xpose.msra.mxu0 0.0
        %2560 = vmatpush.xpose.msra.mxu0 0.0
        %2561 = vmatpush.xpose.msra.mxu0 0.0
        %2562 = vmatpush.xpose.msra.mxu0 0.0
        %2563 = vmatpush.xpose.msra.mxu0 0.0
        %2564 = vmatpush.xpose.msra.mxu0 0.0
        %2565 = vmatpush.xpose.msra.mxu0 0.0
        %2566 = vmatpush.xpose.msra.mxu0 %v2550
        %2567 = vmatpush.xpose.msra.mxu0 %v2547
        %2568 = vmatmul.f32.gmra.mxu0 %v2544
        %v2569 = vpop.f32.mrf.mxu0
        %v2570 = vadd.f32 0.0, %v2569
        %2571 = vdwg.mxu0
        %v2573 = vsel %vm2397, %v938, 0
        %v2576 = vsel %vm2397, %v1364, 0
        %v2579 = vsel %vm2397, %v1418, 0
        %2581 = vmatpush.xpose.msra.mxu0 0.0
        %2582 = vmatpush.xpose.msra.mxu0 0.0
        %2583 = vmatpush.xpose.msra.mxu0 0.0
        %2584 = vmatpush.xpose.msra.mxu0 0.0
        %2585 = vmatpush.xpose.msra.mxu0 0.0
        %2586 = vmatpush.xpose.msra.mxu0 0.0
        %2587 = vmatpush.xpose.msra.mxu0 0.0
        %2588 = vmatpush.xpose.msra.mxu0 0.0
        %2589 = vmatpush.xpose.msra.mxu0 0.0
        %2590 = vmatpush.xpose.msra.mxu0 0.0
        %2591 = vmatpush.xpose.msra.mxu0 0.0
        %2592 = vmatpush.xpose.msra.mxu0 0.0
        %2593 = vmatpush.xpose.msra.mxu0 0.0
        %2594 = vmatpush.xpose.msra.mxu0 0.0
        %2595 = vmatpush.xpose.msra.mxu0 %v2579
        %2596 = vmatpush.xpose.msra.mxu0 %v2576
        %2597 = vmatmul.f32.gmra.mxu0 %v2573
        %v2598 = vpop.f32.mrf.mxu0
        %v2599 = vadd.f32 0.0, %v2598
        %2600 = vdwg.mxu0
        %v2602 = vsel %vm2397, %v940, 0
        %v2605 = vsel %vm2397, %v1366, 0
        %v2608 = vsel %vm2397, %v1420, 0
        %2610 = vmatpush.xpose.msra.mxu0 0.0
        %2611 = vmatpush.xpose.msra.mxu0 0.0
        %2612 = vmatpush.xpose.msra.mxu0 0.0
        %2613 = vmatpush.xpose.msra.mxu0 0.0
        %2614 = vmatpush.xpose.msra.mxu0 0.0
        %2615 = vmatpush.xpose.msra.mxu0 0.0
        %2616 = vmatpush.xpose.msra.mxu0 0.0
        %2617 = vmatpush.xpose.msra.mxu0 0.0
        %2618 = vmatpush.xpose.msra.mxu0 0.0
        %2619 = vmatpush.xpose.msra.mxu0 0.0
        %2620 = vmatpush.xpose.msra.mxu0 0.0
        %2621 = vmatpush.xpose.msra.mxu0 0.0
        %2622 = vmatpush.xpose.msra.mxu0 0.0
        %2623 = vmatpush.xpose.msra.mxu0 0.0
        %2624 = vmatpush.xpose.msra.mxu0 %v2608
        %2625 = vmatpush.xpose.msra.mxu0 %v2605
        %2626 = vmatmul.f32.gmra.mxu0 %v2602
        %v2627 = vpop.f32.mrf.mxu0
        %v2628 = vadd.f32 0.0, %v2627
        %2629 = vdwg.mxu0
        %v2631 = vsel %vm2397, %v1604, 0
        %2633 = vmatpush.xpose.msra.mxu0 0.0
        %2634 = vmatpush.xpose.msra.mxu0 0.0
        %2635 = vmatpush.xpose.msra.mxu0 0.0
        %2636 = vmatpush.xpose.msra.mxu0 0.0
        %2637 = vmatpush.xpose.msra.mxu0 0.0
        %2638 = vmatpush.xpose.msra.mxu0 0.0
        %2639 = vmatpush.xpose.msra.mxu0 0.0
        %2640 = vmatpush.xpose.msra.mxu0 0.0
        %2641 = vmatpush.xpose.msra.mxu0 0.0
        %2642 = vmatpush.xpose.msra.mxu0 0.0
        %2643 = vmatpush.xpose.msra.mxu0 0.0
        %2644 = vmatpush.xpose.msra.mxu0 0.0
        %2645 = vmatpush.xpose.msra.mxu0 0.0
        %2646 = vmatpush.xpose.msra.mxu0 0.0
        %2647 = vmatpush.xpose.msra.mxu0 0.0
        %2648 = vmatpush.xpose.msra.mxu0 %v2631
        %2649 = vmatmul.f32.gmra.mxu0 %v2399
        %v2650 = vpop.f32.mrf.mxu0
        %v2651 = vadd.f32 0.0, %v2650
        %2652 = vdwg.mxu0
        %v2654 = vsel %vm2397, %v1606, 0
        %2656 = vmatpush.xpose.msra.mxu0 0.0
        %2657 = vmatpush.xpose.msra.mxu0 0.0
        %2658 = vmatpush.xpose.msra.mxu0 0.0
        %2659 = vmatpush.xpose.msra.mxu0 0.0
        %2660 = vmatpush.xpose.msra.mxu0 0.0
        %2661 = vmatpush.xpose.msra.mxu0 0.0
        %2662 = vmatpush.xpose.msra.mxu0 0.0
        %2663 = vmatpush.xpose.msra.mxu0 0.0
        %2664 = vmatpush.xpose.msra.mxu0 0.0
        %2665 = vmatpush.xpose.msra.mxu0 0.0
        %2666 = vmatpush.xpose.msra.mxu0 0.0
        %2667 = vmatpush.xpose.msra.mxu0 0.0
        %2668 = vmatpush.xpose.msra.mxu0 0.0
        %2669 = vmatpush.xpose.msra.mxu0 0.0
        %2670 = vmatpush.xpose.msra.mxu0 0.0
        %2671 = vmatpush.xpose.msra.mxu0 %v2654
        %2672 = vmatmul.f32.gmra.mxu0 %v2428
        %v2673 = vpop.f32.mrf.mxu0
        %v2674 = vadd.f32 0.0, %v2673
        %2675 = vdwg.mxu0
        %v2677 = vsel %vm2397, %v1608, 0
        %2679 = vmatpush.xpose.msra.mxu0 0.0
        %2680 = vmatpush.xpose.msra.mxu0 0.0
        %2681 = vmatpush.xpose.msra.mxu0 0.0
        %2682 = vmatpush.xpose.msra.mxu0 0.0
        %2683 = vmatpush.xpose.msra.mxu0 0.0
        %2684 = vmatpush.xpose.msra.mxu0 0.0
        %2685 = vmatpush.xpose.msra.mxu0 0.0
        %2686 = vmatpush.xpose.msra.mxu0 0.0
        %2687 = vmatpush.xpose.msra.mxu0 0.0
        %2688 = vmatpush.xpose.msra.mxu0 0.0
        %2689 = vmatpush.xpose.msra.mxu0 0.0
        %2690 = vmatpush.xpose.msra.mxu0 0.0
        %2691 = vmatpush.xpose.msra.mxu0 0.0
        %2692 = vmatpush.xpose.msra.mxu0 0.0
        %2693 = vmatpush.xpose.msra.mxu0 0.0
        %2694 = vmatpush.xpose.msra.mxu0 %v2677
        %2695 = vmatmul.f32.gmra.mxu0 %v2457
        %v2696 = vpop.f32.mrf.mxu0
        %v2697 = vadd.f32 0.0, %v2696
        %2698 = vdwg.mxu0
        %v2700 = vsel %vm2397, %v1610, 0
        %2702 = vmatpush.xpose.msra.mxu0 0.0
        %2703 = vmatpush.xpose.msra.mxu0 0.0
        %2704 = vmatpush.xpose.msra.mxu0 0.0
        %2705 = vmatpush.xpose.msra.mxu0 0.0
        %2706 = vmatpush.xpose.msra.mxu0 0.0
        %2707 = vmatpush.xpose.msra.mxu0 0.0
        %2708 = vmatpush.xpose.msra.mxu0 0.0
        %2709 = vmatpush.xpose.msra.mxu0 0.0
        %2710 = vmatpush.xpose.msra.mxu0 0.0
        %2711 = vmatpush.xpose.msra.mxu0 0.0
        %2712 = vmatpush.xpose.msra.mxu0 0.0
        %2713 = vmatpush.xpose.msra.mxu0 0.0
        %2714 = vmatpush.xpose.msra.mxu0 0.0
        %2715 = vmatpush.xpose.msra.mxu0 0.0
        %2716 = vmatpush.xpose.msra.mxu0 0.0
        %2717 = vmatpush.xpose.msra.mxu0 %v2700
        %2718 = vmatmul.f32.gmra.mxu0 %v2486
        %v2719 = vpop.f32.mrf.mxu0
        %v2720 = vadd.f32 0.0, %v2719
        %2721 = vdwg.mxu0
        %v2723 = vsel %vm2397, %v1658, 0
        %2725 = vmatpush.xpose.msra.mxu0 0.0
        %2726 = vmatpush.xpose.msra.mxu0 0.0
        %2727 = vmatpush.xpose.msra.mxu0 0.0
        %2728 = vmatpush.xpose.msra.mxu0 0.0
        %2729 = vmatpush.xpose.msra.mxu0 0.0
        %2730 = vmatpush.xpose.msra.mxu0 0.0
        %2731 = vmatpush.xpose.msra.mxu0 0.0
        %2732 = vmatpush.xpose.msra.mxu0 0.0
        %2733 = vmatpush.xpose.msra.mxu0 0.0
        %2734 = vmatpush.xpose.msra.mxu0 0.0
        %2735 = vmatpush.xpose.msra.mxu0 0.0
        %2736 = vmatpush.xpose.msra.mxu0 0.0
        %2737 = vmatpush.xpose.msra.mxu0 0.0
        %2738 = vmatpush.xpose.msra.mxu0 0.0
        %2739 = vmatpush.xpose.msra.mxu0 0.0
        %2740 = vmatpush.xpose.msra.mxu0 %v2723
        %2741 = vmatmul.f32.gmra.mxu0 %v2515
        %v2742 = vpop.f32.mrf.mxu0
        %v2743 = vadd.f32 0.0, %v2742
        %2744 = vdwg.mxu0
        %v2746 = vsel %vm2397, %v1660, 0
        %2748 = vmatpush.xpose.msra.mxu0 0.0
        %2749 = vmatpush.xpose.msra.mxu0 0.0
        %2750 = vmatpush.xpose.msra.mxu0 0.0
        %2751 = vmatpush.xpose.msra.mxu0 0.0
        %2752 = vmatpush.xpose.msra.mxu0 0.0
        %2753 = vmatpush.xpose.msra.mxu0 0.0
        %2754 = vmatpush.xpose.msra.mxu0 0.0
        %2755 = vmatpush.xpose.msra.mxu0 0.0
        %2756 = vmatpush.xpose.msra.mxu0 0.0
        %2757 = vmatpush.xpose.msra.mxu0 0.0
        %2758 = vmatpush.xpose.msra.mxu0 0.0
        %2759 = vmatpush.xpose.msra.mxu0 0.0
        %2760 = vmatpush.xpose.msra.mxu0 0.0
        %2761 = vmatpush.xpose.msra.mxu0 0.0
        %2762 = vmatpush.xpose.msra.mxu0 0.0
        %2763 = vmatpush.xpose.msra.mxu0 %v2746
        %2764 = vmatmul.f32.gmra.mxu0 %v2544
        %v2765 = vpop.f32.mrf.mxu0
        %v2766 = vadd.f32 0.0, %v2765
        %2767 = vdwg.mxu0
        %v2769 = vsel %vm2397, %v1662, 0
        %2771 = vmatpush.xpose.msra.mxu0 0.0
        %2772 = vmatpush.xpose.msra.mxu0 0.0
        %2773 = vmatpush.xpose.msra.mxu0 0.0
        %2774 = vmatpush.xpose.msra.mxu0 0.0
        %2775 = vmatpush.xpose.msra.mxu0 0.0
        %2776 = vmatpush.xpose.msra.mxu0 0.0
        %2777 = vmatpush.xpose.msra.mxu0 0.0
        %2778 = vmatpush.xpose.msra.mxu0 0.0
        %2779 = vmatpush.xpose.msra.mxu0 0.0
        %2780 = vmatpush.xpose.msra.mxu0 0.0
        %2781 = vmatpush.xpose.msra.mxu0 0.0
        %2782 = vmatpush.xpose.msra.mxu0 0.0
        %2783 = vmatpush.xpose.msra.mxu0 0.0
        %2784 = vmatpush.xpose.msra.mxu0 0.0
        %2785 = vmatpush.xpose.msra.mxu0 0.0
        %2786 = vmatpush.xpose.msra.mxu0 %v2769
        %2787 = vmatmul.f32.gmra.mxu0 %v2573
        %v2788 = vpop.f32.mrf.mxu0
        %v2789 = vadd.f32 0.0, %v2788
        %2790 = vdwg.mxu0
        %v2792 = vsel %vm2397, %v1664, 0
        %2794 = vmatpush.xpose.msra.mxu0 0.0
        %2795 = vmatpush.xpose.msra.mxu0 0.0
        %2796 = vmatpush.xpose.msra.mxu0 0.0
        %2797 = vmatpush.xpose.msra.mxu0 0.0
        %2798 = vmatpush.xpose.msra.mxu0 0.0
        %2799 = vmatpush.xpose.msra.mxu0 0.0
        %2800 = vmatpush.xpose.msra.mxu0 0.0
        %2801 = vmatpush.xpose.msra.mxu0 0.0
        %2802 = vmatpush.xpose.msra.mxu0 0.0
        %2803 = vmatpush.xpose.msra.mxu0 0.0
        %2804 = vmatpush.xpose.msra.mxu0 0.0
        %2805 = vmatpush.xpose.msra.mxu0 0.0
        %2806 = vmatpush.xpose.msra.mxu0 0.0
        %2807 = vmatpush.xpose.msra.mxu0 0.0
        %2808 = vmatpush.xpose.msra.mxu0 0.0
        %2809 = vmatpush.xpose.msra.mxu0 %v2792
        %2810 = vmatmul.f32.gmra.mxu0 %v2602
        %v2811 = vpop.f32.mrf.mxu0
        %v2812 = vadd.f32 0.0, %v2811
        %2813 = vdwg.mxu0
        %vm2814 = vcmask 130048
        %v2815 = vsel %vm2814, %v2425, -inf
        %2816 = vmax.xlane.f32.xlu0 %v2815
        %v2817 = vpop.xlane.xlu0 %2816
        %v2818 = vsel %vm2814, %v2454, -inf
        %2819 = vmax.xlane.f32.xlu0 %v2818
        %v2820 = vpop.xlane.xlu0 %2819
        %v2821 = vsel %vm2814, %v2483, -inf
        %2822 = vmax.xlane.f32.xlu0 %v2821
        %v2823 = vpop.xlane.xlu0 %2822
        %v2824 = vsel %vm2814, %v2512, -inf
        %2825 = vmax.xlane.f32.xlu0 %v2824
        %v2826 = vpop.xlane.xlu0 %2825
        %v2827 = vsel %vm2814, %v2541, -inf
        %2828 = vmax.xlane.f32.xlu0 %v2827
        %v2829 = vpop.xlane.xlu0 %2828
        %v2830 = vsel %vm2814, %v2570, -inf
        %2831 = vmax.xlane.f32.xlu0 %v2830
        %v2832 = vpop.xlane.xlu0 %2831
        %v2833 = vsel %vm2814, %v2599, -inf
        %2834 = vmax.xlane.f32.xlu0 %v2833
        %v2835 = vpop.xlane.xlu0 %2834
        %v2836 = vsel %vm2814, %v2628, -inf
        %2837 = vmax.xlane.f32.xlu0 %v2836
        %v2838 = vpop.xlane.xlu0 %2837
        %v2839 = vsel %vm2397, %v2651, -inf
        %2840 = vmax.xlane.f32.xlu0 %v2839
        %v2841 = vpop.xlane.xlu0 %2840
        %v2842 = vsel %vm2397, %v2674, -inf
        %2843 = vmax.xlane.f32.xlu0 %v2842
        %v2844 = vpop.xlane.xlu0 %2843
        %v2845 = vsel %vm2397, %v2697, -inf
        %2846 = vmax.xlane.f32.xlu0 %v2845
        %v2847 = vpop.xlane.xlu0 %2846
        %v2848 = vsel %vm2397, %v2720, -inf
        %2849 = vmax.xlane.f32.xlu0 %v2848
        %v2850 = vpop.xlane.xlu0 %2849
        %v2851 = vsel %vm2397, %v2743, -inf
        %2852 = vmax.xlane.f32.xlu0 %v2851
        %v2853 = vpop.xlane.xlu0 %2852
        %v2854 = vsel %vm2397, %v2766, -inf
        %2855 = vmax.xlane.f32.xlu0 %v2854
        %v2856 = vpop.xlane.xlu0 %2855
        %v2857 = vsel %vm2397, %v2789, -inf
        %2858 = vmax.xlane.f32.xlu0 %v2857
        %v2859 = vpop.xlane.xlu0 %2858
        %v2860 = vsel %vm2397, %v2812, -inf
        %2861 = vmax.xlane.f32.xlu0 %v2860
        %v2862 = vpop.xlane.xlu0 %2861
        %v2863 = vmax.f32 %v2817, %v2841
        %v2864 = vmax.f32 %v2820, %v2844
        %v2865 = vmax.f32 %v2823, %v2847
        %v2866 = vmax.f32 %v2826, %v2850
        %v2867 = vmax.f32 %v2829, %v2853
        %v2868 = vmax.f32 %v2832, %v2856
        %v2869 = vmax.f32 %v2835, %v2859
        %v2870 = vmax.f32 %v2838, %v2862
        %v2871 = vsub.f32 %v2425, %v2863
        %v2872 = vsub.f32 %v2454, %v2864
        %v2873 = vsub.f32 %v2483, %v2865
        %v2874 = vsub.f32 %v2512, %v2866
        %v2875 = vsub.f32 %v2541, %v2867
        %v2876 = vsub.f32 %v2570, %v2868
        %v2877 = vsub.f32 %v2599, %v2869
        %v2878 = vsub.f32 %v2628, %v2870
        %v2879 = vmul.f32 %v2871, 1.442695
        %v2880 = vpow.pop %v2879
        %v2881 = vmul.f32 %v2872, 1.442695
        %v2882 = vpow.pop %v2881
        %v2883 = vmul.f32 %v2873, 1.442695
        %v2884 = vpow.pop %v2883
        %v2885 = vmul.f32 %v2874, 1.442695
        %v2886 = vpow.pop %v2885
        %v2887 = vmul.f32 %v2875, 1.442695
        %v2888 = vpow.pop %v2887
        %v2889 = vmul.f32 %v2876, 1.442695
        %v2890 = vpow.pop %v2889
        %v2891 = vmul.f32 %v2877, 1.442695
        %v2892 = vpow.pop %v2891
        %v2893 = vmul.f32 %v2878, 1.442695
        %v2894 = vpow.pop %v2893
        %v2895 = vsub.f32 %v2651, %v2863
        %v2896 = vsub.f32 %v2674, %v2864
        %v2897 = vsub.f32 %v2697, %v2865
        %v2898 = vsub.f32 %v2720, %v2866
        %v2899 = vsub.f32 %v2743, %v2867
        %v2900 = vsub.f32 %v2766, %v2868
        %v2901 = vsub.f32 %v2789, %v2869
        %v2902 = vsub.f32 %v2812, %v2870
        %v2903 = vmul.f32 %v2895, 1.442695
        %v2904 = vpow.pop %v2903
        %v2905 = vmul.f32 %v2896, 1.442695
        %v2906 = vpow.pop %v2905
        %v2907 = vmul.f32 %v2897, 1.442695
        %v2908 = vpow.pop %v2907
        %v2909 = vmul.f32 %v2898, 1.442695
        %v2910 = vpow.pop %v2909
        %v2911 = vmul.f32 %v2899, 1.442695
        %v2912 = vpow.pop %v2911
        %v2913 = vmul.f32 %v2900, 1.442695
        %v2914 = vpow.pop %v2913
        %v2915 = vmul.f32 %v2901, 1.442695
        %v2916 = vpow.pop %v2915
        %v2917 = vmul.f32 %v2902, 1.442695
        %v2918 = vpow.pop %v2917
        %v2919 = vsel %vm2814, %v2880, 0.0
        %2920 = vadd.xlane.f32.xlu0 %v2919
        %v2921 = vpop.xlane.xlu0 %2920
        %v2922 = vsel %vm2814, %v2882, 0.0
        %2923 = vadd.xlane.f32.xlu0 %v2922
        %v2924 = vpop.xlane.xlu0 %2923
        %v2925 = vsel %vm2814, %v2884, 0.0
        %2926 = vadd.xlane.f32.xlu0 %v2925
        %v2927 = vpop.xlane.xlu0 %2926
        %v2928 = vsel %vm2814, %v2886, 0.0
        %2929 = vadd.xlane.f32.xlu0 %v2928
        %v2930 = vpop.xlane.xlu0 %2929
        %v2931 = vsel %vm2814, %v2888, 0.0
        %2932 = vadd.xlane.f32.xlu0 %v2931
        %v2933 = vpop.xlane.xlu0 %2932
        %v2934 = vsel %vm2814, %v2890, 0.0
        %2935 = vadd.xlane.f32.xlu0 %v2934
        %v2936 = vpop.xlane.xlu0 %2935
        %v2937 = vsel %vm2814, %v2892, 0.0
        %2938 = vadd.xlane.f32.xlu0 %v2937
        %v2939 = vpop.xlane.xlu0 %2938
        %v2940 = vsel %vm2814, %v2894, 0.0
        %2941 = vadd.xlane.f32.xlu0 %v2940
        %v2942 = vpop.xlane.xlu0 %2941
        %v2943 = vsel %vm2397, %v2904, 0.0
        %2944 = vadd.xlane.f32.xlu0 %v2943
        %v2945 = vpop.xlane.xlu0 %2944
        %v2946 = vsel %vm2397, %v2906, 0.0
        %2947 = vadd.xlane.f32.xlu0 %v2946
        %v2948 = vpop.xlane.xlu0 %2947
        %v2949 = vsel %vm2397, %v2908, 0.0
        %2950 = vadd.xlane.f32.xlu0 %v2949
        %v2951 = vpop.xlane.xlu0 %2950
        %v2952 = vsel %vm2397, %v2910, 0.0
        %2953 = vadd.xlane.f32.xlu0 %v2952
        %v2954 = vpop.xlane.xlu0 %2953
        %v2955 = vsel %vm2397, %v2912, 0.0
        %2956 = vadd.xlane.f32.xlu0 %v2955
        %v2957 = vpop.xlane.xlu0 %2956
        %v2958 = vsel %vm2397, %v2914, 0.0
        %2959 = vadd.xlane.f32.xlu0 %v2958
        %v2960 = vpop.xlane.xlu0 %2959
        %v2961 = vsel %vm2397, %v2916, 0.0
        %2962 = vadd.xlane.f32.xlu0 %v2961
        %v2963 = vpop.xlane.xlu0 %2962
        %v2964 = vsel %vm2397, %v2918, 0.0
        %2965 = vadd.xlane.f32.xlu0 %v2964
        %v2966 = vpop.xlane.xlu0 %2965
        %v2967 = vadd.f32 %v2921, %v2945
        %v2968 = vadd.f32 %v2924, %v2948
        %v2969 = vadd.f32 %v2927, %v2951
        %v2970 = vadd.f32 %v2930, %v2954
        %v2971 = vadd.f32 %v2933, %v2957
        %v2972 = vadd.f32 %v2936, %v2960
        %v2973 = vadd.f32 %v2939, %v2963
        %v2974 = vadd.f32 %v2942, %v2966
        %v2975 = vrcp.pop %v2967
        %v2976 = vrcp.pop %v2968
        %v2977 = vrcp.pop %v2969
        %v2978 = vrcp.pop %v2970
        %v2979 = vrcp.pop %v2971
        %v2980 = vrcp.pop %v2972
        %v2981 = vrcp.pop %v2973
        %v2982 = vrcp.pop %v2974
        %v2984 = vsel %vm2397, %v2904, 0
        %2986 = vmatpush.msra.mxu0 0.0
        %2987 = vmatpush.msra.mxu0 0.0
        %2988 = vmatpush.msra.mxu0 0.0
        %2989 = vmatpush.msra.mxu0 0.0
        %2990 = vmatpush.msra.mxu0 0.0
        %2991 = vmatpush.msra.mxu0 0.0
        %2992 = vmatpush.msra.mxu0 0.0
        %2993 = vmatpush.msra.mxu0 0.0
        %2994 = vmatpush.msra.mxu0 0.0
        %2995 = vmatpush.msra.mxu0 0.0
        %2996 = vmatpush.msra.mxu0 0.0
        %2997 = vmatpush.msra.mxu0 0.0
        %2998 = vmatpush.msra.mxu0 0.0
        %2999 = vmatpush.msra.mxu0 0.0
        %3000 = vmatpush.msra.mxu0 0.0
        %3001 = vmatpush.msra.mxu0 %v2336
        %3002 = vmatmul.f32.gmra.mxu0 %v2984
        %v3003 = vpop.f32.mrf.mxu0
        %v3004 = vadd.f32 0.0, %v3003
        %3005 = vdwg.mxu0
        %v3007 = vsel %vm2397, %v2906, 0
        %3009 = vmatpush.msra.mxu0 0.0
        %3010 = vmatpush.msra.mxu0 0.0
        %3011 = vmatpush.msra.mxu0 0.0
        %3012 = vmatpush.msra.mxu0 0.0
        %3013 = vmatpush.msra.mxu0 0.0
        %3014 = vmatpush.msra.mxu0 0.0
        %3015 = vmatpush.msra.mxu0 0.0
        %3016 = vmatpush.msra.mxu0 0.0
        %3017 = vmatpush.msra.mxu0 0.0
        %3018 = vmatpush.msra.mxu0 0.0
        %3019 = vmatpush.msra.mxu0 0.0
        %3020 = vmatpush.msra.mxu0 0.0
        %3021 = vmatpush.msra.mxu0 0.0
        %3022 = vmatpush.msra.mxu0 0.0
        %3023 = vmatpush.msra.mxu0 0.0
        %3024 = vmatpush.msra.mxu0 %v2338
        %3025 = vmatmul.f32.gmra.mxu0 %v3007
        %v3026 = vpop.f32.mrf.mxu0
        %v3027 = vadd.f32 0.0, %v3026
        %3028 = vdwg.mxu0
        %v3030 = vsel %vm2397, %v2908, 0
        %3032 = vmatpush.msra.mxu0 0.0
        %3033 = vmatpush.msra.mxu0 0.0
        %3034 = vmatpush.msra.mxu0 0.0
        %3035 = vmatpush.msra.mxu0 0.0
        %3036 = vmatpush.msra.mxu0 0.0
        %3037 = vmatpush.msra.mxu0 0.0
        %3038 = vmatpush.msra.mxu0 0.0
        %3039 = vmatpush.msra.mxu0 0.0
        %3040 = vmatpush.msra.mxu0 0.0
        %3041 = vmatpush.msra.mxu0 0.0
        %3042 = vmatpush.msra.mxu0 0.0
        %3043 = vmatpush.msra.mxu0 0.0
        %3044 = vmatpush.msra.mxu0 0.0
        %3045 = vmatpush.msra.mxu0 0.0
        %3046 = vmatpush.msra.mxu0 0.0
        %3047 = vmatpush.msra.mxu0 %v2340
        %3048 = vmatmul.f32.gmra.mxu0 %v3030
        %v3049 = vpop.f32.mrf.mxu0
        %v3050 = vadd.f32 0.0, %v3049
        %3051 = vdwg.mxu0
        %v3053 = vsel %vm2397, %v2910, 0
        %3055 = vmatpush.msra.mxu0 0.0
        %3056 = vmatpush.msra.mxu0 0.0
        %3057 = vmatpush.msra.mxu0 0.0
        %3058 = vmatpush.msra.mxu0 0.0
        %3059 = vmatpush.msra.mxu0 0.0
        %3060 = vmatpush.msra.mxu0 0.0
        %3061 = vmatpush.msra.mxu0 0.0
        %3062 = vmatpush.msra.mxu0 0.0
        %3063 = vmatpush.msra.mxu0 0.0
        %3064 = vmatpush.msra.mxu0 0.0
        %3065 = vmatpush.msra.mxu0 0.0
        %3066 = vmatpush.msra.mxu0 0.0
        %3067 = vmatpush.msra.mxu0 0.0
        %3068 = vmatpush.msra.mxu0 0.0
        %3069 = vmatpush.msra.mxu0 0.0
        %3070 = vmatpush.msra.mxu0 %v2342
        %3071 = vmatmul.f32.gmra.mxu0 %v3053
        %v3072 = vpop.f32.mrf.mxu0
        %v3073 = vadd.f32 0.0, %v3072
        %3074 = vdwg.mxu0
        %v3076 = vsel %vm2397, %v2912, 0
        %3078 = vmatpush.msra.mxu0 0.0
        %3079 = vmatpush.msra.mxu0 0.0
        %3080 = vmatpush.msra.mxu0 0.0
        %3081 = vmatpush.msra.mxu0 0.0
        %3082 = vmatpush.msra.mxu0 0.0
        %3083 = vmatpush.msra.mxu0 0.0
        %3084 = vmatpush.msra.mxu0 0.0
        %3085 = vmatpush.msra.mxu0 0.0
        %3086 = vmatpush.msra.mxu0 0.0
        %3087 = vmatpush.msra.mxu0 0.0
        %3088 = vmatpush.msra.mxu0 0.0
        %3089 = vmatpush.msra.mxu0 0.0
        %3090 = vmatpush.msra.mxu0 0.0
        %3091 = vmatpush.msra.mxu0 0.0
        %3092 = vmatpush.msra.mxu0 0.0
        %3093 = vmatpush.msra.mxu0 %v2390
        %3094 = vmatmul.f32.gmra.mxu0 %v3076
        %v3095 = vpop.f32.mrf.mxu0
        %v3096 = vadd.f32 0.0, %v3095
        %3097 = vdwg.mxu0
        %v3099 = vsel %vm2397, %v2914, 0
        %3101 = vmatpush.msra.mxu0 0.0
        %3102 = vmatpush.msra.mxu0 0.0
        %3103 = vmatpush.msra.mxu0 0.0
        %3104 = vmatpush.msra.mxu0 0.0
        %3105 = vmatpush.msra.mxu0 0.0
        %3106 = vmatpush.msra.mxu0 0.0
        %3107 = vmatpush.msra.mxu0 0.0
        %3108 = vmatpush.msra.mxu0 0.0
        %3109 = vmatpush.msra.mxu0 0.0
        %3110 = vmatpush.msra.mxu0 0.0
        %3111 = vmatpush.msra.mxu0 0.0
        %3112 = vmatpush.msra.mxu0 0.0
        %3113 = vmatpush.msra.mxu0 0.0
        %3114 = vmatpush.msra.mxu0 0.0
        %3115 = vmatpush.msra.mxu0 0.0
        %3116 = vmatpush.msra.mxu0 %v2392
        %3117 = vmatmul.f32.gmra.mxu0 %v3099
        %v3118 = vpop.f32.mrf.mxu0
        %v3119 = vadd.f32 0.0, %v3118
        %3120 = vdwg.mxu0
        %v3122 = vsel %vm2397, %v2916, 0
        %3124 = vmatpush.msra.mxu0 0.0
        %3125 = vmatpush.msra.mxu0 0.0
        %3126 = vmatpush.msra.mxu0 0.0
        %3127 = vmatpush.msra.mxu0 0.0
        %3128 = vmatpush.msra.mxu0 0.0
        %3129 = vmatpush.msra.mxu0 0.0
        %3130 = vmatpush.msra.mxu0 0.0
        %3131 = vmatpush.msra.mxu0 0.0
        %3132 = vmatpush.msra.mxu0 0.0
        %3133 = vmatpush.msra.mxu0 0.0
        %3134 = vmatpush.msra.mxu0 0.0
        %3135 = vmatpush.msra.mxu0 0.0
        %3136 = vmatpush.msra.mxu0 0.0
        %3137 = vmatpush.msra.mxu0 0.0
        %3138 = vmatpush.msra.mxu0 0.0
        %3139 = vmatpush.msra.mxu0 %v2394
        %3140 = vmatmul.f32.gmra.mxu0 %v3122
        %v3141 = vpop.f32.mrf.mxu0
        %v3142 = vadd.f32 0.0, %v3141
        %3143 = vdwg.mxu0
        %v3145 = vsel %vm2397, %v2918, 0
        %3147 = vmatpush.msra.mxu0 0.0
        %3148 = vmatpush.msra.mxu0 0.0
        %3149 = vmatpush.msra.mxu0 0.0
        %3150 = vmatpush.msra.mxu0 0.0
        %3151 = vmatpush.msra.mxu0 0.0
        %3152 = vmatpush.msra.mxu0 0.0
        %3153 = vmatpush.msra.mxu0 0.0
        %3154 = vmatpush.msra.mxu0 0.0
        %3155 = vmatpush.msra.mxu0 0.0
        %3156 = vmatpush.msra.mxu0 0.0
        %3157 = vmatpush.msra.mxu0 0.0
        %3158 = vmatpush.msra.mxu0 0.0
        %3159 = vmatpush.msra.mxu0 0.0
        %3160 = vmatpush.msra.mxu0 0.0
        %3161 = vmatpush.msra.mxu0 0.0
        %3162 = vmatpush.msra.mxu0 %v2396
        %3163 = vmatmul.f32.gmra.mxu0 %v3145
        %v3164 = vpop.f32.mrf.mxu0
        %v3165 = vadd.f32 0.0, %v3164
        %3166 = vdwg.mxu0
        %v3168 = vsel %vm2814, %v2880, 0
        %3170 = vmatpush.msra.mxu0 0.0
        %3171 = vmatpush.msra.mxu0 0.0
        %3172 = vmatpush.msra.mxu0 0.0
        %3173 = vmatpush.msra.mxu0 0.0
        %3174 = vmatpush.msra.mxu0 0.0
        %3175 = vmatpush.msra.mxu0 0.0
        %3176 = vmatpush.msra.mxu0 0.0
        %3177 = vmatpush.msra.mxu0 0.0
        %3178 = vmatpush.msra.mxu0 0.0
        %3179 = vmatpush.msra.mxu0 0.0
        %3180 = vmatpush.msra.mxu0 0.0
        %3181 = vmatpush.msra.mxu0 0.0
        %3182 = vmatpush.msra.mxu0 0.0
        %3183 = vmatpush.msra.mxu0 0.0
        %3184 = vmatpush.msra.mxu0 %v2038
        %3185 = vmatpush.msra.mxu0 %v1984
        %3186 = vmatmul.f32.gmra.mxu0 %v3168
        %v3187 = vpop.f32.mrf.mxu0
        %v3188 = vadd.f32 %v3004, %v3187
        %3189 = vdwg.mxu0
        %v3191 = vsel %vm2814, %v2882, 0
        %3193 = vmatpush.msra.mxu0 0.0
        %3194 = vmatpush.msra.mxu0 0.0
        %3195 = vmatpush.msra.mxu0 0.0
        %3196 = vmatpush.msra.mxu0 0.0
        %3197 = vmatpush.msra.mxu0 0.0
        %3198 = vmatpush.msra.mxu0 0.0
        %3199 = vmatpush.msra.mxu0 0.0
        %3200 = vmatpush.msra.mxu0 0.0
        %3201 = vmatpush.msra.mxu0 0.0
        %3202 = vmatpush.msra.mxu0 0.0
        %3203 = vmatpush.msra.mxu0 0.0
        %3204 = vmatpush.msra.mxu0 0.0
        %3205 = vmatpush.msra.mxu0 0.0
        %3206 = vmatpush.msra.mxu0 0.0
        %3207 = vmatpush.msra.mxu0 %v2040
        %3208 = vmatpush.msra.mxu0 %v1986
        %3209 = vmatmul.f32.gmra.mxu0 %v3191
        %v3210 = vpop.f32.mrf.mxu0
        %v3211 = vadd.f32 %v3027, %v3210
        %3212 = vdwg.mxu0
        %v3214 = vsel %vm2814, %v2884, 0
        %3216 = vmatpush.msra.mxu0 0.0
        %3217 = vmatpush.msra.mxu0 0.0
        %3218 = vmatpush.msra.mxu0 0.0
        %3219 = vmatpush.msra.mxu0 0.0
        %3220 = vmatpush.msra.mxu0 0.0
        %3221 = vmatpush.msra.mxu0 0.0
        %3222 = vmatpush.msra.mxu0 0.0
        %3223 = vmatpush.msra.mxu0 0.0
        %3224 = vmatpush.msra.mxu0 0.0
        %3225 = vmatpush.msra.mxu0 0.0
        %3226 = vmatpush.msra.mxu0 0.0
        %3227 = vmatpush.msra.mxu0 0.0
        %3228 = vmatpush.msra.mxu0 0.0
        %3229 = vmatpush.msra.mxu0 0.0
        %3230 = vmatpush.msra.mxu0 %v2042
        %3231 = vmatpush.msra.mxu0 %v1988
        %3232 = vmatmul.f32.gmra.mxu0 %v3214
        %v3233 = vpop.f32.mrf.mxu0
        %v3234 = vadd.f32 %v3050, %v3233
        %3235 = vdwg.mxu0
        %v3237 = vsel %vm2814, %v2886, 0
        %3239 = vmatpush.msra.mxu0 0.0
        %3240 = vmatpush.msra.mxu0 0.0
        %3241 = vmatpush.msra.mxu0 0.0
        %3242 = vmatpush.msra.mxu0 0.0
        %3243 = vmatpush.msra.mxu0 0.0
        %3244 = vmatpush.msra.mxu0 0.0
        %3245 = vmatpush.msra.mxu0 0.0
        %3246 = vmatpush.msra.mxu0 0.0
        %3247 = vmatpush.msra.mxu0 0.0
        %3248 = vmatpush.msra.mxu0 0.0
        %3249 = vmatpush.msra.mxu0 0.0
        %3250 = vmatpush.msra.mxu0 0.0
        %3251 = vmatpush.msra.mxu0 0.0
        %3252 = vmatpush.msra.mxu0 0.0
        %3253 = vmatpush.msra.mxu0 %v2044
        %3254 = vmatpush.msra.mxu0 %v1990
        %3255 = vmatmul.f32.gmra.mxu0 %v3237
        %v3256 = vpop.f32.mrf.mxu0
        %v3257 = vadd.f32 %v3073, %v3256
        %3258 = vdwg.mxu0
        %v3260 = vsel %vm2814, %v2888, 0
        %3262 = vmatpush.msra.mxu0 0.0
        %3263 = vmatpush.msra.mxu0 0.0
        %3264 = vmatpush.msra.mxu0 0.0
        %3265 = vmatpush.msra.mxu0 0.0
        %3266 = vmatpush.msra.mxu0 0.0
        %3267 = vmatpush.msra.mxu0 0.0
        %3268 = vmatpush.msra.mxu0 0.0
        %3269 = vmatpush.msra.mxu0 0.0
        %3270 = vmatpush.msra.mxu0 0.0
        %3271 = vmatpush.msra.mxu0 0.0
        %3272 = vmatpush.msra.mxu0 0.0
        %3273 = vmatpush.msra.mxu0 0.0
        %3274 = vmatpush.msra.mxu0 0.0
        %3275 = vmatpush.msra.mxu0 0.0
        %3276 = vmatpush.msra.mxu0 %v2146
        %3277 = vmatpush.msra.mxu0 %v2092
        %3278 = vmatmul.f32.gmra.mxu0 %v3260
        %v3279 = vpop.f32.mrf.mxu0
        %v3280 = vadd.f32 %v3096, %v3279
        %3281 = vdwg.mxu0
        %v3283 = vsel %vm2814, %v2890, 0
        %3285 = vmatpush.msra.mxu0 0.0
        %3286 = vmatpush.msra.mxu0 0.0
        %3287 = vmatpush.msra.mxu0 0.0
        %3288 = vmatpush.msra.mxu0 0.0
        %3289 = vmatpush.msra.mxu0 0.0
        %3290 = vmatpush.msra.mxu0 0.0
        %3291 = vmatpush.msra.mxu0 0.0
        %3292 = vmatpush.msra.mxu0 0.0
        %3293 = vmatpush.msra.mxu0 0.0
        %3294 = vmatpush.msra.mxu0 0.0
        %3295 = vmatpush.msra.mxu0 0.0
        %3296 = vmatpush.msra.mxu0 0.0
        %3297 = vmatpush.msra.mxu0 0.0
        %3298 = vmatpush.msra.mxu0 0.0
        %3299 = vmatpush.msra.mxu0 %v2148
        %3300 = vmatpush.msra.mxu0 %v2094
        %3301 = vmatmul.f32.gmra.mxu0 %v3283
        %v3302 = vpop.f32.mrf.mxu0
        %v3303 = vadd.f32 %v3119, %v3302
        %3304 = vdwg.mxu0
        %v3306 = vsel %vm2814, %v2892, 0
        %3308 = vmatpush.msra.mxu0 0.0
        %3309 = vmatpush.msra.mxu0 0.0
        %3310 = vmatpush.msra.mxu0 0.0
        %3311 = vmatpush.msra.mxu0 0.0
        %3312 = vmatpush.msra.mxu0 0.0
        %3313 = vmatpush.msra.mxu0 0.0
        %3314 = vmatpush.msra.mxu0 0.0
        %3315 = vmatpush.msra.mxu0 0.0
        %3316 = vmatpush.msra.mxu0 0.0
        %3317 = vmatpush.msra.mxu0 0.0
        %3318 = vmatpush.msra.mxu0 0.0
        %3319 = vmatpush.msra.mxu0 0.0
        %3320 = vmatpush.msra.mxu0 0.0
        %3321 = vmatpush.msra.mxu0 0.0
        %3322 = vmatpush.msra.mxu0 %v2150
        %3323 = vmatpush.msra.mxu0 %v2096
        %3324 = vmatmul.f32.gmra.mxu0 %v3306
        %v3325 = vpop.f32.mrf.mxu0
        %v3326 = vadd.f32 %v3142, %v3325
        %3327 = vdwg.mxu0
        %v3329 = vsel %vm2814, %v2894, 0
        %3331 = vmatpush.msra.mxu0 0.0
        %3332 = vmatpush.msra.mxu0 0.0
        %3333 = vmatpush.msra.mxu0 0.0
        %3334 = vmatpush.msra.mxu0 0.0
        %3335 = vmatpush.msra.mxu0 0.0
        %3336 = vmatpush.msra.mxu0 0.0
        %3337 = vmatpush.msra.mxu0 0.0
        %3338 = vmatpush.msra.mxu0 0.0
        %3339 = vmatpush.msra.mxu0 0.0
        %3340 = vmatpush.msra.mxu0 0.0
        %3341 = vmatpush.msra.mxu0 0.0
        %3342 = vmatpush.msra.mxu0 0.0
        %3343 = vmatpush.msra.mxu0 0.0
        %3344 = vmatpush.msra.mxu0 0.0
        %3345 = vmatpush.msra.mxu0 %v2152
        %3346 = vmatpush.msra.mxu0 %v2098
        %3347 = vmatmul.f32.gmra.mxu0 %v3329
        %v3348 = vpop.f32.mrf.mxu0
        %v3349 = vadd.f32 %v3165, %v3348
        %3350 = vdwg.mxu0
        %v3351 = vmul.f32 %v3188, %v2975
        %v3352 = vmul.f32 %v3211, %v2976
        %v3353 = vmul.f32 %v3234, %v2977
        %v3354 = vmul.f32 %v3257, %v2978
        %v3355 = vmul.f32 %v3280, %v2979
        %v3356 = vmul.f32 %v3303, %v2980
        %v3357 = vmul.f32 %v3326, %v2981
        %v3358 = vmul.f32 %v3349, %v2982
        %v3359 = vrot.slane %v3353, 4
        %v3360 = vsel %vm721, %v3359, %v3351
        %v3361 = vrot.slane %v3351, 4
        %v3362 = vsel %vm721, %v3353, %v3361
        %v3364 = vunpack.c.l.s4 1983009808
        %v3365 = vunpack.c.0.s8 %v3364
        %v3366 = vperm.slane %v3360, %v3365
        %v3368 = vunpack.c.l.s4 1983009808
        %v3369 = vunpack.c.0.s8 %v3368
        %v3370 = vperm.slane %v3362, %v3369
        %v3371 = vrot.slane %v3354, 4
        %v3372 = vsel %vm721, %v3371, %v3352
        %v3373 = vrot.slane %v3352, 4
        %v3374 = vsel %vm721, %v3354, %v3373
        %v3376 = vunpack.c.l.s4 1983009808
        %v3377 = vunpack.c.0.s8 %v3376
        %v3378 = vperm.slane %v3372, %v3377
        %v3380 = vunpack.c.l.s4 1983009808
        %v3381 = vunpack.c.0.s8 %v3380
        %v3382 = vperm.slane %v3374, %v3381
        %v3383 = vrot.slane %v3378, 4
        %v3384 = vsel %vm721, %v3383, %v3366
        %v3385 = vrot.slane %v3366, 4
        %v3386 = vsel %vm721, %v3378, %v3385
        %v3388 = vunpack.c.l.s4 1934713408
        %v3389 = vunpack.c.0.s8 %v3388
        %v3390 = vperm.slane %v3384, %v3389
        %v3392 = vunpack.c.l.s4 1934713408
        %v3393 = vunpack.c.0.s8 %v3392
        %v3394 = vperm.slane %v3386, %v3393
        %v3395 = vrot.slane %v3382, 4
        %v3396 = vsel %vm721, %v3395, %v3370
        %v3397 = vrot.slane %v3370, 4
        %v3398 = vsel %vm721, %v3382, %v3397
        %v3400 = vunpack.c.l.s4 1934713408
        %v3401 = vunpack.c.0.s8 %v3400
        %v3402 = vperm.slane %v3396, %v3401
        %v3404 = vunpack.c.l.s4 1934713408
        %v3405 = vunpack.c.0.s8 %v3404
        %v3406 = vperm.slane %v3398, %v3405
        %v3407 = vrot.slane %v3390, 4
        %v3408 = vsel %vm721, 0.0, %v3407
        %v3409 = vrot.slane %v3394, 4
        %v3410 = vsel %vm721, 0.0, %v3409
        %v3411 = vrot.slane %v3402, 4
        %v3412 = vsel %vm721, 0.0, %v3411
        %v3413 = vrot.slane %v3406, 4
        %v3414 = vsel %vm721, 0.0, %v3413
        %v3415 = vrot.slane %v3357, 4
        %v3416 = vsel %vm721, %v3415, %v3355
        %v3417 = vrot.slane %v3355, 4
        %v3418 = vsel %vm721, %v3357, %v3417
        %v3420 = vunpack.c.l.s4 1983009808
        %v3421 = vunpack.c.0.s8 %v3420
        %v3422 = vperm.slane %v3416, %v3421
        %v3424 = vunpack.c.l.s4 1983009808
        %v3425 = vunpack.c.0.s8 %v3424
        %v3426 = vperm.slane %v3418, %v3425
        %v3427 = vrot.slane %v3358, 4
        %v3428 = vsel %vm721, %v3427, %v3356
        %v3429 = vrot.slane %v3356, 4
        %v3430 = vsel %vm721, %v3358, %v3429
        %v3432 = vunpack.c.l.s4 1983009808
        %v3433 = vunpack.c.0.s8 %v3432
        %v3434 = vperm.slane %v3428, %v3433
        %v3436 = vunpack.c.l.s4 1983009808
        %v3437 = vunpack.c.0.s8 %v3436
        %v3438 = vperm.slane %v3430, %v3437
        %v3439 = vrot.slane %v3434, 4
        %v3440 = vsel %vm721, %v3439, %v3422
        %v3441 = vrot.slane %v3422, 4
        %v3442 = vsel %vm721, %v3434, %v3441
        %v3444 = vunpack.c.l.s4 1934713408
        %v3445 = vunpack.c.0.s8 %v3444
        %v3446 = vperm.slane %v3440, %v3445
        %v3448 = vunpack.c.l.s4 1934713408
        %v3449 = vunpack.c.0.s8 %v3448
        %v3450 = vperm.slane %v3442, %v3449
        %v3451 = vrot.slane %v3438, 4
        %v3452 = vsel %vm721, %v3451, %v3426
        %v3453 = vrot.slane %v3426, 4
        %v3454 = vsel %vm721, %v3438, %v3453
        %v3456 = vunpack.c.l.s4 1934713408
        %v3457 = vunpack.c.0.s8 %v3456
        %v3458 = vperm.slane %v3452, %v3457
        %v3460 = vunpack.c.l.s4 1934713408
        %v3461 = vunpack.c.0.s8 %v3460
        %v3462 = vperm.slane %v3454, %v3461
        %v3463 = vrot.slane %v3446, 4
        %v3464 = vsel %vm721, 0.0, %v3463
        %v3465 = vrot.slane %v3450, 4
        %v3466 = vsel %vm721, 0.0, %v3465
        %v3467 = vrot.slane %v3458, 4
        %v3468 = vsel %vm721, 0.0, %v3467
        %v3469 = vrot.slane %v3462, 4
        %v3470 = vsel %vm721, 0.0, %v3469
        %v3471 = vsel %vm721, %v3409, %v3390
        %v3473 = vunpack.c.l.s4 1983009808
        %v3474 = vunpack.c.0.s8 %v3473
        %v3475 = vperm.slane %v3471, %v3474
        %v3476 = vrot.slane %v3410, 4
        %v3477 = vsel %vm721, %v3476, %v3408
        %v3479 = vunpack.c.l.s4 1983009808
        %v3480 = vunpack.c.0.s8 %v3479
        %v3481 = vperm.slane %v3477, %v3480
        %v3482 = vsel %vm721, %v3413, %v3402
        %v3484 = vunpack.c.l.s4 1983009808
        %v3485 = vunpack.c.0.s8 %v3484
        %v3486 = vperm.slane %v3482, %v3485
        %v3487 = vrot.slane %v3414, 4
        %v3488 = vsel %vm721, %v3487, %v3412
        %v3490 = vunpack.c.l.s4 1983009808
        %v3491 = vunpack.c.0.s8 %v3490
        %v3492 = vperm.slane %v3488, %v3491
        %v3493 = vrot.slane %v3481, 4
        %v3494 = vsel %vm721, %v3493, %v3475
        %v3495 = vrot.slane %v3475, 4
        %v3496 = vsel %vm721, %v3481, %v3495
        %v3498 = vunpack.c.l.s4 1934713408
        %v3499 = vunpack.c.0.s8 %v3498
        %v3500 = vperm.slane %v3494, %v3499
        %v3502 = vunpack.c.l.s4 1934713408
        %v3503 = vunpack.c.0.s8 %v3502
        %v3504 = vperm.slane %v3496, %v3503
        %v3505 = vrot.slane %v3492, 4
        %v3506 = vsel %vm721, %v3505, %v3486
        %v3507 = vrot.slane %v3486, 4
        %v3508 = vsel %vm721, %v3492, %v3507
        %v3510 = vunpack.c.l.s4 1934713408
        %v3511 = vunpack.c.0.s8 %v3510
        %v3512 = vperm.slane %v3506, %v3511
        %v3514 = vunpack.c.l.s4 1934713408
        %v3515 = vunpack.c.0.s8 %v3514
        %v3516 = vperm.slane %v3508, %v3515
        %v3517 = vrot.slane %v3512, 4
        %v3518 = vsel %vm721, %v3517, %v3500
        %v3519 = vrot.slane %v3500, 4
        %v3520 = vsel %vm721, %v3512, %v3519
        %v3521 = vrot.slane %v3516, 4
        %v3522 = vsel %vm721, %v3521, %v3504
        %v3523 = vrot.slane %v3504, 4
        %v3524 = vsel %vm721, %v3516, %v3523
        %v3525 = vsel %vm721, %v3465, %v3446
        %v3527 = vunpack.c.l.s4 1983009808
        %v3528 = vunpack.c.0.s8 %v3527
        %v3529 = vperm.slane %v3525, %v3528
        %v3530 = vrot.slane %v3466, 4
        %v3531 = vsel %vm721, %v3530, %v3464
        %v3533 = vunpack.c.l.s4 1983009808
        %v3534 = vunpack.c.0.s8 %v3533
        %v3535 = vperm.slane %v3531, %v3534
        %v3536 = vsel %vm721, %v3469, %v3458
        %v3538 = vunpack.c.l.s4 1983009808
        %v3539 = vunpack.c.0.s8 %v3538
        %v3540 = vperm.slane %v3536, %v3539
        %v3541 = vrot.slane %v3470, 4
        %v3542 = vsel %vm721, %v3541, %v3468
        %v3544 = vunpack.c.l.s4 1983009808
        %v3545 = vunpack.c.0.s8 %v3544
        %v3546 = vperm.slane %v3542, %v3545
        %v3547 = vrot.slane %v3535, 4
        %v3548 = vsel %vm721, %v3547, %v3529
        %v3549 = vrot.slane %v3529, 4
        %v3550 = vsel %vm721, %v3535, %v3549
        %v3552 = vunpack.c.l.s4 1934713408
        %v3553 = vunpack.c.0.s8 %v3552
        %v3554 = vperm.slane %v3548, %v3553
        %v3556 = vunpack.c.l.s4 1934713408
        %v3557 = vunpack.c.0.s8 %v3556
        %v3558 = vperm.slane %v3550, %v3557
        %v3559 = vrot.slane %v3546, 4
        %v3560 = vsel %vm721, %v3559, %v3540
        %v3561 = vrot.slane %v3540, 4
        %v3562 = vsel %vm721, %v3546, %v3561
        %v3564 = vunpack.c.l.s4 1934713408
        %v3565 = vunpack.c.0.s8 %v3564
        %v3566 = vperm.slane %v3560, %v3565
        %v3568 = vunpack.c.l.s4 1934713408
        %v3569 = vunpack.c.0.s8 %v3568
        %v3570 = vperm.slane %v3562, %v3569
        %v3571 = vrot.slane %v3566, 4
        %v3572 = vsel %vm721, %v3571, %v3554
        %v3573 = vrot.slane %v3554, 4
        %v3574 = vsel %vm721, %v3566, %v3573
        %v3575 = vrot.slane %v3570, 4
        %v3576 = vsel %vm721, %v3575, %v3558
        %v3577 = vrot.slane %v3558, 4
        %v3578 = vsel %vm721, %v3570, %v3577
        %3581 = vrot.lane.b32.xlu0 %v3520, 8
        %v3582 = vpop.permute.xlu0 %3581
        %3583 = vrot.lane.b32.xlu0 %v3574, 8
        %v3584 = vpop.permute.xlu0 %3583
        %3589 = vrot.lane.b32.xlu0 %v3522, 16
        %v3590 = vpop.permute.xlu0 %3589
        %3591 = vrot.lane.b32.xlu0 %v3576, 16
        %v3592 = vpop.permute.xlu0 %3591
        %3597 = vrot.lane.b32.xlu0 %v3524, 24
        %v3598 = vpop.permute.xlu0 %3597
        %3599 = vrot.lane.b32.xlu0 %v3578, 24
        %v3600 = vpop.permute.xlu0 %3599
        %v3603 = vsel %vm2397, %v3518, %v3582
        %v3604 = vsel %vm2397, %v3572, %v3584
        %v3605 = vsel %vm2814, %v3603, %v3590
        %v3606 = vsel %vm2814, %v3604, %v3592
        %vm3607 = vcmask 195584
        %v3608 = vsel %vm3607, %v3605, %v3598
        %v3609 = vsel %vm3607, %v3606, %v3600
        %v3610 = vld [vmem:[#allocation10] sm:$0xff]
        %v3611 = vld [vmem:[#allocation10 + $0x8] sm:$0xff]
        %v3612 = vld [vmem:[#allocation10 + $0x10] sm:$0xff]
        %v3613 = vld [vmem:[#allocation10 + $0x18] sm:$0xff]
        %v3615 = vsel %vm452, %v3608, 0
        %v3618 = vsel %vm452, %v3609, 0
        %3620 = vmatpush.msra.mxu0 0.0
        %3621 = vmatpush.msra.mxu0 0.0
        %3622 = vmatpush.msra.mxu0 0.0
        %3623 = vmatpush.msra.mxu0 0.0
        %3624 = vmatpush.msra.mxu0 0.0
        %3625 = vmatpush.msra.mxu0 0.0
        %3626 = vmatpush.msra.mxu0 0.0
        %3627 = vmatpush.msra.mxu0 0.0
        %3628 = vmatpush.msra.mxu0 0.0
        %3629 = vmatpush.msra.mxu0 0.0
        %3630 = vmatpush.msra.mxu0 0.0
        %3631 = vmatpush.msra.mxu0 0.0
        %3632 = vmatpush.msra.mxu0 %v3613
        %3633 = vmatpush.msra.mxu0 %v3612
        %3634 = vmatpush.msra.mxu0 %v3611
        %3635 = vmatpush.msra.mxu0 %v3610
        %3636 = vmatmul.f32.gmra.mxu0 %v3615
        %v3637 = vpop.f32.mrf.mxu0
        %v3638 = vadd.f32 0.0, %v3637
        %3639 = vmatmul.f32.gmra.mxu0 %v3618
        %v3640 = vpop.f32.mrf.mxu0
        %v3641 = vadd.f32 0.0, %v3640
        %3642 = vdwg.mxu0
        %3643 = vst.msk [vmem:[%s444] sm:$0xff] %vm452, %v3638
        %3644 = vst.msk [vmem:[%s444 + $0x8] sm:$0xff] %vm452, %v3641
        %s3645 = sand.u32 %s237, 1
        %s3646 = scalar_lea.sflag [#allocation4], %s3645
        %s3647 = sand.u32 %s237, 1
        %s3648 = smul.addr %s3647, 16
        %s3649 = scalar_lea.vmem [#allocation11], %s3648
        // Predicated region
        $region77: #{tpu_custom_call.1} parent=55 // pred_check
          %p3650 = pneg %p247
        $region78: #{tpu_custom_call.1} parent=55 // pred_check_branch
          %3652 = sbr.rel (%p3650) target = $region80
        $region79: #{tpu_custom_call.1} parent=55 // pred_region
          %s3653 = smul.u32 2, %s30
          %3655 = vsyncadd %s3646, 0
          %s3656 = smul.addr %s3653, 8
          %s3657 = scalar_lea.hbm %s9, %s3656
          %s3658 = sshll.u32 %s3649, 4
          %s3659 = int_to_ptr.vmem [resolvable:$true] %s3658
          %s3660 = sshll.u32 %s3657, 4
          %s3661 = int_to_ptr.hbm [resolvable:$true] %s3660
          %3666 = dma.vmem_to_hbm [thread:$0]  %s3659, 256, %s3661, %s3646, 128, 128, 8
        $region80: #{tpu_custom_call.1} parent=55 // pred_fallthru
          _
      $region56: #{tpu_custom_call.1} parent=5 // pred_fallthru
        _
      %p3667 = scmp.le.s32.totalorder 2, %s25
      // Predicated region
      $region81: #{tpu_custom_call.1} parent=5 // pred_check
        %p3668 = pneg %p3667
      $region82: #{tpu_custom_call.1} parent=5 // pred_check_branch
        %3670 = sbr.rel (%p3668) target = $region84
      $region83: #{tpu_custom_call.1} parent=5 // pred_region
        %s3671 = ssub.s32 %s25, 2
        // Predicated region
        $region85: #{tpu_custom_call.1} parent=83 // pred_check
          %p3672 = pneg %p253
        $region86: #{tpu_custom_call.1} parent=83 // pred_check_branch
          %3674 = sbr.rel (%p3672) target = $region88
        $region87: #{tpu_custom_call.1} parent=83 // pred_region
          %s3675 = sand.u32 %s238, 1
          %s3676 = scalar_lea.sflag [#allocation4], %s3675
          %s3677 = sand.u32 %s238, 1
          %s3678 = smul.addr %s3677, 16
          %s3679 = scalar_lea.vmem [#allocation11], %s3678
          %3681 = dma.done %s3676, 256
        $region88: #{tpu_custom_call.1} parent=83 // pred_fallthru
          _
      $region84: #{tpu_custom_call.1} parent=5 // pred_fallthru
        _
    $region6: #{tpu_custom_call.1} parent=1 // loop_footer
      %s29 = sadd.s32 1, %s25
    $region7: #{tpu_custom_call.1} parent=1 // loop_footer_branch
      %24 = sbr.rel target = $region3
    $region8: #{tpu_custom_call.1} parent=1 // loop_exit
      _
    %3682 = vsyncpa [#allocation3], 1
    %s3683 = scalar_lea.sflag [#allocation3], 1
    %3684 = vsyncpa %s3683, 1
    %3685 = vsyncpa [#allocation6], 1
    %s3686 = scalar_lea.sflag [#allocation6], 1
    %3687 = vsyncpa %s3686, 1
    %3688 = vsyncpa [#allocation9], 1
    %3689 = vsyncpa [#allocation4], 1
    %s3690 = scalar_lea.sflag [#allocation4], 1
    %3691 = vsyncpa %s3690, 1

</llo_original>
